<compile_context>
chip_gen: v5e
topology: v5e:2x2
jax: 0.10.0
libtpu: 0.0.40
codegen_flags: <defaults>
</compile_context>

<pallas_src>
import math
import functools

import jax
import jax.numpy as jnp
from jax.experimental import pallas as pl
from jax.experimental.pallas import tpu as pltpu


# ---------------------------------------------------------------------------
# In-kernel helpers (traced into the Pallas body)
# ---------------------------------------------------------------------------
def _layernorm(x, a, b, eps, n):
    # Matches the reference LayerNorm exactly:
    #   mean = x.mean(-1); std = x.std(-1)  (unbiased, / (N-1))
    #   out  = a * (x - mean) / (std + eps) + b
    mean = jnp.mean(x, axis=-1, keepdims=True)
    var = jnp.sum((x - mean) ** 2, axis=-1, keepdims=True) * (1.0 / float(n - 1))
    std = jnp.sqrt(var)
    inv = pl.reciprocal(std + eps, approx=True)   # EUP, frees VPU slots
    return a * (x - mean) * inv + b


def _gelu(x):
    # BERT tanh-approximation GELU, exactly as in the reference GELU module.
    return 0.5 * x * (1.0 + jnp.tanh(
        math.sqrt(2.0 / math.pi) * (x + 0.044715 * x ** 3)))


# ---------------------------------------------------------------------------
# Pallas kernel: one full transformer block per grid step (one batch element)
# ---------------------------------------------------------------------------
def transformer_block_kernel(x_ref, mask_ref,
                             wqkv_ref, bqkv_ref, wo_ref, bo_ref,
                             w1_ref, b1_ref, w2_ref, b2_ref,
                             ln1a_ref, ln1b_ref, ln2a_ref, ln2b_ref,
                             out_ref,
                             *, n_heads, d_k, eps, ew_bf16, fast_layout):
    x = x_ref[0]                       # (S, H) f32 residual stream
    S, H = x.shape
    scale = 1.0 / math.sqrt(d_k)

    # Additive attention bias from the key-padding mask, built ONCE:
    # mask_ref block is (1, 1, S); bias broadcasts over heads and query rows.
    key_mask = mask_ref[0]                                   # (1, S)
    bias = jnp.where(key_mask > 0, 0.0, -1.0e9)[None]        # (1, 1, S)

    # ---------------- self-attention sublayer (pre-norm residual) ----------
    h = _layernorm(x, ln1a_ref[...], ln1b_ref[...], eps, H)
    qkv = jnp.dot(h.astype(jnp.bfloat16), wqkv_ref[...],
                  preferred_element_type=jnp.float32) + bqkv_ref[...]   # (S, 3H) f32

    # Head split: one layout op (reshape + major-dim transpose) instead of
    # 3*n_heads lane slices + concats.  q/k/v become leading-axis slices.
    if fast_layout:
        qkv3 = jnp.transpose(qkv.reshape(S, 3 * n_heads, d_k), (1, 0, 2))
    else:
        qkv3 = jnp.concatenate(
            [qkv[:, i * d_k:(i + 1) * d_k][None] for i in range(3 * n_heads)],
            axis=0)                                           # (3h, S, d_k)
    q3 = (qkv3[:n_heads] * scale).astype(jnp.bfloat16)        # scale q once
    k3 = qkv3[n_heads:2 * n_heads].astype(jnp.bfloat16)
    v3 = qkv3[2 * n_heads:].astype(jnp.bfloat16)

    # Batched attention over all heads: one einsum for the scores, one masked
    # softmax (deferred normalization), one einsum for the context.
    sc = jnp.einsum('hqd,hkd->hqk', q3, k3,
                    preferred_element_type=jnp.float32)       # (h, S, S) f32
    sc = sc + bias                                            # masked_fill(-1e9)
    sc = sc - jnp.max(sc, axis=-1, keepdims=True)             # softmax(dim=-1)
    if ew_bf16:
        p = jnp.exp(sc.astype(jnp.bfloat16))   # bf16 EUP on v6e/v7x
    else:
        p = jnp.exp(sc)                        # f32 path (v5e-safe)
    l = jnp.sum(p.astype(jnp.float32), axis=-1, keepdims=True)  # (h, S, 1) f32

    ctx3 = jnp.einsum('hqk,hkd->hqd', p.astype(jnp.bfloat16), v3,
                      preferred_element_type=jnp.float32)     # (h, S, d_k) f32
    # Deferred softmax normalization on the small (h, S, d_k) tensor.
    ctx3 = (ctx3 * pl.reciprocal(l, approx=True)).astype(jnp.bfloat16)

    # Fold the head concat into one contiguous (S, H) value (no VMEM scratch,
    # no per-head masked partial-lane stores), then a single full-width
    # output projection.
    if fast_layout:
        ctx = jnp.transpose(ctx3, (1, 0, 2)).reshape(S, H)
    else:
        ctx = jnp.concatenate([ctx3[i] for i in range(n_heads)], axis=-1)
    attn = jnp.dot(ctx, wo_ref[...],
                   preferred_element_type=jnp.float32) + bo_ref[...]
    x = x + attn                       # dropout == identity (eval mode)

    # ---------------- feed-forward sublayer ---------------------------------
    h2 = _layernorm(x, ln2a_ref[...], ln2b_ref[...], eps, H)
    ff = jnp.dot(h2.astype(jnp.bfloat16), w1_ref[...],
                 preferred_element_type=jnp.float32) + b1_ref[...]
    if ew_bf16:
        ff = _gelu(ff.astype(jnp.bfloat16))    # bf16 VPU/EUP on v6e/v7x
    else:
        ff = _gelu(ff)                         # f32 (v5e-safe)
    ff = jnp.dot(ff.astype(jnp.bfloat16), w2_ref[...],
                 preferred_element_type=jnp.float32) + b2_ref[...]
    x = x + ff                         # dropout == identity (eval mode)

    out_ref[0] = x


# ---------------------------------------------------------------------------
# Wrapper
# ---------------------------------------------------------------------------
_VMEM_LIMIT_CACHE = []


def _pick_vmem_limit():
    # 96 MiB on the 128 MiB parts (v5e/v6e), 48 MiB on the 64 MiB v7x part.
    if _VMEM_LIMIT_CACHE:
        return _VMEM_LIMIT_CACHE[0]
    limit = 48 * 1024 * 1024
    try:
        cap = pltpu.get_tpu_info().vmem_capacity_bytes
        if cap >= (128 << 20):
            limit = 96 * 1024 * 1024
    except Exception:
        pass
    _VMEM_LIMIT_CACHE.append(limit)
    return limit


def _bf16_elementwise_ok():
    # bf16 VPU/EUP exists on v6e/v7x; v5e (and older) keep the f32 path.
    try:
        kind = jax.devices()[0].device_kind.lower()
    except Exception:
        return False
    return ("v6" in kind) or ("v7" in kind)


def _build_block_call(B, S, H, Dff, n_heads, d_k, eps, *,
                      ew_bf16, fast_layout, single_buffer_weights, vmem_limit):
    kernel = functools.partial(
        transformer_block_kernel, n_heads=n_heads, d_k=d_k, eps=eps,
        ew_bf16=ew_bf16, fast_layout=fast_layout)

    def wspec(shape):
        # Grid-invariant operands: a single VMEM buffer is enough (the block
        # index never changes), so don't pay for double-buffering.
        if single_buffer_weights:
            return pl.BlockSpec(shape, lambda b: (0,) * len(shape),
                                pipeline_mode=pl.Buffered(1))
        return pl.BlockSpec(shape, lambda b: (0,) * len(shape))

    in_specs = [
        pl.BlockSpec((1, S, H), lambda b: (b, 0, 0)),   # x
        pl.BlockSpec((1, 1, S), lambda b: (b, 0, 0)),   # key-padding mask
        wspec((H, 3 * H)), wspec((1, 3 * H)),           # wqkv, bqkv
        wspec((H, H)), wspec((1, H)),                   # wo, bo
        wspec((H, Dff)), wspec((1, Dff)),               # w1, b1
        wspec((Dff, H)), wspec((1, H)),                 # w2, b2
        wspec((1, H)), wspec((1, H)),                   # ln1 a, b
        wspec((1, H)), wspec((1, H)),                   # ln2 a, b
    ]

    return pl.pallas_call(
        kernel,
        out_shape=jax.ShapeDtypeStruct((B, S, H), jnp.float32),
        grid=(B,),
        in_specs=in_specs,
        out_specs=pl.BlockSpec((1, S, H), lambda b: (b, 0, 0)),
        compiler_params=pltpu.CompilerParams(
            dimension_semantics=("parallel",),
            vmem_limit_bytes=vmem_limit,
        ),
    )


_BLOCK_CALL_CACHE = {}


def run_transformer_block(x, mask, p, n_heads, eps=1e-6):
    B, S, H = x.shape
    d_k = H // n_heads
    Dff = p["w1"].shape[1]

    # Fuse QKV weights/biases on the host side; cast matmul weights to bf16.
    wqkv = jnp.concatenate([p["wq"], p["wk"], p["wv"]], axis=1).astype(jnp.bfloat16)
    bqkv = jnp.concatenate([p["bq"], p["bk"], p["bv"]], axis=1)          # f32
    wo = p["wo"].astype(jnp.bfloat16)
    w1 = p["w1"].astype(jnp.bfloat16)
    w2 = p["w2"].astype(jnp.bfloat16)

    args = (x, mask, wqkv, bqkv, wo, p["bo"], w1, p["b1"], w2, p["b2"],
            p["ln1_a"], p["ln1_b"], p["ln2_a"], p["ln2_b"])

    key = (B, S, H, Dff, n_heads, float(eps))
    call = _BLOCK_CALL_CACHE.get(key)
    if call is not None:
        return call(*args)

    vmem_limit = _pick_vmem_limit()
    try:
        call = _build_block_call(B, S, H, Dff, n_heads, d_k, eps,
                                 ew_bf16=_bf16_elementwise_ok(),
                                 fast_layout=True,
                                 single_buffer_weights=True,
                                 vmem_limit=vmem_limit)
        out = call(*args)
    except Exception:
        # TODO(synk): conservative fallback (double-buffered weight specs, f32
        # elementwise, concat-based head split) used only if the optimized
        # configuration fails to lower on this jax/TPU combination.
        call = _build_block_call(B, S, H, Dff, n_heads, d_k, eps,
                                 ew_bf16=False,
                                 fast_layout=False,
                                 single_buffer_weights=False,
                                 vmem_limit=vmem_limit)
        out = call(*args)
    _BLOCK_CALL_CACHE[key] = call
    return out


def bert_forward(params, tokens, segments, n_heads):
    B, S = tokens.shape

    # Reference mask: (x > 0).unsqueeze(1).repeat(1,S,1).unsqueeze(1) -> (B,1,S,S)
    # It only depends on the KEY index, so carry it as a compact (B, 1, S)
    # key-padding mask and broadcast over heads / query rows in-kernel.
    mask = (tokens > 0).astype(jnp.float32)[:, None, :]      # (B, 1, S)

    # Embedding gathers + 3-way sum in plain JAX (XLA fuses these; no extra
    # HBM round trip through a dedicated kernel). Dropout == identity.
    tok = jnp.take(params["tok_emb"], tokens, axis=0)        # (B, S, H)
    seg = jnp.take(params["seg_emb"], segments, axis=0)      # (B, S, H)
    pos = params["pe"][:S]                                   # (S, H)
    x = tok + seg + pos[None]

    for layer_params in params["layers"]:
        x = run_transformer_block(x, mask, layer_params, n_heads)
    return x


# ---------------------------------------------------------------------------
# Deterministic parameter initialization (synthetic, matches module shapes)
# ---------------------------------------------------------------------------
def make_positional_embedding(max_len, d_model):
    position = jnp.arange(max_len, dtype=jnp.float32)[:, None]
    div_term = jnp.exp(jnp.arange(0, d_model, 2, dtype=jnp.float32)
                       * -(math.log(10000.0) / d_model))
    pe = jnp.zeros((max_len, d_model), dtype=jnp.float32)
    pe = pe.at[:, 0::2].set(jnp.sin(position * div_term))
    pe = pe.at[:, 1::2].set(jnp.cos(position * div_term))
    return pe


def init_params(seed, vocab_size, hidden, n_layers, max_len=64):
    key = jax.random.PRNGKey(seed)

    def nrm(k, shape, scale=0.02):
        return scale * jax.random.normal(k, shape, dtype=jnp.float32)

    keys = jax.random.split(key, 2 + n_layers)
    tok_emb = nrm(keys[0], (vocab_size, hidden)).at[0].set(0.0)  # padding_idx=0
    seg_emb = nrm(keys[1], (3, hidden)).at[0].set(0.0)           # padding_idx=0
    pe = make_positional_embedding(max_len, hidden)

    d_ff = 4 * hidden
    layers = []
    for li in range(n_layers):
        lk = jax.random.split(keys[2 + li], 6)
        layers.append(dict(
            wq=nrm(lk[0], (hidden, hidden)), bq=jnp.zeros((1, hidden), jnp.float32),
            wk=nrm(lk[1], (hidden, hidden)), bk=jnp.zeros((1, hidden), jnp.float32),
            wv=nrm(lk[2], (hidden, hidden)), bv=jnp.zeros((1, hidden), jnp.float32),
            wo=nrm(lk[3], (hidden, hidden)), bo=jnp.zeros((1, hidden), jnp.float32),
            w1=nrm(lk[4], (hidden, d_ff)), b1=jnp.zeros((1, d_ff), jnp.float32),
            w2=nrm(lk[5], (d_ff, hidden)), b2=jnp.zeros((1, hidden), jnp.float32),
            ln1_a=jnp.ones((1, hidden), jnp.float32), ln1_b=jnp.zeros((1, hidden), jnp.float32),
            ln2_a=jnp.ones((1, hidden), jnp.float32), ln2_b=jnp.zeros((1, hidden), jnp.float32),
        ))
    return dict(tok_emb=tok_emb, seg_emb=seg_emb, pe=pe, layers=layers)


# ---------------------------------------------------------------------------
if __name__ == "__main__":
    VOCAB = 32
    HIDDEN = 32
    N_LAYERS = 2
    N_HEADS = 4
    B, S = 2, 8

    params = init_params(0, VOCAB, HIDDEN, N_LAYERS, max_len=64)

    key = jax.random.PRNGKey(0)
    k_tok, k_seg = jax.random.split(key)
    tokens = jax.random.randint(k_tok, (B, S), 1, VOCAB, dtype=jnp.int32)
    tokens = tokens.at[:, -2:].set(0)   # some padding so the attention mask matters
    segments = jax.random.randint(k_seg, (B, S), 1, 3, dtype=jnp.int32)
    segments = segments.at[:, -2:].set(0)

    out = bert_forward(params, tokens, segments, N_HEADS)
    out = jax.block_until_ready(out)
    assert out.shape == (B, S, HIDDEN) and out.dtype == jnp.float32
    assert bool(jnp.all(jnp.isfinite(out)))
    print("KERNEL_OK")
</pallas_src>

<mosaic_0001>
module attributes {stable_mosaic.version = 11 : i64} {
  func.func @transformer_block_kernel(%arg0: i32, %arg1: memref<1x8x32xf32, #tpu.memory_space<vmem>>, %arg2: memref<1x1x8xf32, #tpu.memory_space<vmem>>, %arg3: memref<32x96xbf16, #tpu.memory_space<vmem>>, %arg4: memref<1x96xf32, #tpu.memory_space<vmem>>, %arg5: memref<32x32xbf16, #tpu.memory_space<vmem>>, %arg6: memref<1x32xf32, #tpu.memory_space<vmem>>, %arg7: memref<32x128xbf16, #tpu.memory_space<vmem>>, %arg8: memref<1x128xf32, #tpu.memory_space<vmem>>, %arg9: memref<128x32xbf16, #tpu.memory_space<vmem>>, %arg10: memref<1x32xf32, #tpu.memory_space<vmem>>, %arg11: memref<1x32xf32, #tpu.memory_space<vmem>>, %arg12: memref<1x32xf32, #tpu.memory_space<vmem>>, %arg13: memref<1x32xf32, #tpu.memory_space<vmem>>, %arg14: memref<1x32xf32, #tpu.memory_space<vmem>>, %arg15: memref<1x8x32xf32, #tpu.memory_space<vmem>>) attributes {dimension_semantics = [#tpu.dimension_semantics<parallel>], iteration_bounds = array<i64: 2>, scalar_prefetch = 0 : i64, scratch_operands = 0 : i64, tpu.core_type = #tpu.core_type<tc>, window_params = [{transform_indices = @transform_0, window_bounds = array<i64: 1, 8, 32>}, {transform_indices = @transform_1, window_bounds = array<i64: 1, 1, 8>}, {pipeline_mode = #tpu.pipeline_mode<synchronous>, transform_indices = @transform_2, window_bounds = array<i64: 32, 96>}, {pipeline_mode = #tpu.pipeline_mode<synchronous>, transform_indices = @transform_3, window_bounds = array<i64: 1, 96>}, {pipeline_mode = #tpu.pipeline_mode<synchronous>, transform_indices = @transform_4, window_bounds = array<i64: 32, 32>}, {pipeline_mode = #tpu.pipeline_mode<synchronous>, transform_indices = @transform_5, window_bounds = array<i64: 1, 32>}, {pipeline_mode = #tpu.pipeline_mode<synchronous>, transform_indices = @transform_6, window_bounds = array<i64: 32, 128>}, {pipeline_mode = #tpu.pipeline_mode<synchronous>, transform_indices = @transform_7, window_bounds = array<i64: 1, 128>}, {pipeline_mode = #tpu.pipeline_mode<synchronous>, transform_indices = @transform_8, window_bounds = array<i64: 128, 32>}, {pipeline_mode = #tpu.pipeline_mode<synchronous>, transform_indices = @transform_9, window_bounds = array<i64: 1, 32>}, {pipeline_mode = #tpu.pipeline_mode<synchronous>, transform_indices = @transform_10, window_bounds = array<i64: 1, 32>}, {pipeline_mode = #tpu.pipeline_mode<synchronous>, transform_indices = @transform_11, window_bounds = array<i64: 1, 32>}, {pipeline_mode = #tpu.pipeline_mode<synchronous>, transform_indices = @transform_12, window_bounds = array<i64: 1, 32>}, {pipeline_mode = #tpu.pipeline_mode<synchronous>, transform_indices = @transform_13, window_bounds = array<i64: 1, 32>}, {transform_indices = @transform_14, window_bounds = array<i64: 1, 8, 32>}]} {
    %c0 = arith.constant 0 : index
    %c0_0 = arith.constant 0 : index
    %c0_1 = arith.constant 0 : index
    %0 = vector.load %arg1[%c0, %c0_0, %c0_1] : memref<1x8x32xf32, #tpu.memory_space<vmem>>, vector<1x8x32xf32>
    %1 = vector.shape_cast %0 : vector<1x8x32xf32> to vector<8x32xf32>
    %c0_2 = arith.constant 0 : index
    %c0_3 = arith.constant 0 : index
    %c0_4 = arith.constant 0 : index
    %2 = vector.load %arg2[%c0_2, %c0_3, %c0_4] : memref<1x1x8xf32, #tpu.memory_space<vmem>>, vector<1x1x8xf32>
    %3 = vector.shape_cast %2 : vector<1x1x8xf32> to vector<1x8xf32>
    %cst = arith.constant 0.000000e+00 : f32
    %4 = vector.broadcast %cst : f32 to vector<1x8xf32>
    %5 = arith.cmpf ogt, %3, %4 : vector<1x8xf32>
    %cst_5 = arith.constant 0.000000e+00 : f32
    %cst_6 = arith.constant -1.000000e+09 : f32
    %6 = vector.broadcast %cst_5 : f32 to vector<1x8xf32>
    %7 = vector.broadcast %cst_6 : f32 to vector<1x8xf32>
    %8 = arith.select %5, %6, %7 : vector<1x8xi1>, vector<1x8xf32>
    %9 = vector.shape_cast %8 : vector<1x8xf32> to vector<1x1x8xf32>
    %c0_7 = arith.constant 0 : index
    %c0_8 = arith.constant 0 : index
    %10 = vector.load %arg11[%c0_7, %c0_8] : memref<1x32xf32, #tpu.memory_space<vmem>>, vector<1x32xf32>
    %c0_9 = arith.constant 0 : index
    %c0_10 = arith.constant 0 : index
    %11 = vector.load %arg12[%c0_9, %c0_10] : memref<1x32xf32, #tpu.memory_space<vmem>>, vector<1x32xf32>
    %cst_11 = arith.constant dense<0.000000e+00> : vector<8xf32>
    %12 = vector.multi_reduction <add>, %1, %cst_11 [1] : vector<8x32xf32> to vector<8xf32>
    %13 = vector.shape_cast %12 : vector<8xf32> to vector<8x1xf32>
    %cst_12 = arith.constant 3.200000e+01 : f32
    %14 = vector.broadcast %cst_12 : f32 to vector<8x1xf32>
    %15 = arith.divf %13, %14 : vector<8x1xf32>
    %16 = vector.broadcast %15 : vector<8x1xf32> to vector<8x32xf32>
    %17 = arith.subf %1, %16 : vector<8x32xf32>
    %18 = arith.mulf %17, %17 : vector<8x32xf32>
    %cst_13 = arith.constant dense<0.000000e+00> : vector<8xf32>
    %19 = vector.multi_reduction <add>, %18, %cst_13 [1] : vector<8x32xf32> to vector<8xf32>
    %20 = vector.shape_cast %19 : vector<8xf32> to vector<8x1xf32>
    %cst_14 = arith.constant 0.0322580636 : f32
    %21 = vector.broadcast %cst_14 : f32 to vector<8x1xf32>
    %22 = arith.mulf %20, %21 : vector<8x1xf32>
    %23 = math.sqrt %22 : vector<8x1xf32>
    %cst_15 = arith.constant 9.99999997E-7 : f32
    %24 = vector.broadcast %cst_15 : f32 to vector<8x1xf32>
    %25 = arith.addf %23, %24 : vector<8x1xf32>
    %26 = tpu.reciprocal %25 {approx = true} : vector<8x1xf32> -> vector<8x1xf32>
    %27 = vector.broadcast %15 : vector<8x1xf32> to vector<8x32xf32>
    %28 = arith.subf %1, %27 : vector<8x32xf32>
    %29 = vector.broadcast %10 : vector<1x32xf32> to vector<8x32xf32>
    %30 = arith.mulf %29, %28 : vector<8x32xf32>
    %31 = vector.broadcast %26 : vector<8x1xf32> to vector<8x32xf32>
    %32 = arith.mulf %30, %31 : vector<8x32xf32>
    %33 = vector.broadcast %11 : vector<1x32xf32> to vector<8x32xf32>
    %34 = arith.addf %32, %33 : vector<8x32xf32>
    %35 = arith.truncf %34 : vector<8x32xf32> to vector<8x32xbf16>
    %c0_16 = arith.constant 0 : index
    %c0_17 = arith.constant 0 : index
    %36 = vector.load %arg3[%c0_16, %c0_17] : memref<32x96xbf16, #tpu.memory_space<vmem>>, vector<32x96xbf16>
    %cst_18 = arith.constant dense<0.000000e+00> : vector<8x96xf32>
    %37 = tpu.matmul %35, %36, %cst_18 {dimension_numbers = #tpu.dot_dimension_numbers<[1], [0], [0], [1], [0, 0, 1, 1], [], []>} : vector<8x32xbf16>, vector<32x96xbf16>, vector<8x96xf32> -> vector<8x96xf32>
    %c0_19 = arith.constant 0 : index
    %c0_20 = arith.constant 0 : index
    %38 = vector.load %arg4[%c0_19, %c0_20] : memref<1x96xf32, #tpu.memory_space<vmem>>, vector<1x96xf32>
    %39 = vector.broadcast %38 : vector<1x96xf32> to vector<8x96xf32>
    %40 = arith.addf %37, %39 : vector<8x96xf32>
    %41 = vector.shape_cast %40 : vector<8x96xf32> to vector<8x12x8xf32>
    %42 = tpu.transpose %41, [1, 0, 2] : vector<8x12x8xf32> -> vector<12x8x8xf32>
    %43 = vector.extract_strided_slice %42 {offsets = [0, 0, 0], sizes = [4, 8, 8], strides = [1, 1, 1]} : vector<12x8x8xf32> to vector<4x8x8xf32>
    %cst_21 = arith.constant 0.353553385 : f32
    %44 = vector.broadcast %cst_21 : f32 to vector<4x8x8xf32>
    %45 = arith.mulf %43, %44 : vector<4x8x8xf32>
    %46 = arith.truncf %45 : vector<4x8x8xf32> to vector<4x8x8xbf16>
    %47 = vector.extract_strided_slice %42 {offsets = [4, 0, 0], sizes = [4, 8, 8], strides = [1, 1, 1]} : vector<12x8x8xf32> to vector<4x8x8xf32>
    %48 = arith.truncf %47 : vector<4x8x8xf32> to vector<4x8x8xbf16>
    %49 = vector.extract_strided_slice %42 {offsets = [8, 0, 0], sizes = [4, 8, 8], strides = [1, 1, 1]} : vector<12x8x8xf32> to vector<4x8x8xf32>
    %50 = arith.truncf %49 : vector<4x8x8xf32> to vector<4x8x8xbf16>
    "tpu.trace_start"() <{level = 10 : i32, message = "hqd,hkd->hqk"}> : () -> ()
    %cst_22 = arith.constant dense<0.000000e+00> : vector<4x8x8xf32>
    %51 = tpu.matmul %46, %48, %cst_22 {dimension_numbers = #tpu.dot_dimension_numbers<[2], [2], [1], [1], [0, 0, 0, 1, 1, 1], [0], [0]>} : vector<4x8x8xbf16>, vector<4x8x8xbf16>, vector<4x8x8xf32> -> vector<4x8x8xf32>
    "tpu.trace_stop"() : () -> ()
    %52 = vector.broadcast %9 : vector<1x1x8xf32> to vector<4x8x8xf32>
    %53 = arith.addf %51, %52 : vector<4x8x8xf32>
    %cst_23 = arith.constant dense<0xFF800000> : vector<4x8xf32>
    %54 = vector.multi_reduction <maximumf>, %53, %cst_23 [2] : vector<4x8x8xf32> to vector<4x8xf32>
    %55 = vector.shape_cast %54 : vector<4x8xf32> to vector<4x8x1xf32>
    %56 = vector.broadcast %55 : vector<4x8x1xf32> to vector<4x8x8xf32>
    %57 = arith.subf %53, %56 : vector<4x8x8xf32>
    %58 = math.exp %57 : vector<4x8x8xf32>
    %cst_24 = arith.constant dense<0.000000e+00> : vector<4x8xf32>
    %59 = vector.multi_reduction <add>, %58, %cst_24 [2] : vector<4x8x8xf32> to vector<4x8xf32>
    %60 = vector.shape_cast %59 : vector<4x8xf32> to vector<4x8x1xf32>
    %61 = arith.truncf %58 : vector<4x8x8xf32> to vector<4x8x8xbf16>
    "tpu.trace_start"() <{level = 10 : i32, message = "hqk,hkd->hqd"}> : () -> ()
    %cst_25 = arith.constant dense<0.000000e+00> : vector<4x8x8xf32>
    %62 = tpu.matmul %61, %50, %cst_25 {dimension_numbers = #tpu.dot_dimension_numbers<[2], [1], [1], [2], [0, 0, 0, 1, 1, 2], [0], [0]>} : vector<4x8x8xbf16>, vector<4x8x8xbf16>, vector<4x8x8xf32> -> vector<4x8x8xf32>
    "tpu.trace_stop"() : () -> ()
    %63 = tpu.reciprocal %60 {approx = true} : vector<4x8x1xf32> -> vector<4x8x1xf32>
    %64 = vector.broadcast %63 : vector<4x8x1xf32> to vector<4x8x8xf32>
    %65 = arith.mulf %62, %64 : vector<4x8x8xf32>
    %66 = arith.truncf %65 : vector<4x8x8xf32> to vector<4x8x8xbf16>
    %67 = tpu.transpose %66, [1, 0, 2] : vector<4x8x8xbf16> -> vector<8x4x8xbf16>
    %68 = vector.shape_cast %67 : vector<8x4x8xbf16> to vector<8x32xbf16>
    %c0_26 = arith.constant 0 : index
    %c0_27 = arith.constant 0 : index
    %69 = vector.load %arg5[%c0_26, %c0_27] : memref<32x32xbf16, #tpu.memory_space<vmem>>, vector<32x32xbf16>
    %cst_28 = arith.constant dense<0.000000e+00> : vector<8x32xf32>
    %70 = tpu.matmul %68, %69, %cst_28 {dimension_numbers = #tpu.dot_dimension_numbers<[1], [0], [0], [1], [0, 0, 1, 1], [], []>} : vector<8x32xbf16>, vector<32x32xbf16>, vector<8x32xf32> -> vector<8x32xf32>
    %c0_29 = arith.constant 0 : index
    %c0_30 = arith.constant 0 : index
    %71 = vector.load %arg6[%c0_29, %c0_30] : memref<1x32xf32, #tpu.memory_space<vmem>>, vector<1x32xf32>
    %72 = vector.broadcast %71 : vector<1x32xf32> to vector<8x32xf32>
    %73 = arith.addf %70, %72 : vector<8x32xf32>
    %74 = arith.addf %1, %73 : vector<8x32xf32>
    %c0_31 = arith.constant 0 : index
    %c0_32 = arith.constant 0 : index
    %75 = vector.load %arg13[%c0_31, %c0_32] : memref<1x32xf32, #tpu.memory_space<vmem>>, vector<1x32xf32>
    %c0_33 = arith.constant 0 : index
    %c0_34 = arith.constant 0 : index
    %76 = vector.load %arg14[%c0_33, %c0_34] : memref<1x32xf32, #tpu.memory_space<vmem>>, vector<1x32xf32>
    %cst_35 = arith.constant dense<0.000000e+00> : vector<8xf32>
    %77 = vector.multi_reduction <add>, %74, %cst_35 [1] : vector<8x32xf32> to vector<8xf32>
    %78 = vector.shape_cast %77 : vector<8xf32> to vector<8x1xf32>
    %cst_36 = arith.constant 3.200000e+01 : f32
    %79 = vector.broadcast %cst_36 : f32 to vector<8x1xf32>
    %80 = arith.divf %78, %79 : vector<8x1xf32>
    %81 = vector.broadcast %80 : vector<8x1xf32> to vector<8x32xf32>
    %82 = arith.subf %74, %81 : vector<8x32xf32>
    %83 = arith.mulf %82, %82 : vector<8x32xf32>
    %cst_37 = arith.constant dense<0.000000e+00> : vector<8xf32>
    %84 = vector.multi_reduction <add>, %83, %cst_37 [1] : vector<8x32xf32> to vector<8xf32>
    %85 = vector.shape_cast %84 : vector<8xf32> to vector<8x1xf32>
    %cst_38 = arith.constant 0.0322580636 : f32
    %86 = vector.broadcast %cst_38 : f32 to vector<8x1xf32>
    %87 = arith.mulf %85, %86 : vector<8x1xf32>
    %88 = math.sqrt %87 : vector<8x1xf32>
    %cst_39 = arith.constant 9.99999997E-7 : f32
    %89 = vector.broadcast %cst_39 : f32 to vector<8x1xf32>
    %90 = arith.addf %88, %89 : vector<8x1xf32>
    %91 = tpu.reciprocal %90 {approx = true} : vector<8x1xf32> -> vector<8x1xf32>
    %92 = vector.broadcast %80 : vector<8x1xf32> to vector<8x32xf32>
    %93 = arith.subf %74, %92 : vector<8x32xf32>
    %94 = vector.broadcast %75 : vector<1x32xf32> to vector<8x32xf32>
    %95 = arith.mulf %94, %93 : vector<8x32xf32>
    %96 = vector.broadcast %91 : vector<8x1xf32> to vector<8x32xf32>
    %97 = arith.mulf %95, %96 : vector<8x32xf32>
    %98 = vector.broadcast %76 : vector<1x32xf32> to vector<8x32xf32>
    %99 = arith.addf %97, %98 : vector<8x32xf32>
    %100 = arith.truncf %99 : vector<8x32xf32> to vector<8x32xbf16>
    %c0_40 = arith.constant 0 : index
    %c0_41 = arith.constant 0 : index
    %101 = vector.load %arg7[%c0_40, %c0_41] : memref<32x128xbf16, #tpu.memory_space<vmem>>, vector<32x128xbf16>
    %cst_42 = arith.constant dense<0.000000e+00> : vector<8x128xf32>
    %102 = tpu.matmul %100, %101, %cst_42 {dimension_numbers = #tpu.dot_dimension_numbers<[1], [0], [0], [1], [0, 0, 1, 1], [], []>} : vector<8x32xbf16>, vector<32x128xbf16>, vector<8x128xf32> -> vector<8x128xf32>
    %c0_43 = arith.constant 0 : index
    %c0_44 = arith.constant 0 : index
    %103 = vector.load %arg8[%c0_43, %c0_44] : memref<1x128xf32, #tpu.memory_space<vmem>>, vector<1x128xf32>
    %104 = vector.broadcast %103 : vector<1x128xf32> to vector<8x128xf32>
    %105 = arith.addf %102, %104 : vector<8x128xf32>
    %cst_45 = arith.constant 5.000000e-01 : f32
    %106 = vector.broadcast %cst_45 : f32 to vector<8x128xf32>
    %107 = arith.mulf %106, %105 : vector<8x128xf32>
    %108 = arith.mulf %105, %105 : vector<8x128xf32>
    %109 = arith.mulf %105, %108 : vector<8x128xf32>
    %cst_46 = arith.constant 4.471500e-02 : f32
    %110 = vector.broadcast %cst_46 : f32 to vector<8x128xf32>
    %111 = arith.mulf %110, %109 : vector<8x128xf32>
    %112 = arith.addf %105, %111 : vector<8x128xf32>
    %cst_47 = arith.constant 0.797884583 : f32
    %113 = vector.broadcast %cst_47 : f32 to vector<8x128xf32>
    %114 = arith.mulf %113, %112 : vector<8x128xf32>
    %115 = math.tanh %114 : vector<8x128xf32>
    %cst_48 = arith.constant 1.000000e+00 : f32
    %116 = vector.broadcast %cst_48 : f32 to vector<8x128xf32>
    %117 = arith.addf %116, %115 : vector<8x128xf32>
    %118 = arith.mulf %107, %117 : vector<8x128xf32>
    %119 = arith.truncf %118 : vector<8x128xf32> to vector<8x128xbf16>
    %c0_49 = arith.constant 0 : index
    %c0_50 = arith.constant 0 : index
    %120 = vector.load %arg9[%c0_49, %c0_50] : memref<128x32xbf16, #tpu.memory_space<vmem>>, vector<128x32xbf16>
    %cst_51 = arith.constant dense<0.000000e+00> : vector<8x32xf32>
    %121 = tpu.matmul %119, %120, %cst_51 {dimension_numbers = #tpu.dot_dimension_numbers<[1], [0], [0], [1], [0, 0, 1, 1], [], []>} : vector<8x128xbf16>, vector<128x32xbf16>, vector<8x32xf32> -> vector<8x32xf32>
    %c0_52 = arith.constant 0 : index
    %c0_53 = arith.constant 0 : index
    %122 = vector.load %arg10[%c0_52, %c0_53] : memref<1x32xf32, #tpu.memory_space<vmem>>, vector<1x32xf32>
    %123 = vector.broadcast %122 : vector<1x32xf32> to vector<8x32xf32>
    %124 = arith.addf %121, %123 : vector<8x32xf32>
    %125 = arith.addf %74, %124 : vector<8x32xf32>
    %c0_54 = arith.constant 0 : index
    %c0_55 = arith.constant 0 : index
    %c0_56 = arith.constant 0 : index
    %126 = vector.load %arg15[%c0_54, %c0_55, %c0_56] : memref<1x8x32xf32, #tpu.memory_space<vmem>>, vector<1x8x32xf32>
    %127 = vector.shape_cast %126 : vector<1x8x32xf32> to vector<8x32xf32>
    %128 = vector.shape_cast %125 : vector<8x32xf32> to vector<1x8x32xf32>
    tpu.vector_store %arg15[%c0_54, %c0_55, %c0_56], %128 {strides = array<i32>} : memref<1x8x32xf32, #tpu.memory_space<vmem>>, vector<1x8x32xf32>,
    return
  }
  func.func @transform_0(%arg0: i32) -> (i32, i32, i32) {
    %c0_i32 = arith.constant 0 : i32
    %c0_i32_0 = arith.constant 0 : i32
    %c0_i32_1 = arith.constant 0 : i32
    return %arg0, %c0_i32, %c0_i32_0 : i32, i32, i32
  }
  func.func @transform_1(%arg0: i32) -> (i32, i32, i32) {
    %c0_i32 = arith.constant 0 : i32
    %c0_i32_0 = arith.constant 0 : i32
    %c0_i32_1 = arith.constant 0 : i32
    return %arg0, %c0_i32, %c0_i32_0 : i32, i32, i32
  }
  func.func @transform_2(%arg0: i32) -> (i32, i32) {
    %c0_i32 = arith.constant 0 : i32
    %c0_i32_0 = arith.constant 0 : i32
    %c0_i32_1 = arith.constant 0 : i32
    return %c0_i32, %c0_i32_0 : i32, i32
  }
  func.func @transform_3(%arg0: i32) -> (i32, i32) {
    %c0_i32 = arith.constant 0 : i32
    %c0_i32_0 = arith.constant 0 : i32
    %c0_i32_1 = arith.constant 0 : i32
    return %c0_i32, %c0_i32_0 : i32, i32
  }
  func.func @transform_4(%arg0: i32) -> (i32, i32) {
    %c0_i32 = arith.constant 0 : i32
    %c0_i32_0 = arith.constant 0 : i32
    %c0_i32_1 = arith.constant 0 : i32
    return %c0_i32, %c0_i32_0 : i32, i32
  }
  func.func @transform_5(%arg0: i32) -> (i32, i32) {
    %c0_i32 = arith.constant 0 : i32
    %c0_i32_0 = arith.constant 0 : i32
    %c0_i32_1 = arith.constant 0 : i32
    return %c0_i32, %c0_i32_0 : i32, i32
  }
  func.func @transform_6(%arg0: i32) -> (i32, i32) {
    %c0_i32 = arith.constant 0 : i32
    %c0_i32_0 = arith.constant 0 : i32
    %c0_i32_1 = arith.constant 0 : i32
    return %c0_i32, %c0_i32_0 : i32, i32
  }
  func.func @transform_7(%arg0: i32) -> (i32, i32) {
    %c0_i32 = arith.constant 0 : i32
    %c0_i32_0 = arith.constant 0 : i32
    %c0_i32_1 = arith.constant 0 : i32
    return %c0_i32, %c0_i32_0 : i32, i32
  }
  func.func @transform_8(%arg0: i32) -> (i32, i32) {
    %c0_i32 = arith.constant 0 : i32
    %c0_i32_0 = arith.constant 0 : i32
    %c0_i32_1 = arith.constant 0 : i32
    return %c0_i32, %c0_i32_0 : i32, i32
  }
  func.func @transform_9(%arg0: i32) -> (i32, i32) {
    %c0_i32 = arith.constant 0 : i32
    %c0_i32_0 = arith.constant 0 : i32
    %c0_i32_1 = arith.constant 0 : i32
    return %c0_i32, %c0_i32_0 : i32, i32
  }
  func.func @transform_10(%arg0: i32) -> (i32, i32) {
    %c0_i32 = arith.constant 0 : i32
    %c0_i32_0 = arith.constant 0 : i32
    %c0_i32_1 = arith.constant 0 : i32
    return %c0_i32, %c0_i32_0 : i32, i32
  }
  func.func @transform_11(%arg0: i32) -> (i32, i32) {
    %c0_i32 = arith.constant 0 : i32
    %c0_i32_0 = arith.constant 0 : i32
    %c0_i32_1 = arith.constant 0 : i32
    return %c0_i32, %c0_i32_0 : i32, i32
  }
  func.func @transform_12(%arg0: i32) -> (i32, i32) {
    %c0_i32 = arith.constant 0 : i32
    %c0_i32_0 = arith.constant 0 : i32
    %c0_i32_1 = arith.constant 0 : i32
    return %c0_i32, %c0_i32_0 : i32, i32
  }
  func.func @transform_13(%arg0: i32) -> (i32, i32) {
    %c0_i32 = arith.constant 0 : i32
    %c0_i32_0 = arith.constant 0 : i32
    %c0_i32_1 = arith.constant 0 : i32
    return %c0_i32, %c0_i32_0 : i32, i32
  }
  func.func @transform_14(%arg0: i32) -> (i32, i32, i32) {
    %c0_i32 = arith.constant 0 : i32
    %c0_i32_0 = arith.constant 0 : i32
    %c0_i32_1 = arith.constant 0 : i32
    return %arg0, %c0_i32, %c0_i32_0 : i32, i32, i32
  }
}

module attributes {stable_mosaic.version = 11 : i64} {
  func.func @transformer_block_kernel(%arg0: i32, %arg1: memref<1x8x32xf32, #tpu.memory_space<vmem>>, %arg2: memref<1x1x8xf32, #tpu.memory_space<vmem>>, %arg3: memref<32x96xbf16, #tpu.memory_space<vmem>>, %arg4: memref<1x96xf32, #tpu.memory_space<vmem>>, %arg5: memref<32x32xbf16, #tpu.memory_space<vmem>>, %arg6: memref<1x32xf32, #tpu.memory_space<vmem>>, %arg7: memref<32x128xbf16, #tpu.memory_space<vmem>>, %arg8: memref<1x128xf32, #tpu.memory_space<vmem>>, %arg9: memref<128x32xbf16, #tpu.memory_space<vmem>>, %arg10: memref<1x32xf32, #tpu.memory_space<vmem>>, %arg11: memref<1x32xf32, #tpu.memory_space<vmem>>, %arg12: memref<1x32xf32, #tpu.memory_space<vmem>>, %arg13: memref<1x32xf32, #tpu.memory_space<vmem>>, %arg14: memref<1x32xf32, #tpu.memory_space<vmem>>, %arg15: memref<1x8x32xf32, #tpu.memory_space<vmem>>) attributes {dimension_semantics = [#tpu.dimension_semantics<parallel>], iteration_bounds = array<i64: 2>, scalar_prefetch = 0 : i64, scratch_operands = 0 : i64, tpu.core_type = #tpu.core_type<tc>, window_params = [{transform_indices = @transform_0, window_bounds = array<i64: 1, 8, 32>}, {transform_indices = @transform_1, window_bounds = array<i64: 1, 1, 8>}, {pipeline_mode = #tpu.pipeline_mode<synchronous>, transform_indices = @transform_2, window_bounds = array<i64: 32, 96>}, {pipeline_mode = #tpu.pipeline_mode<synchronous>, transform_indices = @transform_3, window_bounds = array<i64: 1, 96>}, {pipeline_mode = #tpu.pipeline_mode<synchronous>, transform_indices = @transform_4, window_bounds = array<i64: 32, 32>}, {pipeline_mode = #tpu.pipeline_mode<synchronous>, transform_indices = @transform_5, window_bounds = array<i64: 1, 32>}, {pipeline_mode = #tpu.pipeline_mode<synchronous>, transform_indices = @transform_6, window_bounds = array<i64: 32, 128>}, {pipeline_mode = #tpu.pipeline_mode<synchronous>, transform_indices = @transform_7, window_bounds = array<i64: 1, 128>}, {pipeline_mode = #tpu.pipeline_mode<synchronous>, transform_indices = @transform_8, window_bounds = array<i64: 128, 32>}, {pipeline_mode = #tpu.pipeline_mode<synchronous>, transform_indices = @transform_9, window_bounds = array<i64: 1, 32>}, {pipeline_mode = #tpu.pipeline_mode<synchronous>, transform_indices = @transform_10, window_bounds = array<i64: 1, 32>}, {pipeline_mode = #tpu.pipeline_mode<synchronous>, transform_indices = @transform_11, window_bounds = array<i64: 1, 32>}, {pipeline_mode = #tpu.pipeline_mode<synchronous>, transform_indices = @transform_12, window_bounds = array<i64: 1, 32>}, {pipeline_mode = #tpu.pipeline_mode<synchronous>, transform_indices = @transform_13, window_bounds = array<i64: 1, 32>}, {transform_indices = @transform_14, window_bounds = array<i64: 1, 8, 32>}]} {
    %c0 = arith.constant 0 : index
    %c0_0 = arith.constant 0 : index
    %c0_1 = arith.constant 0 : index
    %0 = vector.load %arg1[%c0, %c0_0, %c0_1] : memref<1x8x32xf32, #tpu.memory_space<vmem>>, vector<1x8x32xf32>
    %1 = vector.shape_cast %0 : vector<1x8x32xf32> to vector<8x32xf32>
    %c0_2 = arith.constant 0 : index
    %c0_3 = arith.constant 0 : index
    %c0_4 = arith.constant 0 : index
    %2 = vector.load %arg2[%c0_2, %c0_3, %c0_4] : memref<1x1x8xf32, #tpu.memory_space<vmem>>, vector<1x1x8xf32>
    %3 = vector.shape_cast %2 : vector<1x1x8xf32> to vector<1x8xf32>
    %cst = arith.constant 0.000000e+00 : f32
    %4 = vector.broadcast %cst : f32 to vector<1x8xf32>
    %5 = arith.cmpf ogt, %3, %4 : vector<1x8xf32>
    %cst_5 = arith.constant 0.000000e+00 : f32
    %cst_6 = arith.constant -1.000000e+09 : f32
    %6 = vector.broadcast %cst_5 : f32 to vector<1x8xf32>
    %7 = vector.broadcast %cst_6 : f32 to vector<1x8xf32>
    %8 = arith.select %5, %6, %7 : vector<1x8xi1>, vector<1x8xf32>
    %9 = vector.shape_cast %8 : vector<1x8xf32> to vector<1x1x8xf32>
    %c0_7 = arith.constant 0 : index
    %c0_8 = arith.constant 0 : index
    %10 = vector.load %arg11[%c0_7, %c0_8] : memref<1x32xf32, #tpu.memory_space<vmem>>, vector<1x32xf32>
    %c0_9 = arith.constant 0 : index
    %c0_10 = arith.constant 0 : index
    %11 = vector.load %arg12[%c0_9, %c0_10] : memref<1x32xf32, #tpu.memory_space<vmem>>, vector<1x32xf32>
    %cst_11 = arith.constant dense<0.000000e+00> : vector<8xf32>
    %12 = vector.multi_reduction <add>, %1, %cst_11 [1] : vector<8x32xf32> to vector<8xf32>
    %13 = vector.shape_cast %12 : vector<8xf32> to vector<8x1xf32>
    %cst_12 = arith.constant 3.200000e+01 : f32
    %14 = vector.broadcast %cst_12 : f32 to vector<8x1xf32>
    %15 = arith.divf %13, %14 : vector<8x1xf32>
    %16 = vector.broadcast %15 : vector<8x1xf32> to vector<8x32xf32>
    %17 = arith.subf %1, %16 : vector<8x32xf32>
    %18 = arith.mulf %17, %17 : vector<8x32xf32>
    %cst_13 = arith.constant dense<0.000000e+00> : vector<8xf32>
    %19 = vector.multi_reduction <add>, %18, %cst_13 [1] : vector<8x32xf32> to vector<8xf32>
    %20 = vector.shape_cast %19 : vector<8xf32> to vector<8x1xf32>
    %cst_14 = arith.constant 0.0322580636 : f32
    %21 = vector.broadcast %cst_14 : f32 to vector<8x1xf32>
    %22 = arith.mulf %20, %21 : vector<8x1xf32>
    %23 = math.sqrt %22 : vector<8x1xf32>
    %cst_15 = arith.constant 9.99999997E-7 : f32
    %24 = vector.broadcast %cst_15 : f32 to vector<8x1xf32>
    %25 = arith.addf %23, %24 : vector<8x1xf32>
    %26 = tpu.reciprocal %25 {approx = true} : vector<8x1xf32> -> vector<8x1xf32>
    %27 = vector.broadcast %15 : vector<8x1xf32> to vector<8x32xf32>
    %28 = arith.subf %1, %27 : vector<8x32xf32>
    %29 = vector.broadcast %10 : vector<1x32xf32> to vector<8x32xf32>
    %30 = arith.mulf %29, %28 : vector<8x32xf32>
    %31 = vector.broadcast %26 : vector<8x1xf32> to vector<8x32xf32>
    %32 = arith.mulf %30, %31 : vector<8x32xf32>
    %33 = vector.broadcast %11 : vector<1x32xf32> to vector<8x32xf32>
    %34 = arith.addf %32, %33 : vector<8x32xf32>
    %35 = arith.truncf %34 : vector<8x32xf32> to vector<8x32xbf16>
    %c0_16 = arith.constant 0 : index
    %c0_17 = arith.constant 0 : index
    %36 = vector.load %arg3[%c0_16, %c0_17] : memref<32x96xbf16, #tpu.memory_space<vmem>>, vector<32x96xbf16>
    %cst_18 = arith.constant dense<0.000000e+00> : vector<8x96xf32>
    %37 = tpu.matmul %35, %36, %cst_18 {dimension_numbers = #tpu.dot_dimension_numbers<[1], [0], [0], [1], [0, 0, 1, 1], [], []>} : vector<8x32xbf16>, vector<32x96xbf16>, vector<8x96xf32> -> vector<8x96xf32>
    %c0_19 = arith.constant 0 : index
    %c0_20 = arith.constant 0 : index
    %38 = vector.load %arg4[%c0_19, %c0_20] : memref<1x96xf32, #tpu.memory_space<vmem>>, vector<1x96xf32>
    %39 = vector.broadcast %38 : vector<1x96xf32> to vector<8x96xf32>
    %40 = arith.addf %37, %39 : vector<8x96xf32>
    %41 = vector.extract_strided_slice %40 {offsets = [0, 0], sizes = [8, 8], strides = [1, 1]} : vector<8x96xf32> to vector<8x8xf32>
    %42 = vector.shape_cast %41 : vector<8x8xf32> to vector<1x8x8xf32>
    %43 = vector.extract_strided_slice %40 {offsets = [0, 8], sizes = [8, 8], strides = [1, 1]} : vector<8x96xf32> to vector<8x8xf32>
    %44 = vector.shape_cast %43 : vector<8x8xf32> to vector<1x8x8xf32>
    %45 = vector.extract_strided_slice %40 {offsets = [0, 16], sizes = [8, 8], strides = [1, 1]} : vector<8x96xf32> to vector<8x8xf32>
    %46 = vector.shape_cast %45 : vector<8x8xf32> to vector<1x8x8xf32>
    %47 = vector.extract_strided_slice %40 {offsets = [0, 24], sizes = [8, 8], strides = [1, 1]} : vector<8x96xf32> to vector<8x8xf32>
    %48 = vector.shape_cast %47 : vector<8x8xf32> to vector<1x8x8xf32>
    %49 = vector.extract_strided_slice %40 {offsets = [0, 32], sizes = [8, 8], strides = [1, 1]} : vector<8x96xf32> to vector<8x8xf32>
    %50 = vector.shape_cast %49 : vector<8x8xf32> to vector<1x8x8xf32>
    %51 = vector.extract_strided_slice %40 {offsets = [0, 40], sizes = [8, 8], strides = [1, 1]} : vector<8x96xf32> to vector<8x8xf32>
    %52 = vector.shape_cast %51 : vector<8x8xf32> to vector<1x8x8xf32>
    %53 = vector.extract_strided_slice %40 {offsets = [0, 48], sizes = [8, 8], strides = [1, 1]} : vector<8x96xf32> to vector<8x8xf32>
    %54 = vector.shape_cast %53 : vector<8x8xf32> to vector<1x8x8xf32>
    %55 = vector.extract_strided_slice %40 {offsets = [0, 56], sizes = [8, 8], strides = [1, 1]} : vector<8x96xf32> to vector<8x8xf32>
    %56 = vector.shape_cast %55 : vector<8x8xf32> to vector<1x8x8xf32>
    %57 = vector.extract_strided_slice %40 {offsets = [0, 64], sizes = [8, 8], strides = [1, 1]} : vector<8x96xf32> to vector<8x8xf32>
    %58 = vector.shape_cast %57 : vector<8x8xf32> to vector<1x8x8xf32>
    %59 = vector.extract_strided_slice %40 {offsets = [0, 72], sizes = [8, 8], strides = [1, 1]} : vector<8x96xf32> to vector<8x8xf32>
    %60 = vector.shape_cast %59 : vector<8x8xf32> to vector<1x8x8xf32>
    %61 = vector.extract_strided_slice %40 {offsets = [0, 80], sizes = [8, 8], strides = [1, 1]} : vector<8x96xf32> to vector<8x8xf32>
    %62 = vector.shape_cast %61 : vector<8x8xf32> to vector<1x8x8xf32>
    %63 = vector.extract_strided_slice %40 {offsets = [0, 88], sizes = [8, 8], strides = [1, 1]} : vector<8x96xf32> to vector<8x8xf32>
    %64 = vector.shape_cast %63 : vector<8x8xf32> to vector<1x8x8xf32>
    %65 = tpu.concatenate %42, %44, %46, %48, %50, %52, %54, %56, %58, %60, %62, %64 in 0 : vector<1x8x8xf32>, vector<1x8x8xf32>, vector<1x8x8xf32>, vector<1x8x8xf32>, vector<1x8x8xf32>, vector<1x8x8xf32>, vector<1x8x8xf32>, vector<1x8x8xf32>, vector<1x8x8xf32>, vector<1x8x8xf32>, vector<1x8x8xf32>, vector<1x8x8xf32> -> vector<12x8x8xf32>
    %66 = vector.extract_strided_slice %65 {offsets = [0, 0, 0], sizes = [4, 8, 8], strides = [1, 1, 1]} : vector<12x8x8xf32> to vector<4x8x8xf32>
    %cst_21 = arith.constant 0.353553385 : f32
    %67 = vector.broadcast %cst_21 : f32 to vector<4x8x8xf32>
    %68 = arith.mulf %66, %67 : vector<4x8x8xf32>
    %69 = arith.truncf %68 : vector<4x8x8xf32> to vector<4x8x8xbf16>
    %70 = vector.extract_strided_slice %65 {offsets = [4, 0, 0], sizes = [4, 8, 8], strides = [1, 1, 1]} : vector<12x8x8xf32> to vector<4x8x8xf32>
    %71 = arith.truncf %70 : vector<4x8x8xf32> to vector<4x8x8xbf16>
    %72 = vector.extract_strided_slice %65 {offsets = [8, 0, 0], sizes = [4, 8, 8], strides = [1, 1, 1]} : vector<12x8x8xf32> to vector<4x8x8xf32>
    %73 = arith.truncf %72 : vector<4x8x8xf32> to vector<4x8x8xbf16>
    "tpu.trace_start"() <{level = 10 : i32, message = "hqd,hkd->hqk"}> : () -> ()
    %cst_22 = arith.constant dense<0.000000e+00> : vector<4x8x8xf32>
    %74 = tpu.matmul %69, %71, %cst_22 {dimension_numbers = #tpu.dot_dimension_numbers<[2], [2], [1], [1], [0, 0, 0, 1, 1, 1], [0], [0]>} : vector<4x8x8xbf16>, vector<4x8x8xbf16>, vector<4x8x8xf32> -> vector<4x8x8xf32>
    "tpu.trace_stop"() : () -> ()
    %75 = vector.broadcast %9 : vector<1x1x8xf32> to vector<4x8x8xf32>
    %76 = arith.addf %74, %75 : vector<4x8x8xf32>
    %cst_23 = arith.constant dense<0xFF800000> : vector<4x8xf32>
    %77 = vector.multi_reduction <maximumf>, %76, %cst_23 [2] : vector<4x8x8xf32> to vector<4x8xf32>
    %78 = vector.shape_cast %77 : vector<4x8xf32> to vector<4x8x1xf32>
    %79 = vector.broadcast %78 : vector<4x8x1xf32> to vector<4x8x8xf32>
    %80 = arith.subf %76, %79 : vector<4x8x8xf32>
    %81 = math.exp %80 : vector<4x8x8xf32>
    %cst_24 = arith.constant dense<0.000000e+00> : vector<4x8xf32>
    %82 = vector.multi_reduction <add>, %81, %cst_24 [2] : vector<4x8x8xf32> to vector<4x8xf32>
    %83 = vector.shape_cast %82 : vector<4x8xf32> to vector<4x8x1xf32>
    %84 = arith.truncf %81 : vector<4x8x8xf32> to vector<4x8x8xbf16>
    "tpu.trace_start"() <{level = 10 : i32, message = "hqk,hkd->hqd"}> : () -> ()
    %cst_25 = arith.constant dense<0.000000e+00> : vector<4x8x8xf32>
    %85 = tpu.matmul %84, %73, %cst_25 {dimension_numbers = #tpu.dot_dimension_numbers<[2], [1], [1], [2], [0, 0, 0, 1, 1, 2], [0], [0]>} : vector<4x8x8xbf16>, vector<4x8x8xbf16>, vector<4x8x8xf32> -> vector<4x8x8xf32>
    "tpu.trace_stop"() : () -> ()
    %86 = tpu.reciprocal %83 {approx = true} : vector<4x8x1xf32> -> vector<4x8x1xf32>
    %87 = vector.broadcast %86 : vector<4x8x1xf32> to vector<4x8x8xf32>
    %88 = arith.mulf %85, %87 : vector<4x8x8xf32>
    %89 = arith.truncf %88 : vector<4x8x8xf32> to vector<4x8x8xbf16>
    %90 = vector.extract_strided_slice %89 {offsets = [0, 0, 0], sizes = [1, 8, 8], strides = [1, 1, 1]} : vector<4x8x8xbf16> to vector<1x8x8xbf16>
    %91 = vector.shape_cast %90 : vector<1x8x8xbf16> to vector<8x8xbf16>
    %92 = vector.extract_strided_slice %89 {offsets = [1, 0, 0], sizes = [1, 8, 8], strides = [1, 1, 1]} : vector<4x8x8xbf16> to vector<1x8x8xbf16>
    %93 = vector.shape_cast %92 : vector<1x8x8xbf16> to vector<8x8xbf16>
    %94 = vector.extract_strided_slice %89 {offsets = [2, 0, 0], sizes = [1, 8, 8], strides = [1, 1, 1]} : vector<4x8x8xbf16> to vector<1x8x8xbf16>
    %95 = vector.shape_cast %94 : vector<1x8x8xbf16> to vector<8x8xbf16>
    %96 = vector.extract_strided_slice %89 {offsets = [3, 0, 0], sizes = [1, 8, 8], strides = [1, 1, 1]} : vector<4x8x8xbf16> to vector<1x8x8xbf16>
    %97 = vector.shape_cast %96 : vector<1x8x8xbf16> to vector<8x8xbf16>
    %98 = tpu.concatenate %91, %93, %95, %97 in 1 : vector<8x8xbf16>, vector<8x8xbf16>, vector<8x8xbf16>, vector<8x8xbf16> -> vector<8x32xbf16>
    %c0_26 = arith.constant 0 : index
    %c0_27 = arith.constant 0 : index
    %99 = vector.load %arg5[%c0_26, %c0_27] : memref<32x32xbf16, #tpu.memory_space<vmem>>, vector<32x32xbf16>
    %cst_28 = arith.constant dense<0.000000e+00> : vector<8x32xf32>
    %100 = tpu.matmul %98, %99, %cst_28 {dimension_numbers = #tpu.dot_dimension_numbers<[1], [0], [0], [1], [0, 0, 1, 1], [], []>} : vector<8x32xbf16>, vector<32x32xbf16>, vector<8x32xf32> -> vector<8x32xf32>
    %c0_29 = arith.constant 0 : index
    %c0_30 = arith.constant 0 : index
    %101 = vector.load %arg6[%c0_29, %c0_30] : memref<1x32xf32, #tpu.memory_space<vmem>>, vector<1x32xf32>
    %102 = vector.broadcast %101 : vector<1x32xf32> to vector<8x32xf32>
    %103 = arith.addf %100, %102 : vector<8x32xf32>
    %104 = arith.addf %1, %103 : vector<8x32xf32>
    %c0_31 = arith.constant 0 : index
    %c0_32 = arith.constant 0 : index
    %105 = vector.load %arg13[%c0_31, %c0_32] : memref<1x32xf32, #tpu.memory_space<vmem>>, vector<1x32xf32>
    %c0_33 = arith.constant 0 : index
    %c0_34 = arith.constant 0 : index
    %106 = vector.load %arg14[%c0_33, %c0_34] : memref<1x32xf32, #tpu.memory_space<vmem>>, vector<1x32xf32>
    %cst_35 = arith.constant dense<0.000000e+00> : vector<8xf32>
    %107 = vector.multi_reduction <add>, %104, %cst_35 [1] : vector<8x32xf32> to vector<8xf32>
    %108 = vector.shape_cast %107 : vector<8xf32> to vector<8x1xf32>
    %cst_36 = arith.constant 3.200000e+01 : f32
    %109 = vector.broadcast %cst_36 : f32 to vector<8x1xf32>
    %110 = arith.divf %108, %109 : vector<8x1xf32>
    %111 = vector.broadcast %110 : vector<8x1xf32> to vector<8x32xf32>
    %112 = arith.subf %104, %111 : vector<8x32xf32>
    %113 = arith.mulf %112, %112 : vector<8x32xf32>
    %cst_37 = arith.constant dense<0.000000e+00> : vector<8xf32>
    %114 = vector.multi_reduction <add>, %113, %cst_37 [1] : vector<8x32xf32> to vector<8xf32>
    %115 = vector.shape_cast %114 : vector<8xf32> to vector<8x1xf32>
    %cst_38 = arith.constant 0.0322580636 : f32
    %116 = vector.broadcast %cst_38 : f32 to vector<8x1xf32>
    %117 = arith.mulf %115, %116 : vector<8x1xf32>
    %118 = math.sqrt %117 : vector<8x1xf32>
    %cst_39 = arith.constant 9.99999997E-7 : f32
    %119 = vector.broadcast %cst_39 : f32 to vector<8x1xf32>
    %120 = arith.addf %118, %119 : vector<8x1xf32>
    %121 = tpu.reciprocal %120 {approx = true} : vector<8x1xf32> -> vector<8x1xf32>
    %122 = vector.broadcast %110 : vector<8x1xf32> to vector<8x32xf32>
    %123 = arith.subf %104, %122 : vector<8x32xf32>
    %124 = vector.broadcast %105 : vector<1x32xf32> to vector<8x32xf32>
    %125 = arith.mulf %124, %123 : vector<8x32xf32>
    %126 = vector.broadcast %121 : vector<8x1xf32> to vector<8x32xf32>
    %127 = arith.mulf %125, %126 : vector<8x32xf32>
    %128 = vector.broadcast %106 : vector<1x32xf32> to vector<8x32xf32>
    %129 = arith.addf %127, %128 : vector<8x32xf32>
    %130 = arith.truncf %129 : vector<8x32xf32> to vector<8x32xbf16>
    %c0_40 = arith.constant 0 : index
    %c0_41 = arith.constant 0 : index
    %131 = vector.load %arg7[%c0_40, %c0_41] : memref<32x128xbf16, #tpu.memory_space<vmem>>, vector<32x128xbf16>
    %cst_42 = arith.constant dense<0.000000e+00> : vector<8x128xf32>
    %132 = tpu.matmul %130, %131, %cst_42 {dimension_numbers = #tpu.dot_dimension_numbers<[1], [0], [0], [1], [0, 0, 1, 1], [], []>} : vector<8x32xbf16>, vector<32x128xbf16>, vector<8x128xf32> -> vector<8x128xf32>
    %c0_43 = arith.constant 0 : index
    %c0_44 = arith.constant 0 : index
    %133 = vector.load %arg8[%c0_43, %c0_44] : memref<1x128xf32, #tpu.memory_space<vmem>>, vector<1x128xf32>
    %134 = vector.broadcast %133 : vector<1x128xf32> to vector<8x128xf32>
    %135 = arith.addf %132, %134 : vector<8x128xf32>
    %cst_45 = arith.constant 5.000000e-01 : f32
    %136 = vector.broadcast %cst_45 : f32 to vector<8x128xf32>
    %137 = arith.mulf %136, %135 : vector<8x128xf32>
    %138 = arith.mulf %135, %135 : vector<8x128xf32>
    %139 = arith.mulf %135, %138 : vector<8x128xf32>
    %cst_46 = arith.constant 4.471500e-02 : f32
    %140 = vector.broadcast %cst_46 : f32 to vector<8x128xf32>
    %141 = arith.mulf %140, %139 : vector<8x128xf32>
    %142 = arith.addf %135, %141 : vector<8x128xf32>
    %cst_47 = arith.constant 0.797884583 : f32
    %143 = vector.broadcast %cst_47 : f32 to vector<8x128xf32>
    %144 = arith.mulf %143, %142 : vector<8x128xf32>
    %145 = math.tanh %144 : vector<8x128xf32>
    %cst_48 = arith.constant 1.000000e+00 : f32
    %146 = vector.broadcast %cst_48 : f32 to vector<8x128xf32>
    %147 = arith.addf %146, %145 : vector<8x128xf32>
    %148 = arith.mulf %137, %147 : vector<8x128xf32>
    %149 = arith.truncf %148 : vector<8x128xf32> to vector<8x128xbf16>
    %c0_49 = arith.constant 0 : index
    %c0_50 = arith.constant 0 : index
    %150 = vector.load %arg9[%c0_49, %c0_50] : memref<128x32xbf16, #tpu.memory_space<vmem>>, vector<128x32xbf16>
    %cst_51 = arith.constant dense<0.000000e+00> : vector<8x32xf32>
    %151 = tpu.matmul %149, %150, %cst_51 {dimension_numbers = #tpu.dot_dimension_numbers<[1], [0], [0], [1], [0, 0, 1, 1], [], []>} : vector<8x128xbf16>, vector<128x32xbf16>, vector<8x32xf32> -> vector<8x32xf32>
    %c0_52 = arith.constant 0 : index
    %c0_53 = arith.constant 0 : index
    %152 = vector.load %arg10[%c0_52, %c0_53] : memref<1x32xf32, #tpu.memory_space<vmem>>, vector<1x32xf32>
    %153 = vector.broadcast %152 : vector<1x32xf32> to vector<8x32xf32>
    %154 = arith.addf %151, %153 : vector<8x32xf32>
    %155 = arith.addf %104, %154 : vector<8x32xf32>
    %c0_54 = arith.constant 0 : index
    %c0_55 = arith.constant 0 : index
    %c0_56 = arith.constant 0 : index
    %156 = vector.load %arg15[%c0_54, %c0_55, %c0_56] : memref<1x8x32xf32, #tpu.memory_space<vmem>>, vector<1x8x32xf32>
    %157 = vector.shape_cast %156 : vector<1x8x32xf32> to vector<8x32xf32>
    %158 = vector.shape_cast %155 : vector<8x32xf32> to vector<1x8x32xf32>
    tpu.vector_store %arg15[%c0_54, %c0_55, %c0_56], %158 {strides = array<i32>} : memref<1x8x32xf32, #tpu.memory_space<vmem>>, vector<1x8x32xf32>,
    return
  }
  func.func @transform_0(%arg0: i32) -> (i32, i32, i32) {
    %c0_i32 = arith.constant 0 : i32
    %c0_i32_0 = arith.constant 0 : i32
    %c0_i32_1 = arith.constant 0 : i32
    return %arg0, %c0_i32, %c0_i32_0 : i32, i32, i32
  }
  func.func @transform_1(%arg0: i32) -> (i32, i32, i32) {
    %c0_i32 = arith.constant 0 : i32
    %c0_i32_0 = arith.constant 0 : i32
    %c0_i32_1 = arith.constant 0 : i32
    return %arg0, %c0_i32, %c0_i32_0 : i32, i32, i32
  }
  func.func @transform_2(%arg0: i32) -> (i32, i32) {
    %c0_i32 = arith.constant 0 : i32
    %c0_i32_0 = arith.constant 0 : i32
    %c0_i32_1 = arith.constant 0 : i32
    return %c0_i32, %c0_i32_0 : i32, i32
  }
  func.func @transform_3(%arg0: i32) -> (i32, i32) {
    %c0_i32 = arith.constant 0 : i32
    %c0_i32_0 = arith.constant 0 : i32
    %c0_i32_1 = arith.constant 0 : i32
    return %c0_i32, %c0_i32_0 : i32, i32
  }
  func.func @transform_4(%arg0: i32) -> (i32, i32) {
    %c0_i32 = arith.constant 0 : i32
    %c0_i32_0 = arith.constant 0 : i32
    %c0_i32_1 = arith.constant 0 : i32
    return %c0_i32, %c0_i32_0 : i32, i32
  }
  func.func @transform_5(%arg0: i32) -> (i32, i32) {
    %c0_i32 = arith.constant 0 : i32
    %c0_i32_0 = arith.constant 0 : i32
    %c0_i32_1 = arith.constant 0 : i32
    return %c0_i32, %c0_i32_0 : i32, i32
  }
  func.func @transform_6(%arg0: i32) -> (i32, i32) {
    %c0_i32 = arith.constant 0 : i32
    %c0_i32_0 = arith.constant 0 : i32
    %c0_i32_1 = arith.constant 0 : i32
    return %c0_i32, %c0_i32_0 : i32, i32
  }
  func.func @transform_7(%arg0: i32) -> (i32, i32) {
    %c0_i32 = arith.constant 0 : i32
    %c0_i32_0 = arith.constant 0 : i32
    %c0_i32_1 = arith.constant 0 : i32
    return %c0_i32, %c0_i32_0 : i32, i32
  }
  func.func @transform_8(%arg0: i32) -> (i32, i32) {
    %c0_i32 = arith.constant 0 : i32
    %c0_i32_0 = arith.constant 0 : i32
    %c0_i32_1 = arith.constant 0 : i32
    return %c0_i32, %c0_i32_0 : i32, i32
  }
  func.func @transform_9(%arg0: i32) -> (i32, i32) {
    %c0_i32 = arith.constant 0 : i32
    %c0_i32_0 = arith.constant 0 : i32
    %c0_i32_1 = arith.constant 0 : i32
    return %c0_i32, %c0_i32_0 : i32, i32
  }
  func.func @transform_10(%arg0: i32) -> (i32, i32) {
    %c0_i32 = arith.constant 0 : i32
    %c0_i32_0 = arith.constant 0 : i32
    %c0_i32_1 = arith.constant 0 : i32
    return %c0_i32, %c0_i32_0 : i32, i32
  }
  func.func @transform_11(%arg0: i32) -> (i32, i32) {
    %c0_i32 = arith.constant 0 : i32
    %c0_i32_0 = arith.constant 0 : i32
    %c0_i32_1 = arith.constant 0 : i32
    return %c0_i32, %c0_i32_0 : i32, i32
  }
  func.func @transform_12(%arg0: i32) -> (i32, i32) {
    %c0_i32 = arith.constant 0 : i32
    %c0_i32_0 = arith.constant 0 : i32
    %c0_i32_1 = arith.constant 0 : i32
    return %c0_i32, %c0_i32_0 : i32, i32
  }
  func.func @transform_13(%arg0: i32) -> (i32, i32) {
    %c0_i32 = arith.constant 0 : i32
    %c0_i32_0 = arith.constant 0 : i32
    %c0_i32_1 = arith.constant 0 : i32
    return %c0_i32, %c0_i32_0 : i32, i32
  }
  func.func @transform_14(%arg0: i32) -> (i32, i32, i32) {
    %c0_i32 = arith.constant 0 : i32
    %c0_i32_0 = arith.constant 0 : i32
    %c0_i32_1 = arith.constant 0 : i32
    return %arg0, %c0_i32, %c0_i32_0 : i32, i32, i32
  }
}

</mosaic_0001>

<llo_original>
// kernel: tpu_custom_call.1
$region0: #{tpu_custom_call.1}
  #allocation0 [shape = 'u32[]', space=smem, size = 0x4, offset = 0x4, fixed_abs, tag = 'smem constant byte address 0x4 - core index']
  #allocation1 [shape = 'u32[72,128]{1,0:T(1,128)}', space=vmem, size = 0x9000, scoped, tag = 'internal scratch']
  %s0 = inlined_call_operand.vmem [shape: f32[2,8,32], index: 0, kind: input, shape index: {}]
  %s1 = inlined_call_operand.vmem [shape: f32[2,1,8], index: 1, kind: input, shape index: {}]
  %s2 = inlined_call_operand.vmem [shape: bf16[32,96], index: 2, kind: input, shape index: {}]
  %s3 = inlined_call_operand.vmem [shape: f32[1,96], index: 3, kind: input, shape index: {}]
  %s4 = inlined_call_operand.vmem [shape: bf16[32,32], index: 4, kind: input, shape index: {}]
  %s5 = inlined_call_operand.vmem [shape: f32[1,32], index: 5, kind: input, shape index: {}]
  %s6 = inlined_call_operand.vmem [shape: bf16[32,128], index: 6, kind: input, shape index: {}]
  %s7 = inlined_call_operand.vmem [shape: f32[1,128], index: 7, kind: input, shape index: {}]
  %s8 = inlined_call_operand.vmem [shape: bf16[128,32], index: 8, kind: input, shape index: {}]
  %s9 = inlined_call_operand.vmem [shape: f32[1,32], index: 9, kind: input, shape index: {}]
  %s10 = inlined_call_operand.vmem [shape: f32[1,32], index: 10, kind: input, shape index: {}]
  %s11 = inlined_call_operand.vmem [shape: f32[1,32], index: 11, kind: input, shape index: {}]
  %s12 = inlined_call_operand.vmem [shape: f32[1,32], index: 12, kind: input, shape index: {}]
  %s13 = inlined_call_operand.vmem [shape: f32[1,32], index: 13, kind: input, shape index: {}]
  %s14 = inlined_call_operand.hbm [shape: f32[2,8,32], index: 14, kind: output, shape index: {}]
  %s15 = sld [smem:[#allocation0]]
  $region89: #{tpu_custom_call.1} parent=0
    _
  %s17 = ssub.s32 1, %s15
  %s18 = scalar_select 0, %s17, %s15
  $region1: #{tpu_custom_call.1} parent=0
    #allocation2 [shape = 'u8[8192]{0}', space=vmem, size = 0x2000, scoped, tag = 'output window, operand 0']
    #allocation3 [shape = 's32[2]{0}', space=sflag, size = 0x8, scoped, tag = 'scoped memory for tpu_custom_call.1']
    %19 = vsyncpa [#allocation3], 0
    %s20 = scalar_lea.sflag [#allocation3], 1
    %21 = vsyncpa %s20, 0
    loop: start=0, step=1, limit=4
    $region2: #{tpu_custom_call.1} parent=1 // loop_pre_header
      _
    $region3: #{tpu_custom_call.1} parent=1 // loop_header
      %s23 = sphi 0, %s27
      %p24 = scmp.ge.s32.totalorder %s23, 4
      %s33 = sphi 0, %s35
      %s36 = sphi 0, %s33
      %s37 = sphi 0, %s36
      %s53 = sphi 0, %s37
      %s59 = sphi 0, %s61
      %s62 = sphi 0, %s59
      %s63 = sphi 0, %s62
      %s79 = sphi 0, %s63
      %s83 = sphi 0, %s83
      %s85 = sphi 0, %s83
      %s86 = sphi 0, %s85
      %s100 = sphi 0, %s86
      %s104 = sphi 0, %s104
      %s106 = sphi 0, %s104
      %s107 = sphi 0, %s106
      %s121 = sphi 0, %s107
      %s125 = sphi 0, %s125
      %s127 = sphi 0, %s125
      %s128 = sphi 0, %s127
      %s142 = sphi 0, %s128
      %s146 = sphi 0, %s146
      %s148 = sphi 0, %s146
      %s149 = sphi 0, %s148
      %s163 = sphi 0, %s149
      %s167 = sphi 0, %s167
      %s169 = sphi 0, %s167
      %s170 = sphi 0, %s169
      %s184 = sphi 0, %s170
      %s188 = sphi 0, %s188
      %s190 = sphi 0, %s188
      %s191 = sphi 0, %s190
      %s205 = sphi 0, %s191
      %s209 = sphi 0, %s209
      %s211 = sphi 0, %s209
      %s212 = sphi 0, %s211
      %s226 = sphi 0, %s212
      %s230 = sphi 0, %s230
      %s232 = sphi 0, %s230
      %s233 = sphi 0, %s232
      %s247 = sphi 0, %s233
      %s251 = sphi 0, %s251
      %s253 = sphi 0, %s251
      %s254 = sphi 0, %s253
      %s268 = sphi 0, %s254
      %s272 = sphi 0, %s272
      %s274 = sphi 0, %s272
      %s275 = sphi 0, %s274
      %s289 = sphi 0, %s275
      %s293 = sphi 0, %s293
      %s295 = sphi 0, %s293
      %s296 = sphi 0, %s295
      %s310 = sphi 0, %s296
      %s314 = sphi 0, %s314
      %s316 = sphi 0, %s314
      %s317 = sphi 0, %s316
      %s331 = sphi 0, %s317
      %s337 = sphi 0, %s339
      %s340 = sphi 0, %s337
      %s341 = sphi 0, %s340
      %s357 = sphi 0, %s341
    $region4: #{tpu_custom_call.1} parent=1 // loop_header_branch
      %26 = sbr.rel (%p24) target = $region8
    $region5: #{tpu_custom_call.1} parent=1 // loop_body
      %s28 = ssub.s32 %s23, 1
      %s29 = ssub.s32 %s23, 2
      %s30 = sadd.s32 %s23, 1
      %s31 = ssub.s32 %s23, %s30
      %p32 = scmp.eq.s32.totalorder %s31, 0
      %s34 = sadd.s32 %s33, 1
      %s35 = scalar_select %p32, %s33, %s34
      %p38 = pneg %p32
      %p39 = scmp.eq.s32.totalorder %s23, 1
      %p40 = por %p38, %p39
      %p41 = scmp.ne.s32.totalorder %s33, %s36
      %p42 = scmp.eq.s32.totalorder %s23, 0
      %p43 = por %p41, %p42
      %p44 = scmp.ne.s32.totalorder %s33, %s36
      %p45 = scmp.eq.s32.totalorder %s28, 1
      %p46 = por %p44, %p45
      %p47 = scmp.ne.s32.totalorder %s36, %s37
      %p48 = scmp.eq.s32.totalorder %s28, 0
      %p49 = por %p47, %p48
      %p50 = scmp.ne.s32.totalorder %s36, %s37
      %p51 = scmp.eq.s32.totalorder %s29, 1
      %p52 = por %p50, %p51
      %p54 = scmp.ne.s32.totalorder %s37, %s53
      %p55 = scmp.eq.s32.totalorder %s29, 0
      %p56 = por %p54, %p55
      %s57 = ssub.s32 %s23, %s30
      %p58 = scmp.eq.s32.totalorder %s57, 0
      %s60 = sadd.s32 %s59, 1
      %s61 = scalar_select %p58, %s59, %s60
      %p64 = pneg %p58
      %p65 = scmp.eq.s32.totalorder %s23, 1
      %p66 = por %p64, %p65
      %p67 = scmp.ne.s32.totalorder %s59, %s62
      %p68 = scmp.eq.s32.totalorder %s23, 0
      %p69 = por %p67, %p68
      %p70 = scmp.ne.s32.totalorder %s59, %s62
      %p71 = scmp.eq.s32.totalorder %s28, 1
      %p72 = por %p70, %p71
      %p73 = scmp.ne.s32.totalorder %s62, %s63
      %p74 = scmp.eq.s32.totalorder %s28, 0
      %p75 = por %p73, %p74
      %p76 = scmp.ne.s32.totalorder %s62, %s63
      %p77 = scmp.eq.s32.totalorder %s29, 1
      %p78 = por %p76, %p77
      %p80 = scmp.ne.s32.totalorder %s63, %s79
      %p81 = scmp.eq.s32.totalorder %s29, 0
      %p82 = por %p80, %p81
      %s84 = sadd.s32 %s83, 1
      %p87 = scmp.eq.s32.totalorder %s23, 1
      %p88 = scmp.ne.s32.totalorder %s83, %s85
      %p89 = scmp.eq.s32.totalorder %s23, 0
      %p90 = por %p88, %p89
      %p91 = scmp.ne.s32.totalorder %s83, %s85
      %p92 = scmp.eq.s32.totalorder %s28, 1
      %p93 = por %p91, %p92
      %p94 = scmp.ne.s32.totalorder %s85, %s86
      %p95 = scmp.eq.s32.totalorder %s28, 0
      %p96 = por %p94, %p95
      %p97 = scmp.ne.s32.totalorder %s85, %s86
      %p98 = scmp.eq.s32.totalorder %s29, 1
      %p99 = por %p97, %p98
      %p101 = scmp.ne.s32.totalorder %s86, %s100
      %p102 = scmp.eq.s32.totalorder %s29, 0
      %p103 = por %p101, %p102
      %s105 = sadd.s32 %s104, 1
      %p108 = scmp.eq.s32.totalorder %s23, 1
      %p109 = scmp.ne.s32.totalorder %s104, %s106
      %p110 = scmp.eq.s32.totalorder %s23, 0
      %p111 = por %p109, %p110
      %p112 = scmp.ne.s32.totalorder %s104, %s106
      %p113 = scmp.eq.s32.totalorder %s28, 1
      %p114 = por %p112, %p113
      %p115 = scmp.ne.s32.totalorder %s106, %s107
      %p116 = scmp.eq.s32.totalorder %s28, 0
      %p117 = por %p115, %p116
      %p118 = scmp.ne.s32.totalorder %s106, %s107
      %p119 = scmp.eq.s32.totalorder %s29, 1
      %p120 = por %p118, %p119
      %p122 = scmp.ne.s32.totalorder %s107, %s121
      %p123 = scmp.eq.s32.totalorder %s29, 0
      %p124 = por %p122, %p123
      %s126 = sadd.s32 %s125, 1
      %p129 = scmp.eq.s32.totalorder %s23, 1
      %p130 = scmp.ne.s32.totalorder %s125, %s127
      %p131 = scmp.eq.s32.totalorder %s23, 0
      %p132 = por %p130, %p131
      %p133 = scmp.ne.s32.totalorder %s125, %s127
      %p134 = scmp.eq.s32.totalorder %s28, 1
      %p135 = por %p133, %p134
      %p136 = scmp.ne.s32.totalorder %s127, %s128
      %p137 = scmp.eq.s32.totalorder %s28, 0
      %p138 = por %p136, %p137
      %p139 = scmp.ne.s32.totalorder %s127, %s128
      %p140 = scmp.eq.s32.totalorder %s29, 1
      %p141 = por %p139, %p140
      %p143 = scmp.ne.s32.totalorder %s128, %s142
      %p144 = scmp.eq.s32.totalorder %s29, 0
      %p145 = por %p143, %p144
      %s147 = sadd.s32 %s146, 1
      %p150 = scmp.eq.s32.totalorder %s23, 1
      %p151 = scmp.ne.s32.totalorder %s146, %s148
      %p152 = scmp.eq.s32.totalorder %s23, 0
      %p153 = por %p151, %p152
      %p154 = scmp.ne.s32.totalorder %s146, %s148
      %p155 = scmp.eq.s32.totalorder %s28, 1
      %p156 = por %p154, %p155
      %p157 = scmp.ne.s32.totalorder %s148, %s149
      %p158 = scmp.eq.s32.totalorder %s28, 0
      %p159 = por %p157, %p158
      %p160 = scmp.ne.s32.totalorder %s148, %s149
      %p161 = scmp.eq.s32.totalorder %s29, 1
      %p162 = por %p160, %p161
      %p164 = scmp.ne.s32.totalorder %s149, %s163
      %p165 = scmp.eq.s32.totalorder %s29, 0
      %p166 = por %p164, %p165
      %s168 = sadd.s32 %s167, 1
      %p171 = scmp.eq.s32.totalorder %s23, 1
      %p172 = scmp.ne.s32.totalorder %s167, %s169
      %p173 = scmp.eq.s32.totalorder %s23, 0
      %p174 = por %p172, %p173
      %p175 = scmp.ne.s32.totalorder %s167, %s169
      %p176 = scmp.eq.s32.totalorder %s28, 1
      %p177 = por %p175, %p176
      %p178 = scmp.ne.s32.totalorder %s169, %s170
      %p179 = scmp.eq.s32.totalorder %s28, 0
      %p180 = por %p178, %p179
      %p181 = scmp.ne.s32.totalorder %s169, %s170
      %p182 = scmp.eq.s32.totalorder %s29, 1
      %p183 = por %p181, %p182
      %p185 = scmp.ne.s32.totalorder %s170, %s184
      %p186 = scmp.eq.s32.totalorder %s29, 0
      %p187 = por %p185, %p186
      %s189 = sadd.s32 %s188, 1
      %p192 = scmp.eq.s32.totalorder %s23, 1
      %p193 = scmp.ne.s32.totalorder %s188, %s190
      %p194 = scmp.eq.s32.totalorder %s23, 0
      %p195 = por %p193, %p194
      %p196 = scmp.ne.s32.totalorder %s188, %s190
      %p197 = scmp.eq.s32.totalorder %s28, 1
      %p198 = por %p196, %p197
      %p199 = scmp.ne.s32.totalorder %s190, %s191
      %p200 = scmp.eq.s32.totalorder %s28, 0
      %p201 = por %p199, %p200
      %p202 = scmp.ne.s32.totalorder %s190, %s191
      %p203 = scmp.eq.s32.totalorder %s29, 1
      %p204 = por %p202, %p203
      %p206 = scmp.ne.s32.totalorder %s191, %s205
      %p207 = scmp.eq.s32.totalorder %s29, 0
      %p208 = por %p206, %p207
      %s210 = sadd.s32 %s209, 1
      %p213 = scmp.eq.s32.totalorder %s23, 1
      %p214 = scmp.ne.s32.totalorder %s209, %s211
      %p215 = scmp.eq.s32.totalorder %s23, 0
      %p216 = por %p214, %p215
      %p217 = scmp.ne.s32.totalorder %s209, %s211
      %p218 = scmp.eq.s32.totalorder %s28, 1
      %p219 = por %p217, %p218
      %p220 = scmp.ne.s32.totalorder %s211, %s212
      %p221 = scmp.eq.s32.totalorder %s28, 0
      %p222 = por %p220, %p221
      %p223 = scmp.ne.s32.totalorder %s211, %s212
      %p224 = scmp.eq.s32.totalorder %s29, 1
      %p225 = por %p223, %p224
      %p227 = scmp.ne.s32.totalorder %s212, %s226
      %p228 = scmp.eq.s32.totalorder %s29, 0
      %p229 = por %p227, %p228
      %s231 = sadd.s32 %s230, 1
      %p234 = scmp.eq.s32.totalorder %s23, 1
      %p235 = scmp.ne.s32.totalorder %s230, %s232
      %p236 = scmp.eq.s32.totalorder %s23, 0
      %p237 = por %p235, %p236
      %p238 = scmp.ne.s32.totalorder %s230, %s232
      %p239 = scmp.eq.s32.totalorder %s28, 1
      %p240 = por %p238, %p239
      %p241 = scmp.ne.s32.totalorder %s232, %s233
      %p242 = scmp.eq.s32.totalorder %s28, 0
      %p243 = por %p241, %p242
      %p244 = scmp.ne.s32.totalorder %s232, %s233
      %p245 = scmp.eq.s32.totalorder %s29, 1
      %p246 = por %p244, %p245
      %p248 = scmp.ne.s32.totalorder %s233, %s247
      %p249 = scmp.eq.s32.totalorder %s29, 0
      %p250 = por %p248, %p249
      %s252 = sadd.s32 %s251, 1
      %p255 = scmp.eq.s32.totalorder %s23, 1
      %p256 = scmp.ne.s32.totalorder %s251, %s253
      %p257 = scmp.eq.s32.totalorder %s23, 0
      %p258 = por %p256, %p257
      %p259 = scmp.ne.s32.totalorder %s251, %s253
      %p260 = scmp.eq.s32.totalorder %s28, 1
      %p261 = por %p259, %p260
      %p262 = scmp.ne.s32.totalorder %s253, %s254
      %p263 = scmp.eq.s32.totalorder %s28, 0
      %p264 = por %p262, %p263
      %p265 = scmp.ne.s32.totalorder %s253, %s254
      %p266 = scmp.eq.s32.totalorder %s29, 1
      %p267 = por %p265, %p266
      %p269 = scmp.ne.s32.totalorder %s254, %s268
      %p270 = scmp.eq.s32.totalorder %s29, 0
      %p271 = por %p269, %p270
      %s273 = sadd.s32 %s272, 1
      %p276 = scmp.eq.s32.totalorder %s23, 1
      %p277 = scmp.ne.s32.totalorder %s272, %s274
      %p278 = scmp.eq.s32.totalorder %s23, 0
      %p279 = por %p277, %p278
      %p280 = scmp.ne.s32.totalorder %s272, %s274
      %p281 = scmp.eq.s32.totalorder %s28, 1
      %p282 = por %p280, %p281
      %p283 = scmp.ne.s32.totalorder %s274, %s275
      %p284 = scmp.eq.s32.totalorder %s28, 0
      %p285 = por %p283, %p284
      %p286 = scmp.ne.s32.totalorder %s274, %s275
      %p287 = scmp.eq.s32.totalorder %s29, 1
      %p288 = por %p286, %p287
      %p290 = scmp.ne.s32.totalorder %s275, %s289
      %p291 = scmp.eq.s32.totalorder %s29, 0
      %p292 = por %p290, %p291
      %s294 = sadd.s32 %s293, 1
      %p297 = scmp.eq.s32.totalorder %s23, 1
      %p298 = scmp.ne.s32.totalorder %s293, %s295
      %p299 = scmp.eq.s32.totalorder %s23, 0
      %p300 = por %p298, %p299
      %p301 = scmp.ne.s32.totalorder %s293, %s295
      %p302 = scmp.eq.s32.totalorder %s28, 1
      %p303 = por %p301, %p302
      %p304 = scmp.ne.s32.totalorder %s295, %s296
      %p305 = scmp.eq.s32.totalorder %s28, 0
      %p306 = por %p304, %p305
      %p307 = scmp.ne.s32.totalorder %s295, %s296
      %p308 = scmp.eq.s32.totalorder %s29, 1
      %p309 = por %p307, %p308
      %p311 = scmp.ne.s32.totalorder %s296, %s310
      %p312 = scmp.eq.s32.totalorder %s29, 0
      %p313 = por %p311, %p312
      %s315 = sadd.s32 %s314, 1
      %p318 = scmp.eq.s32.totalorder %s23, 1
      %p319 = scmp.ne.s32.totalorder %s314, %s316
      %p320 = scmp.eq.s32.totalorder %s23, 0
      %p321 = por %p319, %p320
      %p322 = scmp.ne.s32.totalorder %s314, %s316
      %p323 = scmp.eq.s32.totalorder %s28, 1
      %p324 = por %p322, %p323
      %p325 = scmp.ne.s32.totalorder %s316, %s317
      %p326 = scmp.eq.s32.totalorder %s28, 0
      %p327 = por %p325, %p326
      %p328 = scmp.ne.s32.totalorder %s316, %s317
      %p329 = scmp.eq.s32.totalorder %s29, 1
      %p330 = por %p328, %p329
      %p332 = scmp.ne.s32.totalorder %s317, %s331
      %p333 = scmp.eq.s32.totalorder %s29, 0
      %p334 = por %p332, %p333
      %s335 = ssub.s32 %s23, %s30
      %p336 = scmp.eq.s32.totalorder %s335, 0
      %s338 = sadd.s32 %s337, 1
      %s339 = scalar_select %p336, %s337, %s338
      %p342 = pneg %p336
      %p343 = scmp.eq.s32.totalorder %s23, 1
      %p344 = por %p342, %p343
      %p345 = scmp.ne.s32.totalorder %s337, %s340
      %p346 = scmp.eq.s32.totalorder %s23, 0
      %p347 = por %p345, %p346
      %p348 = scmp.ne.s32.totalorder %s337, %s340
      %p349 = scmp.eq.s32.totalorder %s28, 1
      %p350 = por %p348, %p349
      %p351 = scmp.ne.s32.totalorder %s340, %s341
      %p352 = scmp.eq.s32.totalorder %s28, 0
      %p353 = por %p351, %p352
      %p354 = scmp.ne.s32.totalorder %s340, %s341
      %p355 = scmp.eq.s32.totalorder %s29, 1
      %p356 = por %p354, %p355
      %p358 = scmp.ne.s32.totalorder %s341, %s357
      %p359 = scmp.eq.s32.totalorder %s29, 0
      %p360 = por %p358, %p359
      %p361 = scmp.le.s32.totalorder 1, %s23
      %p362 = scmp.lt.s32.totalorder %s23, 3
      %p363 = pnand %p361, %p362
      %p364 = pneg %p363
      // Predicated region
      $region9: #{tpu_custom_call.1} parent=5 // pred_check
        _
      $region10: #{tpu_custom_call.1} parent=5 // pred_check_branch
        %366 = sbr.rel (%p363) target = $region12
      $region11: #{tpu_custom_call.1} parent=5 // pred_region
        %s367 = ssub.s32 %s23, 1
        // Predicated region
        $region13: #{tpu_custom_call.1} parent=11 // pred_check
          %p368 = pneg %p96
        $region14: #{tpu_custom_call.1} parent=11 // pred_check_branch
          %370 = sbr.rel (%p368) target = $region16
        $region15: #{tpu_custom_call.1} parent=11 // pred_region
          _
        $region16: #{tpu_custom_call.1} parent=11 // pred_fallthru
          _
        // Predicated region
        $region17: #{tpu_custom_call.1} parent=11 // pred_check
          %p371 = pneg %p117
        $region18: #{tpu_custom_call.1} parent=11 // pred_check_branch
          %373 = sbr.rel (%p371) target = $region20
        $region19: #{tpu_custom_call.1} parent=11 // pred_region
          _
        $region20: #{tpu_custom_call.1} parent=11 // pred_fallthru
          _
        // Predicated region
        $region21: #{tpu_custom_call.1} parent=11 // pred_check
          %p374 = pneg %p138
        $region22: #{tpu_custom_call.1} parent=11 // pred_check_branch
          %376 = sbr.rel (%p374) target = $region24
        $region23: #{tpu_custom_call.1} parent=11 // pred_region
          _
        $region24: #{tpu_custom_call.1} parent=11 // pred_fallthru
          _
        // Predicated region
        $region25: #{tpu_custom_call.1} parent=11 // pred_check
          %p377 = pneg %p159
        $region26: #{tpu_custom_call.1} parent=11 // pred_check_branch
          %379 = sbr.rel (%p377) target = $region28
        $region27: #{tpu_custom_call.1} parent=11 // pred_region
          _
        $region28: #{tpu_custom_call.1} parent=11 // pred_fallthru
          _
        // Predicated region
        $region29: #{tpu_custom_call.1} parent=11 // pred_check
          %p380 = pneg %p180
        $region30: #{tpu_custom_call.1} parent=11 // pred_check_branch
          %382 = sbr.rel (%p380) target = $region32
        $region31: #{tpu_custom_call.1} parent=11 // pred_region
          _
        $region32: #{tpu_custom_call.1} parent=11 // pred_fallthru
          _
        // Predicated region
        $region33: #{tpu_custom_call.1} parent=11 // pred_check
          %p383 = pneg %p201
        $region34: #{tpu_custom_call.1} parent=11 // pred_check_branch
          %385 = sbr.rel (%p383) target = $region36
        $region35: #{tpu_custom_call.1} parent=11 // pred_region
          _
        $region36: #{tpu_custom_call.1} parent=11 // pred_fallthru
          _
        // Predicated region
        $region37: #{tpu_custom_call.1} parent=11 // pred_check
          %p386 = pneg %p222
        $region38: #{tpu_custom_call.1} parent=11 // pred_check_branch
          %388 = sbr.rel (%p386) target = $region40
        $region39: #{tpu_custom_call.1} parent=11 // pred_region
          _
        $region40: #{tpu_custom_call.1} parent=11 // pred_fallthru
          _
        // Predicated region
        $region41: #{tpu_custom_call.1} parent=11 // pred_check
          %p389 = pneg %p243
        $region42: #{tpu_custom_call.1} parent=11 // pred_check_branch
          %391 = sbr.rel (%p389) target = $region44
        $region43: #{tpu_custom_call.1} parent=11 // pred_region
          _
        $region44: #{tpu_custom_call.1} parent=11 // pred_fallthru
          _
        // Predicated region
        $region45: #{tpu_custom_call.1} parent=11 // pred_check
          %p392 = pneg %p264
        $region46: #{tpu_custom_call.1} parent=11 // pred_check_branch
          %394 = sbr.rel (%p392) target = $region48
        $region47: #{tpu_custom_call.1} parent=11 // pred_region
          _
        $region48: #{tpu_custom_call.1} parent=11 // pred_fallthru
          _
        // Predicated region
        $region49: #{tpu_custom_call.1} parent=11 // pred_check
          %p395 = pneg %p285
        $region50: #{tpu_custom_call.1} parent=11 // pred_check_branch
          %397 = sbr.rel (%p395) target = $region52
        $region51: #{tpu_custom_call.1} parent=11 // pred_region
          _
        $region52: #{tpu_custom_call.1} parent=11 // pred_fallthru
          _
        // Predicated region
        $region53: #{tpu_custom_call.1} parent=11 // pred_check
          %p398 = pneg %p306
        $region54: #{tpu_custom_call.1} parent=11 // pred_check_branch
          %400 = sbr.rel (%p398) target = $region56
        $region55: #{tpu_custom_call.1} parent=11 // pred_region
          _
        $region56: #{tpu_custom_call.1} parent=11 // pred_fallthru
          _
        // Predicated region
        $region57: #{tpu_custom_call.1} parent=11 // pred_check
          %p401 = pneg %p327
        $region58: #{tpu_custom_call.1} parent=11 // pred_check_branch
          %403 = sbr.rel (%p401) target = $region60
        $region59: #{tpu_custom_call.1} parent=11 // pred_region
          _
        $region60: #{tpu_custom_call.1} parent=11 // pred_fallthru
          _
      $region12: #{tpu_custom_call.1} parent=5 // pred_fallthru
        _
      %p404 = scmp.lt.s32.totalorder %s23, 2
      // Predicated region
      $region61: #{tpu_custom_call.1} parent=5 // pred_check
        %p405 = pneg %p404
      $region62: #{tpu_custom_call.1} parent=5 // pred_check_branch
        %407 = sbr.rel (%p405) target = $region64
      $region63: #{tpu_custom_call.1} parent=5 // pred_region
        // Predicated region
        $region65: #{tpu_custom_call.1} parent=63 // pred_check
          %p408 = pneg %p43
        $region66: #{tpu_custom_call.1} parent=63 // pred_check_branch
          %410 = sbr.rel (%p408) target = $region68
        $region67: #{tpu_custom_call.1} parent=63 // pred_region
          %p411 = scmp.lt.s32.totalorder %s23, 1
          %s412 = scalar_select %p411, %s23, 1
          %s413 = smul.addr %s412, 8
          %s414 = scalar_lea.vmem %s0, %s413
        $region68: #{tpu_custom_call.1} parent=63 // pred_fallthru
          _
        // Predicated region
        $region69: #{tpu_custom_call.1} parent=63 // pred_check
          %p415 = pneg %p69
        $region70: #{tpu_custom_call.1} parent=63 // pred_check_branch
          %417 = sbr.rel (%p415) target = $region72
        $region71: #{tpu_custom_call.1} parent=63 // pred_region
          %p418 = scmp.lt.s32.totalorder %s23, 1
          %s419 = scalar_select %p418, %s23, 1
          %s420 = scalar_lea.vmem %s1, %s419
        $region72: #{tpu_custom_call.1} parent=63 // pred_fallthru
          _
      $region64: #{tpu_custom_call.1} parent=5 // pred_fallthru
        _
      %p421 = scmp.le.s32.totalorder 1, %s23
      %p422 = scmp.lt.s32.totalorder %s23, 3
      %p423 = pnand %p421, %p422
      %p424 = pneg %p423
      // Predicated region
      $region73: #{tpu_custom_call.1} parent=5 // pred_check
        _
      $region74: #{tpu_custom_call.1} parent=5 // pred_check_branch
        %426 = sbr.rel (%p423) target = $region76
      $region75: #{tpu_custom_call.1} parent=5 // pred_region
        %s427 = ssub.s32 %s23, 1
        %p428 = scmp.lt.s32.totalorder %s28, 1
        %s429 = scalar_select %p428, %s28, 1
        %s430 = smul.addr %s429, 8
        %s431 = scalar_lea.vmem %s0, %s430
        %p432 = pneg %p49
        %p433 = pneg %p46
        %p434 = scmp.lt.s32.totalorder %s28, 1
        %s435 = scalar_select %p434, %s28, 1
        %s436 = scalar_lea.vmem %s1, %s435
        %p437 = pneg %p75
        %p438 = pneg %p72
        %p439 = pneg %p96
        %p440 = pneg %p93
        %p441 = pneg %p117
        %p442 = pneg %p114
        %p443 = pneg %p138
        %p444 = pneg %p135
        %p445 = pneg %p159
        %p446 = pneg %p156
        %p447 = pneg %p180
        %p448 = pneg %p177
        %p449 = pneg %p201
        %p450 = pneg %p198
        %p451 = pneg %p222
        %p452 = pneg %p219
        %p453 = pneg %p243
        %p454 = pneg %p240
        %p455 = pneg %p264
        %p456 = pneg %p261
        %p457 = pneg %p285
        %p458 = pneg %p282
        %p459 = pneg %p306
        %p460 = pneg %p303
        %p461 = pneg %p327
        %p462 = pneg %p324
        %p463 = pneg %p353
        %p464 = pneg %p350
        %s465 = sand.u32 %s340, 1
        %s466 = scalar_lea.sflag [#allocation3], %s465
        %s467 = sand.u32 %s340, 1
        %s468 = smul.addr %s467, 8
        %s469 = scalar_lea.vmem [#allocation2], %s468
        %p470 = scmp.lt.s32.totalorder %s28, 1
        %s471 = scalar_select %p470, %s28, 1
        %s472 = smul.addr %s471, 8
        %s473 = scalar_lea.vmem %s0, %s472
        %p474 = scmp.lt.s32.totalorder %s28, 1
        %s475 = scalar_select %p474, %s28, 1
        %s476 = scalar_lea.vmem %s1, %s475
        %v478 = vld [vmem:[%s473] sm:$0xff]
        %v479 = vld [vmem:[%s476] sm:$0x1]
        %vm480 = vcmp.gt.f32.partialorder %v479, 0.0
        %v481 = vsel %vm480, 0.0, -1e+09
        %v482 = vld [vmem:[%s10] sm:$0x1]
        %v483 = vld [vmem:[%s11] sm:$0x1]
        %vm484 = vcmask 261120
        %v485 = vsel %vm484, %v478, 0.0
        %486 = vadd.xlane.f32.xlu0 %v485
        %v487 = vpop.xlane.xlu0 %486
        %v488 = vrcp.pop 32.0
        %v489 = vmul.f32 32.0, %v488
        %v490 = vsub.f32 1.0, %v489
        %v491 = vmul.f32 %v488, %v490
        %v492 = vadd.f32 %v488, %v491
        %vm493 = vweird.f32 %v488
        %v494 = vsel %vm493, %v488, %v492
        %v495 = vmul.f32 %v487, %v494
        %v496 = vsub.f32 %v478, %v495
        %v497 = vmul.f32 %v496, %v496
        %v498 = vsel %vm484, %v497, 0.0
        %499 = vadd.xlane.f32.xlu0 %v498
        %v500 = vpop.xlane.xlu0 %499
        %v501 = vmul.f32 %v500, 0.032258064
        %v502 = vrsqrt.pop %v501
        %v503 = vmul.f32 %v502, %v501
        %v504 = vmul.f32 %v503, %v502
        %v505 = vmul.f32 0.5, %v504
        %v506 = vsub.f32 1.5, %v505
        %v507 = vmul.f32 %v502, %v506
        %v508 = vmul.f32 %v501, %v507
        %vm509 = vcmp.eq.f32.partialorder %v501, inf
        %v510 = vsel %vm509, %v501, %v508
        %vm511 = vcmp.eq.f32.partialorder %v501, 0.0
        %v512 = vand.u32 %v501, 2147483648
        %v513 = vsel %vm511, %v512, %v510
        %v514 = vadd.f32 %v513, 1e-06
        %v515 = vrcp.pop %v514
        %v517 = vperm.slane %v482, 0
        %v519 = vmul.f32 %v517, %v496
        %v520 = vmul.f32 %v519, %v515
        %v522 = vperm.slane %v483, 0
        %v524 = vadd.f32 %v520, %v522
        %v525 = vpack.c.bf16 %v524, %v524
        %v526 = vld [vmem:[%s2] sm:$0xf]
        %v527 = vld [vmem:[%s2 + $0x4] sm:$0xf]
        %v528 = vld [vmem:[%s2 + $0x8] sm:$0xf]
        %v529 = vld [vmem:[%s2 + $0xc] sm:$0xf]
        %v530 = vld [vmem:[%s3] sm:$0x1]
        %v532 = vperm.slane %v530, 0
        %v538 = vunpack.c.l.b16 %v526
        %v539 = vunpack.c.l.b16 %v527
        %v540 = vunpack.c.l.b16 %v528
        %v541 = vunpack.c.l.b16 %v529
        %v542 = vpack.c.b16 %v539, %v538
        %v543 = vpack.c.b16 %v541, %v540
        %v547 = vsel %vm484, %v525, 0
        %549 = vmatpush.bf16.msra.mxu0 0
        %550 = vmatpush.bf16.msra.mxu0 0
        %551 = vmatpush.bf16.msra.mxu0 0
        %552 = vmatpush.bf16.msra.mxu0 0
        %553 = vmatpush.bf16.msra.mxu0 0
        %554 = vmatpush.bf16.msra.mxu0 0
        %555 = vmatpush.bf16.msra.mxu0 %v543
        %556 = vmatpush.bf16.msra.mxu0 %v542
        %557 = vmatmul.bf16.gmra.mxu0 %v547
        %v558 = vpop.f32.mrf.mxu0
        %v559 = vadd.f32 %v532, %v558
        %v560 = vpop.f32.mrf.mxu0
        %561 = vdwg.mxu0
        %563 = vrot.lane.b32.xlu0 %v559, 120
        %v564 = vpop.permute.xlu0 %563
        %566 = vrot.lane.b32.xlu0 %v559, 112
        %v567 = vpop.permute.xlu0 %566
        %569 = vrot.lane.b32.xlu0 %v559, 104
        %v570 = vpop.permute.xlu0 %569
        %572 = vrot.lane.b32.xlu0 %v559, 96
        %v573 = vpop.permute.xlu0 %572
        %575 = vrot.lane.b32.xlu0 %v559, 88
        %v576 = vpop.permute.xlu0 %575
        %578 = vrot.lane.b32.xlu0 %v559, 80
        %v579 = vpop.permute.xlu0 %578
        %581 = vrot.lane.b32.xlu0 %v559, 72
        %v582 = vpop.permute.xlu0 %581
        %584 = vrot.lane.b32.xlu0 %v559, 64
        %v585 = vpop.permute.xlu0 %584
        %587 = vrot.lane.b32.xlu0 %v559, 56
        %v588 = vpop.permute.xlu0 %587
        %590 = vrot.lane.b32.xlu0 %v559, 48
        %v591 = vpop.permute.xlu0 %590
        %593 = vrot.lane.b32.xlu0 %v559, 40
        %v594 = vpop.permute.xlu0 %593
        %v596 = vrot.slane %v567, 4
        %vm597 = vcmask 1047556
        %v598 = vsel %vm597, %v596, %v559
        %v599 = vrot.slane %v559, 4
        %v600 = vsel %vm597, %v567, %v599
        %v602 = vunpack.c.l.s4 1983009808
        %v603 = vunpack.c.0.s8 %v602
        %v604 = vperm.slane %v598, %v603
        %v606 = vunpack.c.l.s4 1983009808
        %v607 = vunpack.c.0.s8 %v606
        %v608 = vperm.slane %v600, %v607
        %v609 = vrot.slane %v570, 4
        %v610 = vsel %vm597, %v609, %v564
        %v611 = vrot.slane %v564, 4
        %v612 = vsel %vm597, %v570, %v611
        %v614 = vunpack.c.l.s4 1983009808
        %v615 = vunpack.c.0.s8 %v614
        %v616 = vperm.slane %v610, %v615
        %v618 = vunpack.c.l.s4 1983009808
        %v619 = vunpack.c.0.s8 %v618
        %v620 = vperm.slane %v612, %v619
        %v621 = vrot.slane %v579, 4
        %v622 = vsel %vm597, %v621, %v573
        %v623 = vrot.slane %v573, 4
        %v624 = vsel %vm597, %v579, %v623
        %v626 = vunpack.c.l.s4 1983009808
        %v627 = vunpack.c.0.s8 %v626
        %v628 = vperm.slane %v622, %v627
        %v630 = vunpack.c.l.s4 1983009808
        %v631 = vunpack.c.0.s8 %v630
        %v632 = vperm.slane %v624, %v631
        %v633 = vrot.slane %v582, 4
        %v634 = vsel %vm597, %v633, %v576
        %v635 = vrot.slane %v576, 4
        %v636 = vsel %vm597, %v582, %v635
        %v638 = vunpack.c.l.s4 1983009808
        %v639 = vunpack.c.0.s8 %v638
        %v640 = vperm.slane %v634, %v639
        %v642 = vunpack.c.l.s4 1983009808
        %v643 = vunpack.c.0.s8 %v642
        %v644 = vperm.slane %v636, %v643
        %v645 = vrot.slane %v616, 4
        %v646 = vsel %vm597, %v645, %v604
        %v647 = vrot.slane %v604, 4
        %v648 = vsel %vm597, %v616, %v647
        %v650 = vunpack.c.l.s4 1934713408
        %v651 = vunpack.c.0.s8 %v650
        %v652 = vperm.slane %v646, %v651
        %v654 = vunpack.c.l.s4 1934713408
        %v655 = vunpack.c.0.s8 %v654
        %v656 = vperm.slane %v648, %v655
        %v657 = vrot.slane %v620, 4
        %v658 = vsel %vm597, %v657, %v608
        %v659 = vrot.slane %v608, 4
        %v660 = vsel %vm597, %v620, %v659
        %v662 = vunpack.c.l.s4 1934713408
        %v663 = vunpack.c.0.s8 %v662
        %v664 = vperm.slane %v658, %v663
        %v666 = vunpack.c.l.s4 1934713408
        %v667 = vunpack.c.0.s8 %v666
        %v668 = vperm.slane %v660, %v667
        %v669 = vrot.slane %v640, 4
        %v670 = vsel %vm597, %v669, %v628
        %v671 = vrot.slane %v628, 4
        %v672 = vsel %vm597, %v640, %v671
        %v674 = vunpack.c.l.s4 1934713408
        %v675 = vunpack.c.0.s8 %v674
        %v676 = vperm.slane %v670, %v675
        %v678 = vunpack.c.l.s4 1934713408
        %v679 = vunpack.c.0.s8 %v678
        %v680 = vperm.slane %v672, %v679
        %v681 = vrot.slane %v644, 4
        %v682 = vsel %vm597, %v681, %v632
        %v683 = vrot.slane %v632, 4
        %v684 = vsel %vm597, %v644, %v683
        %v686 = vunpack.c.l.s4 1934713408
        %v687 = vunpack.c.0.s8 %v686
        %v688 = vperm.slane %v682, %v687
        %v690 = vunpack.c.l.s4 1934713408
        %v691 = vunpack.c.0.s8 %v690
        %v692 = vperm.slane %v684, %v691
        %v693 = vrot.slane %v676, 4
        %v694 = vsel %vm597, %v693, %v652
        %v695 = vrot.slane %v652, 4
        %v696 = vsel %vm597, %v676, %v695
        %v697 = vrot.slane %v680, 4
        %v698 = vsel %vm597, %v697, %v656
        %v699 = vrot.slane %v656, 4
        %v700 = vsel %vm597, %v680, %v699
        %v701 = vrot.slane %v688, 4
        %v702 = vsel %vm597, %v701, %v664
        %v703 = vrot.slane %v664, 4
        %v704 = vsel %vm597, %v688, %v703
        %v705 = vrot.slane %v692, 4
        %v706 = vsel %vm597, %v705, %v668
        %v707 = vrot.slane %v668, 4
        %v708 = vsel %vm597, %v692, %v707
        %v709 = vrot.slane %v591, 4
        %v710 = vsel %vm597, %v709, %v585
        %v711 = vrot.slane %v585, 4
        %v712 = vsel %vm597, %v591, %v711
        %v714 = vunpack.c.l.s4 1983009808
        %v715 = vunpack.c.0.s8 %v714
        %v716 = vperm.slane %v710, %v715
        %v718 = vunpack.c.l.s4 1983009808
        %v719 = vunpack.c.0.s8 %v718
        %v720 = vperm.slane %v712, %v719
        %v721 = vrot.slane %v594, 4
        %v722 = vsel %vm597, %v721, %v588
        %v723 = vrot.slane %v588, 4
        %v724 = vsel %vm597, %v594, %v723
        %v726 = vunpack.c.l.s4 1983009808
        %v727 = vunpack.c.0.s8 %v726
        %v728 = vperm.slane %v722, %v727
        %v730 = vunpack.c.l.s4 1983009808
        %v731 = vunpack.c.0.s8 %v730
        %v732 = vperm.slane %v724, %v731
        %v733 = vrot.slane %v728, 4
        %v734 = vsel %vm597, %v733, %v716
        %v735 = vrot.slane %v716, 4
        %v736 = vsel %vm597, %v728, %v735
        %v738 = vunpack.c.l.s4 1934713408
        %v739 = vunpack.c.0.s8 %v738
        %v740 = vperm.slane %v734, %v739
        %v742 = vunpack.c.l.s4 1934713408
        %v743 = vunpack.c.0.s8 %v742
        %v744 = vperm.slane %v736, %v743
        %v745 = vrot.slane %v732, 4
        %v746 = vsel %vm597, %v745, %v720
        %v747 = vrot.slane %v720, 4
        %v748 = vsel %vm597, %v732, %v747
        %v750 = vunpack.c.l.s4 1934713408
        %v751 = vunpack.c.0.s8 %v750
        %v752 = vperm.slane %v746, %v751
        %v754 = vunpack.c.l.s4 1934713408
        %v755 = vunpack.c.0.s8 %v754
        %v756 = vperm.slane %v748, %v755
        %v757 = vrot.slane %v740, 4
        %v758 = vsel %vm597, 0.0, %v757
        %v759 = vrot.slane %v744, 4
        %v760 = vsel %vm597, 0.0, %v759
        %v761 = vrot.slane %v752, 4
        %v762 = vsel %vm597, 0.0, %v761
        %v763 = vrot.slane %v756, 4
        %v764 = vsel %vm597, 0.0, %v763
        %v765 = vrot.slane %v698, 4
        %v766 = vsel %vm597, %v765, %v694
        %v767 = vrot.slane %v694, 4
        %v768 = vsel %vm597, %v698, %v767
        %v770 = vunpack.c.l.s4 1983009808
        %v771 = vunpack.c.0.s8 %v770
        %v772 = vperm.slane %v766, %v771
        %v774 = vunpack.c.l.s4 1983009808
        %v775 = vunpack.c.0.s8 %v774
        %v776 = vperm.slane %v768, %v775
        %v777 = vrot.slane %v700, 4
        %v778 = vsel %vm597, %v777, %v696
        %v779 = vrot.slane %v696, 4
        %v780 = vsel %vm597, %v700, %v779
        %v782 = vunpack.c.l.s4 1983009808
        %v783 = vunpack.c.0.s8 %v782
        %v784 = vperm.slane %v778, %v783
        %v786 = vunpack.c.l.s4 1983009808
        %v787 = vunpack.c.0.s8 %v786
        %v788 = vperm.slane %v780, %v787
        %v789 = vrot.slane %v706, 4
        %v790 = vsel %vm597, %v789, %v702
        %v791 = vrot.slane %v702, 4
        %v792 = vsel %vm597, %v706, %v791
        %v794 = vunpack.c.l.s4 1983009808
        %v795 = vunpack.c.0.s8 %v794
        %v796 = vperm.slane %v790, %v795
        %v798 = vunpack.c.l.s4 1983009808
        %v799 = vunpack.c.0.s8 %v798
        %v800 = vperm.slane %v792, %v799
        %v801 = vrot.slane %v708, 4
        %v802 = vsel %vm597, %v801, %v704
        %v803 = vrot.slane %v704, 4
        %v804 = vsel %vm597, %v708, %v803
        %v806 = vunpack.c.l.s4 1983009808
        %v807 = vunpack.c.0.s8 %v806
        %v808 = vperm.slane %v802, %v807
        %v810 = vunpack.c.l.s4 1983009808
        %v811 = vunpack.c.0.s8 %v810
        %v812 = vperm.slane %v804, %v811
        %v813 = vrot.slane %v784, 4
        %v814 = vsel %vm597, %v813, %v772
        %v815 = vrot.slane %v772, 4
        %v816 = vsel %vm597, %v784, %v815
        %v818 = vunpack.c.l.s4 1934713408
        %v819 = vunpack.c.0.s8 %v818
        %v820 = vperm.slane %v814, %v819
        %v822 = vunpack.c.l.s4 1934713408
        %v823 = vunpack.c.0.s8 %v822
        %v824 = vperm.slane %v816, %v823
        %v825 = vrot.slane %v788, 4
        %v826 = vsel %vm597, %v825, %v776
        %v827 = vrot.slane %v776, 4
        %v828 = vsel %vm597, %v788, %v827
        %v830 = vunpack.c.l.s4 1934713408
        %v831 = vunpack.c.0.s8 %v830
        %v832 = vperm.slane %v826, %v831
        %v834 = vunpack.c.l.s4 1934713408
        %v835 = vunpack.c.0.s8 %v834
        %v836 = vperm.slane %v828, %v835
        %v837 = vrot.slane %v808, 4
        %v838 = vsel %vm597, %v837, %v796
        %v839 = vrot.slane %v796, 4
        %v840 = vsel %vm597, %v808, %v839
        %v842 = vunpack.c.l.s4 1934713408
        %v843 = vunpack.c.0.s8 %v842
        %v844 = vperm.slane %v838, %v843
        %v846 = vunpack.c.l.s4 1934713408
        %v847 = vunpack.c.0.s8 %v846
        %v848 = vperm.slane %v840, %v847
        %v849 = vrot.slane %v812, 4
        %v850 = vsel %vm597, %v849, %v800
        %v851 = vrot.slane %v800, 4
        %v852 = vsel %vm597, %v812, %v851
        %v854 = vunpack.c.l.s4 1934713408
        %v855 = vunpack.c.0.s8 %v854
        %v856 = vperm.slane %v850, %v855
        %v858 = vunpack.c.l.s4 1934713408
        %v859 = vunpack.c.0.s8 %v858
        %v860 = vperm.slane %v852, %v859
        %v861 = vrot.slane %v844, 4
        %v862 = vsel %vm597, %v861, %v820
        %v863 = vrot.slane %v820, 4
        %v864 = vsel %vm597, %v844, %v863
        %v865 = vrot.slane %v848, 4
        %v866 = vsel %vm597, %v865, %v824
        %v867 = vrot.slane %v824, 4
        %v868 = vsel %vm597, %v848, %v867
        %v869 = vrot.slane %v856, 4
        %v870 = vsel %vm597, %v869, %v832
        %v871 = vrot.slane %v832, 4
        %v872 = vsel %vm597, %v856, %v871
        %v873 = vrot.slane %v860, 4
        %v874 = vsel %vm597, %v873, %v836
        %v875 = vrot.slane %v836, 4
        %v876 = vsel %vm597, %v860, %v875
        %v877 = vsel %vm597, %v759, %v740
        %v879 = vunpack.c.l.s4 1983009808
        %v880 = vunpack.c.0.s8 %v879
        %v881 = vperm.slane %v877, %v880
        %v882 = vrot.slane %v760, 4
        %v883 = vsel %vm597, %v882, %v758
        %v885 = vunpack.c.l.s4 1983009808
        %v886 = vunpack.c.0.s8 %v885
        %v887 = vperm.slane %v883, %v886
        %v888 = vsel %vm597, %v763, %v752
        %v890 = vunpack.c.l.s4 1983009808
        %v891 = vunpack.c.0.s8 %v890
        %v892 = vperm.slane %v888, %v891
        %v893 = vrot.slane %v764, 4
        %v894 = vsel %vm597, %v893, %v762
        %v896 = vunpack.c.l.s4 1983009808
        %v897 = vunpack.c.0.s8 %v896
        %v898 = vperm.slane %v894, %v897
        %v899 = vrot.slane %v887, 4
        %v900 = vsel %vm597, %v899, %v881
        %v901 = vrot.slane %v881, 4
        %v902 = vsel %vm597, %v887, %v901
        %v904 = vunpack.c.l.s4 1934713408
        %v905 = vunpack.c.0.s8 %v904
        %v906 = vperm.slane %v900, %v905
        %v908 = vunpack.c.l.s4 1934713408
        %v909 = vunpack.c.0.s8 %v908
        %v910 = vperm.slane %v902, %v909
        %v911 = vrot.slane %v898, 4
        %v912 = vsel %vm597, %v911, %v892
        %v913 = vrot.slane %v892, 4
        %v914 = vsel %vm597, %v898, %v913
        %v916 = vunpack.c.l.s4 1934713408
        %v917 = vunpack.c.0.s8 %v916
        %v918 = vperm.slane %v912, %v917
        %v920 = vunpack.c.l.s4 1934713408
        %v921 = vunpack.c.0.s8 %v920
        %v922 = vperm.slane %v914, %v921
        %v923 = vrot.slane %v918, 4
        %v924 = vsel %vm597, %v923, %v906
        %v925 = vrot.slane %v906, 4
        %v926 = vsel %vm597, %v918, %v925
        %v927 = vrot.slane %v922, 4
        %v928 = vsel %vm597, %v927, %v910
        %v929 = vrot.slane %v910, 4
        %v930 = vsel %vm597, %v922, %v929
        %v931 = vmul.f32 %v862, 0.35355338
        %v932 = vmul.f32 %v864, 0.35355338
        %v933 = vmul.f32 %v866, 0.35355338
        %v934 = vmul.f32 %v868, 0.35355338
        %v935 = vpack.c.bf16 %v931, %v931
        %v936 = vpack.c.bf16 %v932, %v932
        %v937 = vpack.c.bf16 %v933, %v933
        %v938 = vpack.c.bf16 %v934, %v934
        %v939 = vpack.c.bf16 %v870, %v870
        %v940 = vpack.c.bf16 %v872, %v872
        %v941 = vpack.c.bf16 %v874, %v874
        %v942 = vpack.c.bf16 %v876, %v876
        %v943 = vpack.c.bf16 %v924, %v924
        %v944 = vpack.c.bf16 %v926, %v926
        %v945 = vpack.c.bf16 %v928, %v928
        %v946 = vpack.c.bf16 %v930, %v930
        %v948 = vperm.slane %v481, 0
        %vm950 = vcmask 64512
        %v952 = vsel %vm950, %v935, 0
        %v955 = vsel %vm950, %v939, 0
        %957 = vmatpush.bf16.xpose.msra.mxu0 0
        %958 = vmatpush.bf16.xpose.msra.mxu0 0
        %959 = vmatpush.bf16.xpose.msra.mxu0 0
        %960 = vmatpush.bf16.xpose.msra.mxu0 0
        %961 = vmatpush.bf16.xpose.msra.mxu0 0
        %962 = vmatpush.bf16.xpose.msra.mxu0 0
        %963 = vmatpush.bf16.xpose.msra.mxu0 0
        %964 = vmatpush.bf16.xpose.msra.mxu0 %v955
        %965 = vmatmul.bf16.gmra.mxu0 %v952
        %v966 = vpop.f32.mrf.mxu0
        %v967 = vadd.f32 %v948, %v966
        %v968 = vpop.f32.mrf.mxu0
        %969 = vdwg.mxu0
        %v971 = vsel %vm950, %v936, 0
        %v974 = vsel %vm950, %v940, 0
        %976 = vmatpush.bf16.xpose.msra.mxu0 0
        %977 = vmatpush.bf16.xpose.msra.mxu0 0
        %978 = vmatpush.bf16.xpose.msra.mxu0 0
        %979 = vmatpush.bf16.xpose.msra.mxu0 0
        %980 = vmatpush.bf16.xpose.msra.mxu0 0
        %981 = vmatpush.bf16.xpose.msra.mxu0 0
        %982 = vmatpush.bf16.xpose.msra.mxu0 0
        %983 = vmatpush.bf16.xpose.msra.mxu0 %v974
        %984 = vmatmul.bf16.gmra.mxu0 %v971
        %v985 = vpop.f32.mrf.mxu0
        %v986 = vadd.f32 %v948, %v985
        %v987 = vpop.f32.mrf.mxu0
        %988 = vdwg.mxu0
        %v990 = vsel %vm950, %v937, 0
        %v993 = vsel %vm950, %v941, 0
        %995 = vmatpush.bf16.xpose.msra.mxu0 0
        %996 = vmatpush.bf16.xpose.msra.mxu0 0
        %997 = vmatpush.bf16.xpose.msra.mxu0 0
        %998 = vmatpush.bf16.xpose.msra.mxu0 0
        %999 = vmatpush.bf16.xpose.msra.mxu0 0
        %1000 = vmatpush.bf16.xpose.msra.mxu0 0
        %1001 = vmatpush.bf16.xpose.msra.mxu0 0
        %1002 = vmatpush.bf16.xpose.msra.mxu0 %v993
        %1003 = vmatmul.bf16.gmra.mxu0 %v990
        %v1004 = vpop.f32.mrf.mxu0
        %v1005 = vadd.f32 %v948, %v1004
        %v1006 = vpop.f32.mrf.mxu0
        %1007 = vdwg.mxu0
        %v1009 = vsel %vm950, %v938, 0
        %v1012 = vsel %vm950, %v942, 0
        %1014 = vmatpush.bf16.xpose.msra.mxu0 0
        %1015 = vmatpush.bf16.xpose.msra.mxu0 0
        %1016 = vmatpush.bf16.xpose.msra.mxu0 0
        %1017 = vmatpush.bf16.xpose.msra.mxu0 0
        %1018 = vmatpush.bf16.xpose.msra.mxu0 0
        %1019 = vmatpush.bf16.xpose.msra.mxu0 0
        %1020 = vmatpush.bf16.xpose.msra.mxu0 0
        %1021 = vmatpush.bf16.xpose.msra.mxu0 %v1012
        %1022 = vmatmul.bf16.gmra.mxu0 %v1009
        %v1023 = vpop.f32.mrf.mxu0
        %v1024 = vadd.f32 %v948, %v1023
        %v1025 = vpop.f32.mrf.mxu0
        %1026 = vdwg.mxu0
        %v1027 = vsel %vm950, %v967, -inf
        %1028 = vmax.xlane.f32.xlu0 %v1027
        %v1029 = vpop.xlane.xlu0 %1028
        %v1030 = vsel %vm950, %v986, -inf
        %1031 = vmax.xlane.f32.xlu0 %v1030
        %v1032 = vpop.xlane.xlu0 %1031
        %v1033 = vsel %vm950, %v1005, -inf
        %1034 = vmax.xlane.f32.xlu0 %v1033
        %v1035 = vpop.xlane.xlu0 %1034
        %v1036 = vsel %vm950, %v1024, -inf
        %1037 = vmax.xlane.f32.xlu0 %v1036
        %v1038 = vpop.xlane.xlu0 %1037
        %v1039 = vsub.f32 %v967, %v1029
        %v1040 = vsub.f32 %v986, %v1032
        %v1041 = vsub.f32 %v1005, %v1035
        %v1042 = vsub.f32 %v1024, %v1038
        %v1043 = vmul.f32 %v1039, 1.442695
        %v1044 = vpow.pop %v1043
        %v1045 = vmul.f32 %v1040, 1.442695
        %v1046 = vpow.pop %v1045
        %v1047 = vmul.f32 %v1041, 1.442695
        %v1048 = vpow.pop %v1047
        %v1049 = vmul.f32 %v1042, 1.442695
        %v1050 = vpow.pop %v1049
        %v1051 = vsel %vm950, %v1044, 0.0
        %1052 = vadd.xlane.f32.xlu0 %v1051
        %v1053 = vpop.xlane.xlu0 %1052
        %v1054 = vsel %vm950, %v1046, 0.0
        %1055 = vadd.xlane.f32.xlu0 %v1054
        %v1056 = vpop.xlane.xlu0 %1055
        %v1057 = vsel %vm950, %v1048, 0.0
        %1058 = vadd.xlane.f32.xlu0 %v1057
        %v1059 = vpop.xlane.xlu0 %1058
        %v1060 = vsel %vm950, %v1050, 0.0
        %1061 = vadd.xlane.f32.xlu0 %v1060
        %v1062 = vpop.xlane.xlu0 %1061
        %v1063 = vpack.c.bf16 %v1044, %v1044
        %v1064 = vpack.c.bf16 %v1046, %v1046
        %v1065 = vpack.c.bf16 %v1048, %v1048
        %v1066 = vpack.c.bf16 %v1050, %v1050
        %v1068 = vsel %vm950, %v1063, 0
        %vm1070 = vcmask 1043456
        %v1072 = vsel %vm1070, %v943, 0
        %1074 = vmatpush.bf16.msra.mxu0 0
        %1075 = vmatpush.bf16.msra.mxu0 0
        %1076 = vmatpush.bf16.msra.mxu0 0
        %1077 = vmatpush.bf16.msra.mxu0 0
        %1078 = vmatpush.bf16.msra.mxu0 0
        %1079 = vmatpush.bf16.msra.mxu0 0
        %1080 = vmatpush.bf16.msra.mxu0 0
        %1081 = vmatpush.bf16.msra.mxu0 %v1072
        %1082 = vmatmul.bf16.gmra.mxu0 %v1068
        %v1083 = vpop.f32.mrf.mxu0
        %v1084 = vadd.f32 0.0, %v1083
        %v1085 = vpop.f32.mrf.mxu0
        %1086 = vdwg.mxu0
        %v1088 = vsel %vm950, %v1064, 0
        %v1091 = vsel %vm1070, %v944, 0
        %1093 = vmatpush.bf16.msra.mxu0 0
        %1094 = vmatpush.bf16.msra.mxu0 0
        %1095 = vmatpush.bf16.msra.mxu0 0
        %1096 = vmatpush.bf16.msra.mxu0 0
        %1097 = vmatpush.bf16.msra.mxu0 0
        %1098 = vmatpush.bf16.msra.mxu0 0
        %1099 = vmatpush.bf16.msra.mxu0 0
        %1100 = vmatpush.bf16.msra.mxu0 %v1091
        %1101 = vmatmul.bf16.gmra.mxu0 %v1088
        %v1102 = vpop.f32.mrf.mxu0
        %v1103 = vadd.f32 0.0, %v1102
        %v1104 = vpop.f32.mrf.mxu0
        %1105 = vdwg.mxu0
        %v1107 = vsel %vm950, %v1065, 0
        %v1110 = vsel %vm1070, %v945, 0
        %1112 = vmatpush.bf16.msra.mxu0 0
        %1113 = vmatpush.bf16.msra.mxu0 0
        %1114 = vmatpush.bf16.msra.mxu0 0
        %1115 = vmatpush.bf16.msra.mxu0 0
        %1116 = vmatpush.bf16.msra.mxu0 0
        %1117 = vmatpush.bf16.msra.mxu0 0
        %1118 = vmatpush.bf16.msra.mxu0 0
        %1119 = vmatpush.bf16.msra.mxu0 %v1110
        %1120 = vmatmul.bf16.gmra.mxu0 %v1107
        %v1121 = vpop.f32.mrf.mxu0
        %v1122 = vadd.f32 0.0, %v1121
        %v1123 = vpop.f32.mrf.mxu0
        %1124 = vdwg.mxu0
        %v1126 = vsel %vm950, %v1066, 0
        %v1129 = vsel %vm1070, %v946, 0
        %1131 = vmatpush.bf16.msra.mxu0 0
        %1132 = vmatpush.bf16.msra.mxu0 0
        %1133 = vmatpush.bf16.msra.mxu0 0
        %1134 = vmatpush.bf16.msra.mxu0 0
        %1135 = vmatpush.bf16.msra.mxu0 0
        %1136 = vmatpush.bf16.msra.mxu0 0
        %1137 = vmatpush.bf16.msra.mxu0 0
        %1138 = vmatpush.bf16.msra.mxu0 %v1129
        %1139 = vmatmul.bf16.gmra.mxu0 %v1126
        %v1140 = vpop.f32.mrf.mxu0
        %v1141 = vadd.f32 0.0, %v1140
        %v1142 = vpop.f32.mrf.mxu0
        %1143 = vdwg.mxu0
        %v1144 = vrcp.pop %v1053
        %v1145 = vrcp.pop %v1056
        %v1146 = vrcp.pop %v1059
        %v1147 = vrcp.pop %v1062
        %v1148 = vmul.f32 %v1084, %v1144
        %v1149 = vmul.f32 %v1103, %v1145
        %v1150 = vmul.f32 %v1122, %v1146
        %v1151 = vmul.f32 %v1141, %v1147
        %v1152 = vpack.c.bf16 %v1148, %v1148
        %v1153 = vpack.c.bf16 %v1149, %v1149
        %v1154 = vpack.c.bf16 %v1150, %v1150
        %v1155 = vpack.c.bf16 %v1151, %v1151
        %v1158 = vpack.i.b16 %v1153, %v1152
        %v1159 = vshrl.u32 %v1152, 16
        %v1160 = vshrl.u32 %v1153, 16
        %v1161 = vpack.i.b16 %v1160, %v1159
        %v1164 = vpack.i.b16 %v1155, %v1154
        %v1165 = vshrl.u32 %v1154, 16
        %v1166 = vshrl.u32 %v1155, 16
        %v1167 = vpack.i.b16 %v1166, %v1165
        %v1170 = vunpack.c.l.s4 1983009808
        %v1171 = vunpack.c.0.s8 %v1170
        %v1172 = vperm.slane %v1158, %v1171
        %v1175 = vunpack.c.l.s4 1983009808
        %v1176 = vunpack.c.0.s8 %v1175
        %v1177 = vperm.slane %v1164, %v1176
        %v1178 = vrot.slane %v1177, 4
        %vm1179 = vcmask 1047556
        %v1180 = vsel %vm1179, %v1178, %v1172
        %v1181 = vrot.slane %v1172, 4
        %v1182 = vsel %vm1179, %v1177, %v1181
        %v1184 = vunpack.c.l.s4 1934713408
        %v1185 = vunpack.c.0.s8 %v1184
        %v1186 = vperm.slane %v1180, %v1185
        %v1188 = vunpack.c.l.s4 1934713408
        %v1189 = vunpack.c.0.s8 %v1188
        %v1190 = vperm.slane %v1182, %v1189
        %v1191 = vrot.slane %v1186, 4
        %v1192 = vsel %vm1179, 0, %v1191
        %v1193 = vrot.slane %v1190, 4
        %v1194 = vsel %vm1179, 0, %v1193
        %v1197 = vunpack.c.l.s4 1983009808
        %v1198 = vunpack.c.0.s8 %v1197
        %v1199 = vperm.slane %v1161, %v1198
        %v1202 = vunpack.c.l.s4 1983009808
        %v1203 = vunpack.c.0.s8 %v1202
        %v1204 = vperm.slane %v1167, %v1203
        %v1205 = vrot.slane %v1204, 4
        %v1206 = vsel %vm1179, %v1205, %v1199
        %v1207 = vrot.slane %v1199, 4
        %v1208 = vsel %vm1179, %v1204, %v1207
        %v1210 = vunpack.c.l.s4 1934713408
        %v1211 = vunpack.c.0.s8 %v1210
        %v1212 = vperm.slane %v1206, %v1211
        %v1214 = vunpack.c.l.s4 1934713408
        %v1215 = vunpack.c.0.s8 %v1214
        %v1216 = vperm.slane %v1208, %v1215
        %v1217 = vrot.slane %v1212, 4
        %v1218 = vsel %vm1179, 0, %v1217
        %v1219 = vrot.slane %v1216, 4
        %v1220 = vsel %vm1179, 0, %v1219
        %v1221 = vsel %vm1179, %v1193, %v1186
        %v1223 = vunpack.c.l.s4 1983009808
        %v1224 = vunpack.c.0.s8 %v1223
        %v1225 = vperm.slane %v1221, %v1224
        %v1226 = vrot.slane %v1194, 4
        %v1227 = vsel %vm1179, %v1226, %v1192
        %v1229 = vunpack.c.l.s4 1983009808
        %v1230 = vunpack.c.0.s8 %v1229
        %v1231 = vperm.slane %v1227, %v1230
        %v1232 = vrot.slane %v1231, 4
        %v1233 = vsel %vm1179, %v1232, %v1225
        %v1235 = vunpack.c.l.s4 1934713408
        %v1236 = vunpack.c.0.s8 %v1235
        %v1237 = vperm.slane %v1233, %v1236
        %v1238 = vrot.slane %v1237, 4
        %v1239 = vsel %vm1179, 0, %v1238
        %v1240 = vsel %vm1179, %v1219, %v1212
        %v1242 = vunpack.c.l.s4 1983009808
        %v1243 = vunpack.c.0.s8 %v1242
        %v1244 = vperm.slane %v1240, %v1243
        %v1245 = vrot.slane %v1220, 4
        %v1246 = vsel %vm1179, %v1245, %v1218
        %v1248 = vunpack.c.l.s4 1983009808
        %v1249 = vunpack.c.0.s8 %v1248
        %v1250 = vperm.slane %v1246, %v1249
        %v1251 = vrot.slane %v1250, 4
        %v1252 = vsel %vm1179, %v1251, %v1244
        %v1254 = vunpack.c.l.s4 1934713408
        %v1255 = vunpack.c.0.s8 %v1254
        %v1256 = vperm.slane %v1252, %v1255
        %v1257 = vrot.slane %v1256, 4
        %v1258 = vsel %vm1179, 0, %v1257
        %v1261 = vpack.i.b16 %v1256, %v1237
        %v1262 = vshrl.u32 %v1237, 16
        %v1263 = vshrl.u32 %v1256, 16
        %v1264 = vpack.i.b16 %v1263, %v1262
        %v1267 = vpack.i.b16 %v1258, %v1239
        %v1268 = vshrl.u32 %v1239, 16
        %v1269 = vshrl.u32 %v1258, 16
        %v1270 = vpack.i.b16 %v1269, %v1268
        %v1271 = vunpack.c.l.b16 %v1264
        %v1272 = vpack.c.b16 %v1271, %v1271
        %1273 = vrot.lane.b32.xlu0 %v1272, 8
        %v1274 = vpop.permute.xlu0 %1273
        %v1275 = vunpack.c.l.b16 %v1267
        %v1276 = vpack.c.b16 %v1275, %v1275
        %1277 = vrot.lane.b32.xlu0 %v1276, 16
        %v1278 = vpop.permute.xlu0 %1277
        %v1279 = vunpack.c.l.b16 %v1270
        %v1280 = vpack.c.b16 %v1279, %v1279
        %1281 = vrot.lane.b32.xlu0 %v1280, 24
        %v1282 = vpop.permute.xlu0 %1281
        %v1285 = vsel %vm950, %v1261, %v1274
        %vm1286 = vcmask 130048
        %v1288 = vsel %vm1286, %v1285, %v1278
        %vm1289 = vcmask 195584
        %v1291 = vsel %vm1289, %v1288, %v1282
        %v1292 = vld [vmem:[%s4] sm:$0xf]
        %v1293 = vld [vmem:[%s4 + $0x4] sm:$0xf]
        %v1294 = vld [vmem:[%s4 + $0x8] sm:$0xf]
        %v1295 = vld [vmem:[%s4 + $0xc] sm:$0xf]
        %v1296 = vld [vmem:[%s5] sm:$0x1]
        %v1298 = vperm.slane %v1296, 0
        %v1304 = vunpack.c.l.b16 %v1292
        %v1305 = vunpack.c.l.b16 %v1293
        %v1306 = vunpack.c.l.b16 %v1294
        %v1307 = vunpack.c.l.b16 %v1295
        %v1308 = vpack.c.b16 %v1305, %v1304
        %v1309 = vpack.c.b16 %v1307, %v1306
        %v1312 = vsel %vm484, %v1291, 0
        %1314 = vmatpush.bf16.msra.mxu0 0
        %1315 = vmatpush.bf16.msra.mxu0 0
        %1316 = vmatpush.bf16.msra.mxu0 0
        %1317 = vmatpush.bf16.msra.mxu0 0
        %1318 = vmatpush.bf16.msra.mxu0 0
        %1319 = vmatpush.bf16.msra.mxu0 0
        %1320 = vmatpush.bf16.msra.mxu0 %v1309
        %1321 = vmatpush.bf16.msra.mxu0 %v1308
        %1322 = vmatmul.bf16.gmra.mxu0 %v1312
        %v1323 = vpop.f32.mrf.mxu0
        %v1324 = vadd.f32 %v1298, %v1323
        %v1325 = vpop.f32.mrf.mxu0
        %1326 = vdwg.mxu0
        %v1327 = vadd.f32 %v478, %v1324
        %v1328 = vld [vmem:[%s12] sm:$0x1]
        %v1329 = vld [vmem:[%s13] sm:$0x1]
        %v1330 = vsel %vm484, %v1327, 0.0
        %1331 = vadd.xlane.f32.xlu0 %v1330
        %v1332 = vpop.xlane.xlu0 %1331
        %v1333 = vmul.f32 %v1332, %v494
        %v1334 = vsub.f32 %v1327, %v1333
        %v1335 = vmul.f32 %v1334, %v1334
        %v1336 = vsel %vm484, %v1335, 0.0
        %1337 = vadd.xlane.f32.xlu0 %v1336
        %v1338 = vpop.xlane.xlu0 %1337
        %v1339 = vmul.f32 %v1338, 0.032258064
        %v1340 = vrsqrt.pop %v1339
        %v1341 = vmul.f32 %v1340, %v1339
        %v1342 = vmul.f32 %v1341, %v1340
        %v1343 = vmul.f32 0.5, %v1342
        %v1344 = vsub.f32 1.5, %v1343
        %v1345 = vmul.f32 %v1340, %v1344
        %v1346 = vmul.f32 %v1339, %v1345
        %vm1347 = vcmp.eq.f32.partialorder %v1339, inf
        %v1348 = vsel %vm1347, %v1339, %v1346
        %vm1349 = vcmp.eq.f32.partialorder %v1339, 0.0
        %v1350 = vand.u32 %v1339, 2147483648
        %v1351 = vsel %vm1349, %v1350, %v1348
        %v1352 = vadd.f32 %v1351, 1e-06
        %v1353 = vrcp.pop %v1352
        %v1355 = vperm.slane %v1328, 0
        %v1357 = vmul.f32 %v1355, %v1334
        %v1358 = vmul.f32 %v1357, %v1353
        %v1360 = vperm.slane %v1329, 0
        %v1362 = vadd.f32 %v1358, %v1360
        %v1363 = vpack.c.bf16 %v1362, %v1362
        %v1364 = vld [vmem:[%s6] sm:$0xf]
        %v1365 = vld [vmem:[%s6 + $0x4] sm:$0xf]
        %v1366 = vld [vmem:[%s6 + $0x8] sm:$0xf]
        %v1367 = vld [vmem:[%s6 + $0xc] sm:$0xf]
        %v1368 = vld [vmem:[%s7] sm:$0x1]
        %v1370 = vperm.slane %v1368, 0
        %v1376 = vunpack.c.l.b16 %v1364
        %v1377 = vunpack.c.l.b16 %v1365
        %v1378 = vunpack.c.l.b16 %v1366
        %v1379 = vunpack.c.l.b16 %v1367
        %v1380 = vpack.c.b16 %v1377, %v1376
        %v1381 = vpack.c.b16 %v1379, %v1378
        %v1385 = vsel %vm484, %v1363, 0
        %1387 = vmatpush.bf16.msra.mxu0 0
        %1388 = vmatpush.bf16.msra.mxu0 0
        %1389 = vmatpush.bf16.msra.mxu0 0
        %1390 = vmatpush.bf16.msra.mxu0 0
        %1391 = vmatpush.bf16.msra.mxu0 0
        %1392 = vmatpush.bf16.msra.mxu0 0
        %1393 = vmatpush.bf16.msra.mxu0 %v1381
        %1394 = vmatpush.bf16.msra.mxu0 %v1380
        %1395 = vmatmul.bf16.gmra.mxu0 %v1385
        %v1396 = vpop.f32.mrf.mxu0
        %v1397 = vadd.f32 %v1370, %v1396
        %v1398 = vpop.f32.mrf.mxu0
        %1399 = vdwg.mxu0
        %v1400 = vmul.f32 %v1397, 0.5
        %v1401 = vmul.f32 %v1397, %v1397
        %v1402 = vmul.f32 %v1397, %v1401
        %v1403 = vmul.f32 %v1402, 0.044715
        %v1404 = vadd.f32 %v1397, %v1403
        %v1405 = vmul.f32 %v1404, 0.7978846
        %v1406 = vtanh.pop %v1405
        %v1407 = vadd.f32 %v1406, 1.0
        %v1408 = vmul.f32 %v1400, %v1407
        %v1409 = vpack.c.bf16 %v1408, %v1408
        %v1410 = vld [vmem:[%s8] sm:$0xf]
        %v1411 = vld [vmem:[%s8 + $0x4] sm:$0xf]
        %v1412 = vld [vmem:[%s8 + $0x8] sm:$0xf]
        %v1413 = vld [vmem:[%s8 + $0xc] sm:$0xf]
        %v1414 = vld [vmem:[%s8 + $0x10] sm:$0xf]
        %v1415 = vld [vmem:[%s8 + $0x14] sm:$0xf]
        %v1416 = vld [vmem:[%s8 + $0x18] sm:$0xf]
        %v1417 = vld [vmem:[%s8 + $0x1c] sm:$0xf]
        %v1418 = vld [vmem:[%s8 + $0x20] sm:$0xf]
        %v1419 = vld [vmem:[%s8 + $0x24] sm:$0xf]
        %v1420 = vld [vmem:[%s8 + $0x28] sm:$0xf]
        %v1421 = vld [vmem:[%s8 + $0x2c] sm:$0xf]
        %v1422 = vld [vmem:[%s8 + $0x30] sm:$0xf]
        %v1423 = vld [vmem:[%s8 + $0x34] sm:$0xf]
        %v1424 = vld [vmem:[%s8 + $0x38] sm:$0xf]
        %v1425 = vld [vmem:[%s8 + $0x3c] sm:$0xf]
        %v1426 = vld [vmem:[%s9] sm:$0x1]
        %v1428 = vperm.slane %v1426, 0
        %v1446 = vunpack.c.l.b16 %v1410
        %v1447 = vunpack.c.l.b16 %v1411
        %v1448 = vunpack.c.l.b16 %v1412
        %v1449 = vunpack.c.l.b16 %v1413
        %v1450 = vunpack.c.l.b16 %v1414
        %v1451 = vunpack.c.l.b16 %v1415
        %v1452 = vunpack.c.l.b16 %v1416
        %v1453 = vunpack.c.l.b16 %v1417
        %v1454 = vunpack.c.l.b16 %v1418
        %v1455 = vunpack.c.l.b16 %v1419
        %v1456 = vunpack.c.l.b16 %v1420
        %v1457 = vunpack.c.l.b16 %v1421
        %v1458 = vunpack.c.l.b16 %v1422
        %v1459 = vunpack.c.l.b16 %v1423
        %v1460 = vunpack.c.l.b16 %v1424
        %v1461 = vunpack.c.l.b16 %v1425
        %v1462 = vpack.c.b16 %v1447, %v1446
        %v1463 = vpack.c.b16 %v1449, %v1448
        %v1464 = vpack.c.b16 %v1451, %v1450
        %v1465 = vpack.c.b16 %v1453, %v1452
        %v1466 = vpack.c.b16 %v1455, %v1454
        %v1467 = vpack.c.b16 %v1457, %v1456
        %v1468 = vpack.c.b16 %v1459, %v1458
        %v1469 = vpack.c.b16 %v1461, %v1460
        %1478 = vmatpush.bf16.msra.mxu0 %v1469
        %1479 = vmatpush.bf16.msra.mxu0 %v1468
        %1480 = vmatpush.bf16.msra.mxu0 %v1467
        %1481 = vmatpush.bf16.msra.mxu0 %v1466
        %1482 = vmatpush.bf16.msra.mxu0 %v1465
        %1483 = vmatpush.bf16.msra.mxu0 %v1464
        %1484 = vmatpush.bf16.msra.mxu0 %v1463
        %1485 = vmatpush.bf16.msra.mxu0 %v1462
        %1486 = vmatmul.bf16.gmra.mxu0 %v1409
        %v1487 = vpop.f32.mrf.mxu0
        %v1488 = vadd.f32 %v1428, %v1487
        %v1489 = vpop.f32.mrf.mxu0
        %1490 = vdwg.mxu0
        %v1491 = vadd.f32 %v1327, %v1488
        %1492 = vst.msk [vmem:[%s469] sm:$0xff] %vm484, %v1491
        %s1493 = sand.u32 %s340, 1
        %s1494 = scalar_lea.sflag [#allocation3], %s1493
        %s1495 = sand.u32 %s340, 1
        %s1496 = smul.addr %s1495, 8
        %s1497 = scalar_lea.vmem [#allocation2], %s1496
        // Predicated region
        $region77: #{tpu_custom_call.1} parent=75 // pred_check
          %p1498 = pneg %p350
        $region78: #{tpu_custom_call.1} parent=75 // pred_check_branch
          %1500 = sbr.rel (%p1498) target = $region80
        $region79: #{tpu_custom_call.1} parent=75 // pred_region
          %1502 = vsyncadd %s1494, 0
          %s1503 = smul.addr %s28, 8
          %s1504 = scalar_lea.hbm %s14, %s1503
          %s1506 = sshll.u32 %s1497, 4
          %s1507 = int_to_ptr.vmem [resolvable:$true] %s1506
          %s1508 = sshll.u32 %s1504, 4
          %s1509 = int_to_ptr.hbm [resolvable:$true] %s1508
          %1511 = dma.vmem_to_hbm [thread:$0]  %s1507, 128, %s1509, %s1494
        $region80: #{tpu_custom_call.1} parent=75 // pred_fallthru
          _
      $region76: #{tpu_custom_call.1} parent=5 // pred_fallthru
        _
      %p1512 = scmp.le.s32.totalorder 2, %s23
      // Predicated region
      $region81: #{tpu_custom_call.1} parent=5 // pred_check
        %p1513 = pneg %p1512
      $region82: #{tpu_custom_call.1} parent=5 // pred_check_branch
        %1515 = sbr.rel (%p1513) target = $region84
      $region83: #{tpu_custom_call.1} parent=5 // pred_region
        %s1516 = ssub.s32 %s23, 2
        // Predicated region
        $region85: #{tpu_custom_call.1} parent=83 // pred_check
          %p1517 = pneg %p356
        $region86: #{tpu_custom_call.1} parent=83 // pred_check_branch
          %1519 = sbr.rel (%p1517) target = $region88
        $region87: #{tpu_custom_call.1} parent=83 // pred_region
          %s1520 = sand.u32 %s341, 1
          %s1521 = scalar_lea.sflag [#allocation3], %s1520
          %s1522 = sand.u32 %s341, 1
          %s1523 = smul.addr %s1522, 8
          %s1524 = scalar_lea.vmem [#allocation2], %s1523
          %1526 = dma.done %s1521, 128
        $region88: #{tpu_custom_call.1} parent=83 // pred_fallthru
          _
      $region84: #{tpu_custom_call.1} parent=5 // pred_fallthru
        _
    $region6: #{tpu_custom_call.1} parent=1 // loop_footer
      %s27 = sadd.s32 1, %s23
    $region7: #{tpu_custom_call.1} parent=1 // loop_footer_branch
      %22 = sbr.rel target = $region3
    $region8: #{tpu_custom_call.1} parent=1 // loop_exit
      _
    %1527 = vsyncpa [#allocation3], 1
    %s1528 = scalar_lea.sflag [#allocation3], 1
    %1529 = vsyncpa %s1528, 1

// kernel: tpu_custom_call.1
$region0: #{tpu_custom_call.1}
  #allocation0 [shape = 'u32[]', space=smem, size = 0x4, offset = 0x4, fixed_abs, tag = 'smem constant byte address 0x4 - core index']
  #allocation1 [shape = 'u32[72,128]{1,0:T(1,128)}', space=vmem, size = 0x9000, scoped, tag = 'internal scratch']
  %s0 = inlined_call_operand.vmem [shape: f32[2,8,32], index: 0, kind: input, shape index: {}]
  %s1 = inlined_call_operand.vmem [shape: f32[2,1,8], index: 1, kind: input, shape index: {}]
  %s2 = inlined_call_operand.vmem [shape: bf16[32,96], index: 2, kind: input, shape index: {}]
  %s3 = inlined_call_operand.vmem [shape: f32[1,96], index: 3, kind: input, shape index: {}]
  %s4 = inlined_call_operand.vmem [shape: bf16[32,32], index: 4, kind: input, shape index: {}]
  %s5 = inlined_call_operand.vmem [shape: f32[1,32], index: 5, kind: input, shape index: {}]
  %s6 = inlined_call_operand.vmem [shape: bf16[32,128], index: 6, kind: input, shape index: {}]
  %s7 = inlined_call_operand.vmem [shape: f32[1,128], index: 7, kind: input, shape index: {}]
  %s8 = inlined_call_operand.vmem [shape: bf16[128,32], index: 8, kind: input, shape index: {}]
  %s9 = inlined_call_operand.vmem [shape: f32[1,32], index: 9, kind: input, shape index: {}]
  %s10 = inlined_call_operand.vmem [shape: f32[1,32], index: 10, kind: input, shape index: {}]
  %s11 = inlined_call_operand.vmem [shape: f32[1,32], index: 11, kind: input, shape index: {}]
  %s12 = inlined_call_operand.vmem [shape: f32[1,32], index: 12, kind: input, shape index: {}]
  %s13 = inlined_call_operand.vmem [shape: f32[1,32], index: 13, kind: input, shape index: {}]
  %s14 = inlined_call_operand.hbm [shape: f32[2,8,32], index: 14, kind: output, shape index: {}]
  %s15 = sld [smem:[#allocation0]]
  $region89: #{tpu_custom_call.1} parent=0
    _
  %s17 = ssub.s32 1, %s15
  %s18 = scalar_select 0, %s17, %s15
  $region1: #{tpu_custom_call.1} parent=0
    #allocation2 [shape = 'u8[8192]{0}', space=vmem, size = 0x2000, scoped, tag = 'output window, operand 0']
    #allocation3 [shape = 's32[2]{0}', space=sflag, size = 0x8, scoped, tag = 'scoped memory for tpu_custom_call.1']
    %19 = vsyncpa [#allocation3], 0
    %s20 = scalar_lea.sflag [#allocation3], 1
    %21 = vsyncpa %s20, 0
    loop: start=0, step=1, limit=4
    $region2: #{tpu_custom_call.1} parent=1 // loop_pre_header
      _
    $region3: #{tpu_custom_call.1} parent=1 // loop_header
      %s23 = sphi 0, %s27
      %p24 = scmp.ge.s32.totalorder %s23, 4
      %s33 = sphi 0, %s35
      %s36 = sphi 0, %s33
      %s37 = sphi 0, %s36
      %s53 = sphi 0, %s37
      %s59 = sphi 0, %s61
      %s62 = sphi 0, %s59
      %s63 = sphi 0, %s62
      %s79 = sphi 0, %s63
      %s83 = sphi 0, %s83
      %s85 = sphi 0, %s83
      %s86 = sphi 0, %s85
      %s100 = sphi 0, %s86
      %s104 = sphi 0, %s104
      %s106 = sphi 0, %s104
      %s107 = sphi 0, %s106
      %s121 = sphi 0, %s107
      %s125 = sphi 0, %s125
      %s127 = sphi 0, %s125
      %s128 = sphi 0, %s127
      %s142 = sphi 0, %s128
      %s146 = sphi 0, %s146
      %s148 = sphi 0, %s146
      %s149 = sphi 0, %s148
      %s163 = sphi 0, %s149
      %s167 = sphi 0, %s167
      %s169 = sphi 0, %s167
      %s170 = sphi 0, %s169
      %s184 = sphi 0, %s170
      %s188 = sphi 0, %s188
      %s190 = sphi 0, %s188
      %s191 = sphi 0, %s190
      %s205 = sphi 0, %s191
      %s209 = sphi 0, %s209
      %s211 = sphi 0, %s209
      %s212 = sphi 0, %s211
      %s226 = sphi 0, %s212
      %s230 = sphi 0, %s230
      %s232 = sphi 0, %s230
      %s233 = sphi 0, %s232
      %s247 = sphi 0, %s233
      %s251 = sphi 0, %s251
      %s253 = sphi 0, %s251
      %s254 = sphi 0, %s253
      %s268 = sphi 0, %s254
      %s272 = sphi 0, %s272
      %s274 = sphi 0, %s272
      %s275 = sphi 0, %s274
      %s289 = sphi 0, %s275
      %s293 = sphi 0, %s293
      %s295 = sphi 0, %s293
      %s296 = sphi 0, %s295
      %s310 = sphi 0, %s296
      %s314 = sphi 0, %s314
      %s316 = sphi 0, %s314
      %s317 = sphi 0, %s316
      %s331 = sphi 0, %s317
      %s337 = sphi 0, %s339
      %s340 = sphi 0, %s337
      %s341 = sphi 0, %s340
      %s357 = sphi 0, %s341
    $region4: #{tpu_custom_call.1} parent=1 // loop_header_branch
      %26 = sbr.rel (%p24) target = $region8
    $region5: #{tpu_custom_call.1} parent=1 // loop_body
      %s28 = ssub.s32 %s23, 1
      %s29 = ssub.s32 %s23, 2
      %s30 = sadd.s32 %s23, 1
      %s31 = ssub.s32 %s23, %s30
      %p32 = scmp.eq.s32.totalorder %s31, 0
      %s34 = sadd.s32 %s33, 1
      %s35 = scalar_select %p32, %s33, %s34
      %p38 = pneg %p32
      %p39 = scmp.eq.s32.totalorder %s23, 1
      %p40 = por %p38, %p39
      %p41 = scmp.ne.s32.totalorder %s33, %s36
      %p42 = scmp.eq.s32.totalorder %s23, 0
      %p43 = por %p41, %p42
      %p44 = scmp.ne.s32.totalorder %s33, %s36
      %p45 = scmp.eq.s32.totalorder %s28, 1
      %p46 = por %p44, %p45
      %p47 = scmp.ne.s32.totalorder %s36, %s37
      %p48 = scmp.eq.s32.totalorder %s28, 0
      %p49 = por %p47, %p48
      %p50 = scmp.ne.s32.totalorder %s36, %s37
      %p51 = scmp.eq.s32.totalorder %s29, 1
      %p52 = por %p50, %p51
      %p54 = scmp.ne.s32.totalorder %s37, %s53
      %p55 = scmp.eq.s32.totalorder %s29, 0
      %p56 = por %p54, %p55
      %s57 = ssub.s32 %s23, %s30
      %p58 = scmp.eq.s32.totalorder %s57, 0
      %s60 = sadd.s32 %s59, 1
      %s61 = scalar_select %p58, %s59, %s60
      %p64 = pneg %p58
      %p65 = scmp.eq.s32.totalorder %s23, 1
      %p66 = por %p64, %p65
      %p67 = scmp.ne.s32.totalorder %s59, %s62
      %p68 = scmp.eq.s32.totalorder %s23, 0
      %p69 = por %p67, %p68
      %p70 = scmp.ne.s32.totalorder %s59, %s62
      %p71 = scmp.eq.s32.totalorder %s28, 1
      %p72 = por %p70, %p71
      %p73 = scmp.ne.s32.totalorder %s62, %s63
      %p74 = scmp.eq.s32.totalorder %s28, 0
      %p75 = por %p73, %p74
      %p76 = scmp.ne.s32.totalorder %s62, %s63
      %p77 = scmp.eq.s32.totalorder %s29, 1
      %p78 = por %p76, %p77
      %p80 = scmp.ne.s32.totalorder %s63, %s79
      %p81 = scmp.eq.s32.totalorder %s29, 0
      %p82 = por %p80, %p81
      %s84 = sadd.s32 %s83, 1
      %p87 = scmp.eq.s32.totalorder %s23, 1
      %p88 = scmp.ne.s32.totalorder %s83, %s85
      %p89 = scmp.eq.s32.totalorder %s23, 0
      %p90 = por %p88, %p89
      %p91 = scmp.ne.s32.totalorder %s83, %s85
      %p92 = scmp.eq.s32.totalorder %s28, 1
      %p93 = por %p91, %p92
      %p94 = scmp.ne.s32.totalorder %s85, %s86
      %p95 = scmp.eq.s32.totalorder %s28, 0
      %p96 = por %p94, %p95
      %p97 = scmp.ne.s32.totalorder %s85, %s86
      %p98 = scmp.eq.s32.totalorder %s29, 1
      %p99 = por %p97, %p98
      %p101 = scmp.ne.s32.totalorder %s86, %s100
      %p102 = scmp.eq.s32.totalorder %s29, 0
      %p103 = por %p101, %p102
      %s105 = sadd.s32 %s104, 1
      %p108 = scmp.eq.s32.totalorder %s23, 1
      %p109 = scmp.ne.s32.totalorder %s104, %s106
      %p110 = scmp.eq.s32.totalorder %s23, 0
      %p111 = por %p109, %p110
      %p112 = scmp.ne.s32.totalorder %s104, %s106
      %p113 = scmp.eq.s32.totalorder %s28, 1
      %p114 = por %p112, %p113
      %p115 = scmp.ne.s32.totalorder %s106, %s107
      %p116 = scmp.eq.s32.totalorder %s28, 0
      %p117 = por %p115, %p116
      %p118 = scmp.ne.s32.totalorder %s106, %s107
      %p119 = scmp.eq.s32.totalorder %s29, 1
      %p120 = por %p118, %p119
      %p122 = scmp.ne.s32.totalorder %s107, %s121
      %p123 = scmp.eq.s32.totalorder %s29, 0
      %p124 = por %p122, %p123
      %s126 = sadd.s32 %s125, 1
      %p129 = scmp.eq.s32.totalorder %s23, 1
      %p130 = scmp.ne.s32.totalorder %s125, %s127
      %p131 = scmp.eq.s32.totalorder %s23, 0
      %p132 = por %p130, %p131
      %p133 = scmp.ne.s32.totalorder %s125, %s127
      %p134 = scmp.eq.s32.totalorder %s28, 1
      %p135 = por %p133, %p134
      %p136 = scmp.ne.s32.totalorder %s127, %s128
      %p137 = scmp.eq.s32.totalorder %s28, 0
      %p138 = por %p136, %p137
      %p139 = scmp.ne.s32.totalorder %s127, %s128
      %p140 = scmp.eq.s32.totalorder %s29, 1
      %p141 = por %p139, %p140
      %p143 = scmp.ne.s32.totalorder %s128, %s142
      %p144 = scmp.eq.s32.totalorder %s29, 0
      %p145 = por %p143, %p144
      %s147 = sadd.s32 %s146, 1
      %p150 = scmp.eq.s32.totalorder %s23, 1
      %p151 = scmp.ne.s32.totalorder %s146, %s148
      %p152 = scmp.eq.s32.totalorder %s23, 0
      %p153 = por %p151, %p152
      %p154 = scmp.ne.s32.totalorder %s146, %s148
      %p155 = scmp.eq.s32.totalorder %s28, 1
      %p156 = por %p154, %p155
      %p157 = scmp.ne.s32.totalorder %s148, %s149
      %p158 = scmp.eq.s32.totalorder %s28, 0
      %p159 = por %p157, %p158
      %p160 = scmp.ne.s32.totalorder %s148, %s149
      %p161 = scmp.eq.s32.totalorder %s29, 1
      %p162 = por %p160, %p161
      %p164 = scmp.ne.s32.totalorder %s149, %s163
      %p165 = scmp.eq.s32.totalorder %s29, 0
      %p166 = por %p164, %p165
      %s168 = sadd.s32 %s167, 1
      %p171 = scmp.eq.s32.totalorder %s23, 1
      %p172 = scmp.ne.s32.totalorder %s167, %s169
      %p173 = scmp.eq.s32.totalorder %s23, 0
      %p174 = por %p172, %p173
      %p175 = scmp.ne.s32.totalorder %s167, %s169
      %p176 = scmp.eq.s32.totalorder %s28, 1
      %p177 = por %p175, %p176
      %p178 = scmp.ne.s32.totalorder %s169, %s170
      %p179 = scmp.eq.s32.totalorder %s28, 0
      %p180 = por %p178, %p179
      %p181 = scmp.ne.s32.totalorder %s169, %s170
      %p182 = scmp.eq.s32.totalorder %s29, 1
      %p183 = por %p181, %p182
      %p185 = scmp.ne.s32.totalorder %s170, %s184
      %p186 = scmp.eq.s32.totalorder %s29, 0
      %p187 = por %p185, %p186
      %s189 = sadd.s32 %s188, 1
      %p192 = scmp.eq.s32.totalorder %s23, 1
      %p193 = scmp.ne.s32.totalorder %s188, %s190
      %p194 = scmp.eq.s32.totalorder %s23, 0
      %p195 = por %p193, %p194
      %p196 = scmp.ne.s32.totalorder %s188, %s190
      %p197 = scmp.eq.s32.totalorder %s28, 1
      %p198 = por %p196, %p197
      %p199 = scmp.ne.s32.totalorder %s190, %s191
      %p200 = scmp.eq.s32.totalorder %s28, 0
      %p201 = por %p199, %p200
      %p202 = scmp.ne.s32.totalorder %s190, %s191
      %p203 = scmp.eq.s32.totalorder %s29, 1
      %p204 = por %p202, %p203
      %p206 = scmp.ne.s32.totalorder %s191, %s205
      %p207 = scmp.eq.s32.totalorder %s29, 0
      %p208 = por %p206, %p207
      %s210 = sadd.s32 %s209, 1
      %p213 = scmp.eq.s32.totalorder %s23, 1
      %p214 = scmp.ne.s32.totalorder %s209, %s211
      %p215 = scmp.eq.s32.totalorder %s23, 0
      %p216 = por %p214, %p215
      %p217 = scmp.ne.s32.totalorder %s209, %s211
      %p218 = scmp.eq.s32.totalorder %s28, 1
      %p219 = por %p217, %p218
      %p220 = scmp.ne.s32.totalorder %s211, %s212
      %p221 = scmp.eq.s32.totalorder %s28, 0
      %p222 = por %p220, %p221
      %p223 = scmp.ne.s32.totalorder %s211, %s212
      %p224 = scmp.eq.s32.totalorder %s29, 1
      %p225 = por %p223, %p224
      %p227 = scmp.ne.s32.totalorder %s212, %s226
      %p228 = scmp.eq.s32.totalorder %s29, 0
      %p229 = por %p227, %p228
      %s231 = sadd.s32 %s230, 1
      %p234 = scmp.eq.s32.totalorder %s23, 1
      %p235 = scmp.ne.s32.totalorder %s230, %s232
      %p236 = scmp.eq.s32.totalorder %s23, 0
      %p237 = por %p235, %p236
      %p238 = scmp.ne.s32.totalorder %s230, %s232
      %p239 = scmp.eq.s32.totalorder %s28, 1
      %p240 = por %p238, %p239
      %p241 = scmp.ne.s32.totalorder %s232, %s233
      %p242 = scmp.eq.s32.totalorder %s28, 0
      %p243 = por %p241, %p242
      %p244 = scmp.ne.s32.totalorder %s232, %s233
      %p245 = scmp.eq.s32.totalorder %s29, 1
      %p246 = por %p244, %p245
      %p248 = scmp.ne.s32.totalorder %s233, %s247
      %p249 = scmp.eq.s32.totalorder %s29, 0
      %p250 = por %p248, %p249
      %s252 = sadd.s32 %s251, 1
      %p255 = scmp.eq.s32.totalorder %s23, 1
      %p256 = scmp.ne.s32.totalorder %s251, %s253
      %p257 = scmp.eq.s32.totalorder %s23, 0
      %p258 = por %p256, %p257
      %p259 = scmp.ne.s32.totalorder %s251, %s253
      %p260 = scmp.eq.s32.totalorder %s28, 1
      %p261 = por %p259, %p260
      %p262 = scmp.ne.s32.totalorder %s253, %s254
      %p263 = scmp.eq.s32.totalorder %s28, 0
      %p264 = por %p262, %p263
      %p265 = scmp.ne.s32.totalorder %s253, %s254
      %p266 = scmp.eq.s32.totalorder %s29, 1
      %p267 = por %p265, %p266
      %p269 = scmp.ne.s32.totalorder %s254, %s268
      %p270 = scmp.eq.s32.totalorder %s29, 0
      %p271 = por %p269, %p270
      %s273 = sadd.s32 %s272, 1
      %p276 = scmp.eq.s32.totalorder %s23, 1
      %p277 = scmp.ne.s32.totalorder %s272, %s274
      %p278 = scmp.eq.s32.totalorder %s23, 0
      %p279 = por %p277, %p278
      %p280 = scmp.ne.s32.totalorder %s272, %s274
      %p281 = scmp.eq.s32.totalorder %s28, 1
      %p282 = por %p280, %p281
      %p283 = scmp.ne.s32.totalorder %s274, %s275
      %p284 = scmp.eq.s32.totalorder %s28, 0
      %p285 = por %p283, %p284
      %p286 = scmp.ne.s32.totalorder %s274, %s275
      %p287 = scmp.eq.s32.totalorder %s29, 1
      %p288 = por %p286, %p287
      %p290 = scmp.ne.s32.totalorder %s275, %s289
      %p291 = scmp.eq.s32.totalorder %s29, 0
      %p292 = por %p290, %p291
      %s294 = sadd.s32 %s293, 1
      %p297 = scmp.eq.s32.totalorder %s23, 1
      %p298 = scmp.ne.s32.totalorder %s293, %s295
      %p299 = scmp.eq.s32.totalorder %s23, 0
      %p300 = por %p298, %p299
      %p301 = scmp.ne.s32.totalorder %s293, %s295
      %p302 = scmp.eq.s32.totalorder %s28, 1
      %p303 = por %p301, %p302
      %p304 = scmp.ne.s32.totalorder %s295, %s296
      %p305 = scmp.eq.s32.totalorder %s28, 0
      %p306 = por %p304, %p305
      %p307 = scmp.ne.s32.totalorder %s295, %s296
      %p308 = scmp.eq.s32.totalorder %s29, 1
      %p309 = por %p307, %p308
      %p311 = scmp.ne.s32.totalorder %s296, %s310
      %p312 = scmp.eq.s32.totalorder %s29, 0
      %p313 = por %p311, %p312
      %s315 = sadd.s32 %s314, 1
      %p318 = scmp.eq.s32.totalorder %s23, 1
      %p319 = scmp.ne.s32.totalorder %s314, %s316
      %p320 = scmp.eq.s32.totalorder %s23, 0
      %p321 = por %p319, %p320
      %p322 = scmp.ne.s32.totalorder %s314, %s316
      %p323 = scmp.eq.s32.totalorder %s28, 1
      %p324 = por %p322, %p323
      %p325 = scmp.ne.s32.totalorder %s316, %s317
      %p326 = scmp.eq.s32.totalorder %s28, 0
      %p327 = por %p325, %p326
      %p328 = scmp.ne.s32.totalorder %s316, %s317
      %p329 = scmp.eq.s32.totalorder %s29, 1
      %p330 = por %p328, %p329
      %p332 = scmp.ne.s32.totalorder %s317, %s331
      %p333 = scmp.eq.s32.totalorder %s29, 0
      %p334 = por %p332, %p333
      %s335 = ssub.s32 %s23, %s30
      %p336 = scmp.eq.s32.totalorder %s335, 0
      %s338 = sadd.s32 %s337, 1
      %s339 = scalar_select %p336, %s337, %s338
      %p342 = pneg %p336
      %p343 = scmp.eq.s32.totalorder %s23, 1
      %p344 = por %p342, %p343
      %p345 = scmp.ne.s32.totalorder %s337, %s340
      %p346 = scmp.eq.s32.totalorder %s23, 0
      %p347 = por %p345, %p346
      %p348 = scmp.ne.s32.totalorder %s337, %s340
      %p349 = scmp.eq.s32.totalorder %s28, 1
      %p350 = por %p348, %p349
      %p351 = scmp.ne.s32.totalorder %s340, %s341
      %p352 = scmp.eq.s32.totalorder %s28, 0
      %p353 = por %p351, %p352
      %p354 = scmp.ne.s32.totalorder %s340, %s341
      %p355 = scmp.eq.s32.totalorder %s29, 1
      %p356 = por %p354, %p355
      %p358 = scmp.ne.s32.totalorder %s341, %s357
      %p359 = scmp.eq.s32.totalorder %s29, 0
      %p360 = por %p358, %p359
      %p361 = scmp.le.s32.totalorder 1, %s23
      %p362 = scmp.lt.s32.totalorder %s23, 3
      %p363 = pnand %p361, %p362
      %p364 = pneg %p363
      // Predicated region
      $region9: #{tpu_custom_call.1} parent=5 // pred_check
        _
      $region10: #{tpu_custom_call.1} parent=5 // pred_check_branch
        %366 = sbr.rel (%p363) target = $region12
      $region11: #{tpu_custom_call.1} parent=5 // pred_region
        %s367 = ssub.s32 %s23, 1
        // Predicated region
        $region13: #{tpu_custom_call.1} parent=11 // pred_check
          %p368 = pneg %p96
        $region14: #{tpu_custom_call.1} parent=11 // pred_check_branch
          %370 = sbr.rel (%p368) target = $region16
        $region15: #{tpu_custom_call.1} parent=11 // pred_region
          _
        $region16: #{tpu_custom_call.1} parent=11 // pred_fallthru
          _
        // Predicated region
        $region17: #{tpu_custom_call.1} parent=11 // pred_check
          %p371 = pneg %p117
        $region18: #{tpu_custom_call.1} parent=11 // pred_check_branch
          %373 = sbr.rel (%p371) target = $region20
        $region19: #{tpu_custom_call.1} parent=11 // pred_region
          _
        $region20: #{tpu_custom_call.1} parent=11 // pred_fallthru
          _
        // Predicated region
        $region21: #{tpu_custom_call.1} parent=11 // pred_check
          %p374 = pneg %p138
        $region22: #{tpu_custom_call.1} parent=11 // pred_check_branch
          %376 = sbr.rel (%p374) target = $region24
        $region23: #{tpu_custom_call.1} parent=11 // pred_region
          _
        $region24: #{tpu_custom_call.1} parent=11 // pred_fallthru
          _
        // Predicated region
        $region25: #{tpu_custom_call.1} parent=11 // pred_check
          %p377 = pneg %p159
        $region26: #{tpu_custom_call.1} parent=11 // pred_check_branch
          %379 = sbr.rel (%p377) target = $region28
        $region27: #{tpu_custom_call.1} parent=11 // pred_region
          _
        $region28: #{tpu_custom_call.1} parent=11 // pred_fallthru
          _
        // Predicated region
        $region29: #{tpu_custom_call.1} parent=11 // pred_check
          %p380 = pneg %p180
        $region30: #{tpu_custom_call.1} parent=11 // pred_check_branch
          %382 = sbr.rel (%p380) target = $region32
        $region31: #{tpu_custom_call.1} parent=11 // pred_region
          _
        $region32: #{tpu_custom_call.1} parent=11 // pred_fallthru
          _
        // Predicated region
        $region33: #{tpu_custom_call.1} parent=11 // pred_check
          %p383 = pneg %p201
        $region34: #{tpu_custom_call.1} parent=11 // pred_check_branch
          %385 = sbr.rel (%p383) target = $region36
        $region35: #{tpu_custom_call.1} parent=11 // pred_region
          _
        $region36: #{tpu_custom_call.1} parent=11 // pred_fallthru
          _
        // Predicated region
        $region37: #{tpu_custom_call.1} parent=11 // pred_check
          %p386 = pneg %p222
        $region38: #{tpu_custom_call.1} parent=11 // pred_check_branch
          %388 = sbr.rel (%p386) target = $region40
        $region39: #{tpu_custom_call.1} parent=11 // pred_region
          _
        $region40: #{tpu_custom_call.1} parent=11 // pred_fallthru
          _
        // Predicated region
        $region41: #{tpu_custom_call.1} parent=11 // pred_check
          %p389 = pneg %p243
        $region42: #{tpu_custom_call.1} parent=11 // pred_check_branch
          %391 = sbr.rel (%p389) target = $region44
        $region43: #{tpu_custom_call.1} parent=11 // pred_region
          _
        $region44: #{tpu_custom_call.1} parent=11 // pred_fallthru
          _
        // Predicated region
        $region45: #{tpu_custom_call.1} parent=11 // pred_check
          %p392 = pneg %p264
        $region46: #{tpu_custom_call.1} parent=11 // pred_check_branch
          %394 = sbr.rel (%p392) target = $region48
        $region47: #{tpu_custom_call.1} parent=11 // pred_region
          _
        $region48: #{tpu_custom_call.1} parent=11 // pred_fallthru
          _
        // Predicated region
        $region49: #{tpu_custom_call.1} parent=11 // pred_check
          %p395 = pneg %p285
        $region50: #{tpu_custom_call.1} parent=11 // pred_check_branch
          %397 = sbr.rel (%p395) target = $region52
        $region51: #{tpu_custom_call.1} parent=11 // pred_region
          _
        $region52: #{tpu_custom_call.1} parent=11 // pred_fallthru
          _
        // Predicated region
        $region53: #{tpu_custom_call.1} parent=11 // pred_check
          %p398 = pneg %p306
        $region54: #{tpu_custom_call.1} parent=11 // pred_check_branch
          %400 = sbr.rel (%p398) target = $region56
        $region55: #{tpu_custom_call.1} parent=11 // pred_region
          _
        $region56: #{tpu_custom_call.1} parent=11 // pred_fallthru
          _
        // Predicated region
        $region57: #{tpu_custom_call.1} parent=11 // pred_check
          %p401 = pneg %p327
        $region58: #{tpu_custom_call.1} parent=11 // pred_check_branch
          %403 = sbr.rel (%p401) target = $region60
        $region59: #{tpu_custom_call.1} parent=11 // pred_region
          _
        $region60: #{tpu_custom_call.1} parent=11 // pred_fallthru
          _
      $region12: #{tpu_custom_call.1} parent=5 // pred_fallthru
        _
      %p404 = scmp.lt.s32.totalorder %s23, 2
      // Predicated region
      $region61: #{tpu_custom_call.1} parent=5 // pred_check
        %p405 = pneg %p404
      $region62: #{tpu_custom_call.1} parent=5 // pred_check_branch
        %407 = sbr.rel (%p405) target = $region64
      $region63: #{tpu_custom_call.1} parent=5 // pred_region
        // Predicated region
        $region65: #{tpu_custom_call.1} parent=63 // pred_check
          %p408 = pneg %p43
        $region66: #{tpu_custom_call.1} parent=63 // pred_check_branch
          %410 = sbr.rel (%p408) target = $region68
        $region67: #{tpu_custom_call.1} parent=63 // pred_region
          %p411 = scmp.lt.s32.totalorder %s23, 1
          %s412 = scalar_select %p411, %s23, 1
          %s413 = smul.addr %s412, 8
          %s414 = scalar_lea.vmem %s0, %s413
        $region68: #{tpu_custom_call.1} parent=63 // pred_fallthru
          _
        // Predicated region
        $region69: #{tpu_custom_call.1} parent=63 // pred_check
          %p415 = pneg %p69
        $region70: #{tpu_custom_call.1} parent=63 // pred_check_branch
          %417 = sbr.rel (%p415) target = $region72
        $region71: #{tpu_custom_call.1} parent=63 // pred_region
          %p418 = scmp.lt.s32.totalorder %s23, 1
          %s419 = scalar_select %p418, %s23, 1
          %s420 = scalar_lea.vmem %s1, %s419
        $region72: #{tpu_custom_call.1} parent=63 // pred_fallthru
          _
      $region64: #{tpu_custom_call.1} parent=5 // pred_fallthru
        _
      %p421 = scmp.le.s32.totalorder 1, %s23
      %p422 = scmp.lt.s32.totalorder %s23, 3
      %p423 = pnand %p421, %p422
      %p424 = pneg %p423
      // Predicated region
      $region73: #{tpu_custom_call.1} parent=5 // pred_check
        _
      $region74: #{tpu_custom_call.1} parent=5 // pred_check_branch
        %426 = sbr.rel (%p423) target = $region76
      $region75: #{tpu_custom_call.1} parent=5 // pred_region
        %s427 = ssub.s32 %s23, 1
        %p428 = scmp.lt.s32.totalorder %s28, 1
        %s429 = scalar_select %p428, %s28, 1
        %s430 = smul.addr %s429, 8
        %s431 = scalar_lea.vmem %s0, %s430
        %p432 = pneg %p49
        %p433 = pneg %p46
        %p434 = scmp.lt.s32.totalorder %s28, 1
        %s435 = scalar_select %p434, %s28, 1
        %s436 = scalar_lea.vmem %s1, %s435
        %p437 = pneg %p75
        %p438 = pneg %p72
        %p439 = pneg %p96
        %p440 = pneg %p93
        %p441 = pneg %p117
        %p442 = pneg %p114
        %p443 = pneg %p138
        %p444 = pneg %p135
        %p445 = pneg %p159
        %p446 = pneg %p156
        %p447 = pneg %p180
        %p448 = pneg %p177
        %p449 = pneg %p201
        %p450 = pneg %p198
        %p451 = pneg %p222
        %p452 = pneg %p219
        %p453 = pneg %p243
        %p454 = pneg %p240
        %p455 = pneg %p264
        %p456 = pneg %p261
        %p457 = pneg %p285
        %p458 = pneg %p282
        %p459 = pneg %p306
        %p460 = pneg %p303
        %p461 = pneg %p327
        %p462 = pneg %p324
        %p463 = pneg %p353
        %p464 = pneg %p350
        %s465 = sand.u32 %s340, 1
        %s466 = scalar_lea.sflag [#allocation3], %s465
        %s467 = sand.u32 %s340, 1
        %s468 = smul.addr %s467, 8
        %s469 = scalar_lea.vmem [#allocation2], %s468
        %p470 = scmp.lt.s32.totalorder %s28, 1
        %s471 = scalar_select %p470, %s28, 1
        %s472 = smul.addr %s471, 8
        %s473 = scalar_lea.vmem %s0, %s472
        %p474 = scmp.lt.s32.totalorder %s28, 1
        %s475 = scalar_select %p474, %s28, 1
        %s476 = scalar_lea.vmem %s1, %s475
        %v478 = vld [vmem:[%s473] sm:$0xff]
        %v479 = vld [vmem:[%s476] sm:$0x1]
        %vm480 = vcmp.gt.f32.partialorder %v479, 0.0
        %v481 = vsel %vm480, 0.0, -1e+09
        %v482 = vld [vmem:[%s10] sm:$0x1]
        %v483 = vld [vmem:[%s11] sm:$0x1]
        %vm484 = vcmask 261120
        %v485 = vsel %vm484, %v478, 0.0
        %486 = vadd.xlane.f32.xlu0 %v485
        %v487 = vpop.xlane.xlu0 %486
        %v488 = vrcp.pop 32.0
        %v489 = vmul.f32 32.0, %v488
        %v490 = vsub.f32 1.0, %v489
        %v491 = vmul.f32 %v488, %v490
        %v492 = vadd.f32 %v488, %v491
        %vm493 = vweird.f32 %v488
        %v494 = vsel %vm493, %v488, %v492
        %v495 = vmul.f32 %v487, %v494
        %v496 = vsub.f32 %v478, %v495
        %v497 = vmul.f32 %v496, %v496
        %v498 = vsel %vm484, %v497, 0.0
        %499 = vadd.xlane.f32.xlu0 %v498
        %v500 = vpop.xlane.xlu0 %499
        %v501 = vmul.f32 %v500, 0.032258064
        %v502 = vrsqrt.pop %v501
        %v503 = vmul.f32 %v502, %v501
        %v504 = vmul.f32 %v503, %v502
        %v505 = vmul.f32 0.5, %v504
        %v506 = vsub.f32 1.5, %v505
        %v507 = vmul.f32 %v502, %v506
        %v508 = vmul.f32 %v501, %v507
        %vm509 = vcmp.eq.f32.partialorder %v501, inf
        %v510 = vsel %vm509, %v501, %v508
        %vm511 = vcmp.eq.f32.partialorder %v501, 0.0
        %v512 = vand.u32 %v501, 2147483648
        %v513 = vsel %vm511, %v512, %v510
        %v514 = vadd.f32 %v513, 1e-06
        %v515 = vrcp.pop %v514
        %v517 = vperm.slane %v482, 0
        %v519 = vmul.f32 %v517, %v496
        %v520 = vmul.f32 %v519, %v515
        %v522 = vperm.slane %v483, 0
        %v524 = vadd.f32 %v520, %v522
        %v525 = vpack.c.bf16 %v524, %v524
        %v526 = vld [vmem:[%s2] sm:$0xf]
        %v527 = vld [vmem:[%s2 + $0x4] sm:$0xf]
        %v528 = vld [vmem:[%s2 + $0x8] sm:$0xf]
        %v529 = vld [vmem:[%s2 + $0xc] sm:$0xf]
        %v530 = vld [vmem:[%s3] sm:$0x1]
        %v532 = vperm.slane %v530, 0
        %v538 = vunpack.c.l.b16 %v526
        %v539 = vunpack.c.l.b16 %v527
        %v540 = vunpack.c.l.b16 %v528
        %v541 = vunpack.c.l.b16 %v529
        %v542 = vpack.c.b16 %v539, %v538
        %v543 = vpack.c.b16 %v541, %v540
        %v547 = vsel %vm484, %v525, 0
        %549 = vmatpush.bf16.msra.mxu0 0
        %550 = vmatpush.bf16.msra.mxu0 0
        %551 = vmatpush.bf16.msra.mxu0 0
        %552 = vmatpush.bf16.msra.mxu0 0
        %553 = vmatpush.bf16.msra.mxu0 0
        %554 = vmatpush.bf16.msra.mxu0 0
        %555 = vmatpush.bf16.msra.mxu0 %v543
        %556 = vmatpush.bf16.msra.mxu0 %v542
        %557 = vmatmul.bf16.gmra.mxu0 %v547
        %v558 = vpop.f32.mrf.mxu0
        %v559 = vadd.f32 %v532, %v558
        %v560 = vpop.f32.mrf.mxu0
        %561 = vdwg.mxu0
        %563 = vrot.lane.b32.xlu0 %v559, 120
        %v564 = vpop.permute.xlu0 %563
        %566 = vrot.lane.b32.xlu0 %v559, 112
        %v567 = vpop.permute.xlu0 %566
        %569 = vrot.lane.b32.xlu0 %v559, 104
        %v570 = vpop.permute.xlu0 %569
        %572 = vrot.lane.b32.xlu0 %v559, 96
        %v573 = vpop.permute.xlu0 %572
        %575 = vrot.lane.b32.xlu0 %v559, 88
        %v576 = vpop.permute.xlu0 %575
        %578 = vrot.lane.b32.xlu0 %v559, 80
        %v579 = vpop.permute.xlu0 %578
        %581 = vrot.lane.b32.xlu0 %v559, 72
        %v582 = vpop.permute.xlu0 %581
        %584 = vrot.lane.b32.xlu0 %v559, 64
        %v585 = vpop.permute.xlu0 %584
        %587 = vrot.lane.b32.xlu0 %v559, 56
        %v588 = vpop.permute.xlu0 %587
        %590 = vrot.lane.b32.xlu0 %v559, 48
        %v591 = vpop.permute.xlu0 %590
        %593 = vrot.lane.b32.xlu0 %v559, 40
        %v594 = vpop.permute.xlu0 %593
        %v596 = vmul.f32 %v559, 0.35355338
        %v597 = vmul.f32 %v564, 0.35355338
        %v598 = vmul.f32 %v567, 0.35355338
        %v599 = vmul.f32 %v570, 0.35355338
        %v600 = vpack.c.bf16 %v596, %v596
        %v601 = vpack.c.bf16 %v597, %v597
        %v602 = vpack.c.bf16 %v598, %v598
        %v603 = vpack.c.bf16 %v599, %v599
        %v604 = vpack.c.bf16 %v573, %v573
        %v605 = vpack.c.bf16 %v576, %v576
        %v606 = vpack.c.bf16 %v579, %v579
        %v607 = vpack.c.bf16 %v582, %v582
        %v608 = vpack.c.bf16 %v585, %v585
        %v609 = vpack.c.bf16 %v588, %v588
        %v610 = vpack.c.bf16 %v591, %v591
        %v611 = vpack.c.bf16 %v594, %v594
        %v613 = vperm.slane %v481, 0
        %vm615 = vcmask 64512
        %v617 = vsel %vm615, %v600, 0
        %v620 = vsel %vm615, %v604, 0
        %622 = vmatpush.bf16.xpose.msra.mxu0 0
        %623 = vmatpush.bf16.xpose.msra.mxu0 0
        %624 = vmatpush.bf16.xpose.msra.mxu0 0
        %625 = vmatpush.bf16.xpose.msra.mxu0 0
        %626 = vmatpush.bf16.xpose.msra.mxu0 0
        %627 = vmatpush.bf16.xpose.msra.mxu0 0
        %628 = vmatpush.bf16.xpose.msra.mxu0 0
        %629 = vmatpush.bf16.xpose.msra.mxu0 %v620
        %630 = vmatmul.bf16.gmra.mxu0 %v617
        %v631 = vpop.f32.mrf.mxu0
        %v632 = vadd.f32 %v613, %v631
        %v633 = vpop.f32.mrf.mxu0
        %634 = vdwg.mxu0
        %v636 = vsel %vm615, %v601, 0
        %v639 = vsel %vm615, %v605, 0
        %641 = vmatpush.bf16.xpose.msra.mxu0 0
        %642 = vmatpush.bf16.xpose.msra.mxu0 0
        %643 = vmatpush.bf16.xpose.msra.mxu0 0
        %644 = vmatpush.bf16.xpose.msra.mxu0 0
        %645 = vmatpush.bf16.xpose.msra.mxu0 0
        %646 = vmatpush.bf16.xpose.msra.mxu0 0
        %647 = vmatpush.bf16.xpose.msra.mxu0 0
        %648 = vmatpush.bf16.xpose.msra.mxu0 %v639
        %649 = vmatmul.bf16.gmra.mxu0 %v636
        %v650 = vpop.f32.mrf.mxu0
        %v651 = vadd.f32 %v613, %v650
        %v652 = vpop.f32.mrf.mxu0
        %653 = vdwg.mxu0
        %v655 = vsel %vm615, %v602, 0
        %v658 = vsel %vm615, %v606, 0
        %660 = vmatpush.bf16.xpose.msra.mxu0 0
        %661 = vmatpush.bf16.xpose.msra.mxu0 0
        %662 = vmatpush.bf16.xpose.msra.mxu0 0
        %663 = vmatpush.bf16.xpose.msra.mxu0 0
        %664 = vmatpush.bf16.xpose.msra.mxu0 0
        %665 = vmatpush.bf16.xpose.msra.mxu0 0
        %666 = vmatpush.bf16.xpose.msra.mxu0 0
        %667 = vmatpush.bf16.xpose.msra.mxu0 %v658
        %668 = vmatmul.bf16.gmra.mxu0 %v655
        %v669 = vpop.f32.mrf.mxu0
        %v670 = vadd.f32 %v613, %v669
        %v671 = vpop.f32.mrf.mxu0
        %672 = vdwg.mxu0
        %v674 = vsel %vm615, %v603, 0
        %v677 = vsel %vm615, %v607, 0
        %679 = vmatpush.bf16.xpose.msra.mxu0 0
        %680 = vmatpush.bf16.xpose.msra.mxu0 0
        %681 = vmatpush.bf16.xpose.msra.mxu0 0
        %682 = vmatpush.bf16.xpose.msra.mxu0 0
        %683 = vmatpush.bf16.xpose.msra.mxu0 0
        %684 = vmatpush.bf16.xpose.msra.mxu0 0
        %685 = vmatpush.bf16.xpose.msra.mxu0 0
        %686 = vmatpush.bf16.xpose.msra.mxu0 %v677
        %687 = vmatmul.bf16.gmra.mxu0 %v674
        %v688 = vpop.f32.mrf.mxu0
        %v689 = vadd.f32 %v613, %v688
        %v690 = vpop.f32.mrf.mxu0
        %691 = vdwg.mxu0
        %v692 = vsel %vm615, %v632, -inf
        %693 = vmax.xlane.f32.xlu0 %v692
        %v694 = vpop.xlane.xlu0 %693
        %v695 = vsel %vm615, %v651, -inf
        %696 = vmax.xlane.f32.xlu0 %v695
        %v697 = vpop.xlane.xlu0 %696
        %v698 = vsel %vm615, %v670, -inf
        %699 = vmax.xlane.f32.xlu0 %v698
        %v700 = vpop.xlane.xlu0 %699
        %v701 = vsel %vm615, %v689, -inf
        %702 = vmax.xlane.f32.xlu0 %v701
        %v703 = vpop.xlane.xlu0 %702
        %v704 = vsub.f32 %v632, %v694
        %v705 = vsub.f32 %v651, %v697
        %v706 = vsub.f32 %v670, %v700
        %v707 = vsub.f32 %v689, %v703
        %v708 = vmul.f32 %v704, 1.442695
        %v709 = vpow.pop %v708
        %v710 = vmul.f32 %v705, 1.442695
        %v711 = vpow.pop %v710
        %v712 = vmul.f32 %v706, 1.442695
        %v713 = vpow.pop %v712
        %v714 = vmul.f32 %v707, 1.442695
        %v715 = vpow.pop %v714
        %v716 = vsel %vm615, %v709, 0.0
        %717 = vadd.xlane.f32.xlu0 %v716
        %v718 = vpop.xlane.xlu0 %717
        %v719 = vsel %vm615, %v711, 0.0
        %720 = vadd.xlane.f32.xlu0 %v719
        %v721 = vpop.xlane.xlu0 %720
        %v722 = vsel %vm615, %v713, 0.0
        %723 = vadd.xlane.f32.xlu0 %v722
        %v724 = vpop.xlane.xlu0 %723
        %v725 = vsel %vm615, %v715, 0.0
        %726 = vadd.xlane.f32.xlu0 %v725
        %v727 = vpop.xlane.xlu0 %726
        %v728 = vpack.c.bf16 %v709, %v709
        %v729 = vpack.c.bf16 %v711, %v711
        %v730 = vpack.c.bf16 %v713, %v713
        %v731 = vpack.c.bf16 %v715, %v715
        %v733 = vsel %vm615, %v728, 0
        %vm735 = vcmask 1043456
        %v737 = vsel %vm735, %v608, 0
        %739 = vmatpush.bf16.msra.mxu0 0
        %740 = vmatpush.bf16.msra.mxu0 0
        %741 = vmatpush.bf16.msra.mxu0 0
        %742 = vmatpush.bf16.msra.mxu0 0
        %743 = vmatpush.bf16.msra.mxu0 0
        %744 = vmatpush.bf16.msra.mxu0 0
        %745 = vmatpush.bf16.msra.mxu0 0
        %746 = vmatpush.bf16.msra.mxu0 %v737
        %747 = vmatmul.bf16.gmra.mxu0 %v733
        %v748 = vpop.f32.mrf.mxu0
        %v749 = vadd.f32 0.0, %v748
        %v750 = vpop.f32.mrf.mxu0
        %751 = vdwg.mxu0
        %v753 = vsel %vm615, %v729, 0
        %v756 = vsel %vm735, %v609, 0
        %758 = vmatpush.bf16.msra.mxu0 0
        %759 = vmatpush.bf16.msra.mxu0 0
        %760 = vmatpush.bf16.msra.mxu0 0
        %761 = vmatpush.bf16.msra.mxu0 0
        %762 = vmatpush.bf16.msra.mxu0 0
        %763 = vmatpush.bf16.msra.mxu0 0
        %764 = vmatpush.bf16.msra.mxu0 0
        %765 = vmatpush.bf16.msra.mxu0 %v756
        %766 = vmatmul.bf16.gmra.mxu0 %v753
        %v767 = vpop.f32.mrf.mxu0
        %v768 = vadd.f32 0.0, %v767
        %v769 = vpop.f32.mrf.mxu0
        %770 = vdwg.mxu0
        %v772 = vsel %vm615, %v730, 0
        %v775 = vsel %vm735, %v610, 0
        %777 = vmatpush.bf16.msra.mxu0 0
        %778 = vmatpush.bf16.msra.mxu0 0
        %779 = vmatpush.bf16.msra.mxu0 0
        %780 = vmatpush.bf16.msra.mxu0 0
        %781 = vmatpush.bf16.msra.mxu0 0
        %782 = vmatpush.bf16.msra.mxu0 0
        %783 = vmatpush.bf16.msra.mxu0 0
        %784 = vmatpush.bf16.msra.mxu0 %v775
        %785 = vmatmul.bf16.gmra.mxu0 %v772
        %v786 = vpop.f32.mrf.mxu0
        %v787 = vadd.f32 0.0, %v786
        %v788 = vpop.f32.mrf.mxu0
        %789 = vdwg.mxu0
        %v791 = vsel %vm615, %v731, 0
        %v794 = vsel %vm735, %v611, 0
        %796 = vmatpush.bf16.msra.mxu0 0
        %797 = vmatpush.bf16.msra.mxu0 0
        %798 = vmatpush.bf16.msra.mxu0 0
        %799 = vmatpush.bf16.msra.mxu0 0
        %800 = vmatpush.bf16.msra.mxu0 0
        %801 = vmatpush.bf16.msra.mxu0 0
        %802 = vmatpush.bf16.msra.mxu0 0
        %803 = vmatpush.bf16.msra.mxu0 %v794
        %804 = vmatmul.bf16.gmra.mxu0 %v791
        %v805 = vpop.f32.mrf.mxu0
        %v806 = vadd.f32 0.0, %v805
        %v807 = vpop.f32.mrf.mxu0
        %808 = vdwg.mxu0
        %v809 = vrcp.pop %v718
        %v810 = vrcp.pop %v721
        %v811 = vrcp.pop %v724
        %v812 = vrcp.pop %v727
        %v813 = vmul.f32 %v749, %v809
        %v814 = vmul.f32 %v768, %v810
        %v815 = vmul.f32 %v787, %v811
        %v816 = vmul.f32 %v806, %v812
        %v817 = vpack.c.bf16 %v813, %v813
        %v818 = vpack.c.bf16 %v814, %v814
        %v819 = vpack.c.bf16 %v815, %v815
        %v820 = vpack.c.bf16 %v816, %v816
        %v822 = vunpack.c.l.b16 %v818
        %v823 = vpack.c.b16 %v822, %v822
        %824 = vrot.lane.b32.xlu0 %v823, 8
        %v825 = vpop.permute.xlu0 %824
        %v827 = vunpack.c.l.b16 %v819
        %v828 = vpack.c.b16 %v827, %v827
        %829 = vrot.lane.b32.xlu0 %v828, 16
        %v830 = vpop.permute.xlu0 %829
        %v832 = vunpack.c.l.b16 %v820
        %v833 = vpack.c.b16 %v832, %v832
        %834 = vrot.lane.b32.xlu0 %v833, 24
        %v835 = vpop.permute.xlu0 %834
        %v838 = vsel %vm615, %v817, %v825
        %vm839 = vcmask 130048
        %v841 = vsel %vm839, %v838, %v830
        %vm842 = vcmask 195584
        %v844 = vsel %vm842, %v841, %v835
        %v845 = vld [vmem:[%s4] sm:$0xf]
        %v846 = vld [vmem:[%s4 + $0x4] sm:$0xf]
        %v847 = vld [vmem:[%s4 + $0x8] sm:$0xf]
        %v848 = vld [vmem:[%s4 + $0xc] sm:$0xf]
        %v849 = vld [vmem:[%s5] sm:$0x1]
        %v851 = vperm.slane %v849, 0
        %v857 = vunpack.c.l.b16 %v845
        %v858 = vunpack.c.l.b16 %v846
        %v859 = vunpack.c.l.b16 %v847
        %v860 = vunpack.c.l.b16 %v848
        %v861 = vpack.c.b16 %v858, %v857
        %v862 = vpack.c.b16 %v860, %v859
        %v865 = vsel %vm484, %v844, 0
        %867 = vmatpush.bf16.msra.mxu0 0
        %868 = vmatpush.bf16.msra.mxu0 0
        %869 = vmatpush.bf16.msra.mxu0 0
        %870 = vmatpush.bf16.msra.mxu0 0
        %871 = vmatpush.bf16.msra.mxu0 0
        %872 = vmatpush.bf16.msra.mxu0 0
        %873 = vmatpush.bf16.msra.mxu0 %v862
        %874 = vmatpush.bf16.msra.mxu0 %v861
        %875 = vmatmul.bf16.gmra.mxu0 %v865
        %v876 = vpop.f32.mrf.mxu0
        %v877 = vadd.f32 %v851, %v876
        %v878 = vpop.f32.mrf.mxu0
        %879 = vdwg.mxu0
        %v880 = vadd.f32 %v478, %v877
        %v881 = vld [vmem:[%s12] sm:$0x1]
        %v882 = vld [vmem:[%s13] sm:$0x1]
        %v883 = vsel %vm484, %v880, 0.0
        %884 = vadd.xlane.f32.xlu0 %v883
        %v885 = vpop.xlane.xlu0 %884
        %v886 = vmul.f32 %v885, %v494
        %v887 = vsub.f32 %v880, %v886
        %v888 = vmul.f32 %v887, %v887
        %v889 = vsel %vm484, %v888, 0.0
        %890 = vadd.xlane.f32.xlu0 %v889
        %v891 = vpop.xlane.xlu0 %890
        %v892 = vmul.f32 %v891, 0.032258064
        %v893 = vrsqrt.pop %v892
        %v894 = vmul.f32 %v893, %v892
        %v895 = vmul.f32 %v894, %v893
        %v896 = vmul.f32 0.5, %v895
        %v897 = vsub.f32 1.5, %v896
        %v898 = vmul.f32 %v893, %v897
        %v899 = vmul.f32 %v892, %v898
        %vm900 = vcmp.eq.f32.partialorder %v892, inf
        %v901 = vsel %vm900, %v892, %v899
        %vm902 = vcmp.eq.f32.partialorder %v892, 0.0
        %v903 = vand.u32 %v892, 2147483648
        %v904 = vsel %vm902, %v903, %v901
        %v905 = vadd.f32 %v904, 1e-06
        %v906 = vrcp.pop %v905
        %v908 = vperm.slane %v881, 0
        %v910 = vmul.f32 %v908, %v887
        %v911 = vmul.f32 %v910, %v906
        %v913 = vperm.slane %v882, 0
        %v915 = vadd.f32 %v911, %v913
        %v916 = vpack.c.bf16 %v915, %v915
        %v917 = vld [vmem:[%s6] sm:$0xf]
        %v918 = vld [vmem:[%s6 + $0x4] sm:$0xf]
        %v919 = vld [vmem:[%s6 + $0x8] sm:$0xf]
        %v920 = vld [vmem:[%s6 + $0xc] sm:$0xf]
        %v921 = vld [vmem:[%s7] sm:$0x1]
        %v923 = vperm.slane %v921, 0
        %v929 = vunpack.c.l.b16 %v917
        %v930 = vunpack.c.l.b16 %v918
        %v931 = vunpack.c.l.b16 %v919
        %v932 = vunpack.c.l.b16 %v920
        %v933 = vpack.c.b16 %v930, %v929
        %v934 = vpack.c.b16 %v932, %v931
        %v938 = vsel %vm484, %v916, 0
        %940 = vmatpush.bf16.msra.mxu0 0
        %941 = vmatpush.bf16.msra.mxu0 0
        %942 = vmatpush.bf16.msra.mxu0 0
        %943 = vmatpush.bf16.msra.mxu0 0
        %944 = vmatpush.bf16.msra.mxu0 0
        %945 = vmatpush.bf16.msra.mxu0 0
        %946 = vmatpush.bf16.msra.mxu0 %v934
        %947 = vmatpush.bf16.msra.mxu0 %v933
        %948 = vmatmul.bf16.gmra.mxu0 %v938
        %v949 = vpop.f32.mrf.mxu0
        %v950 = vadd.f32 %v923, %v949
        %v951 = vpop.f32.mrf.mxu0
        %952 = vdwg.mxu0
        %v953 = vmul.f32 %v950, 0.5
        %v954 = vmul.f32 %v950, %v950
        %v955 = vmul.f32 %v950, %v954
        %v956 = vmul.f32 %v955, 0.044715
        %v957 = vadd.f32 %v950, %v956
        %v958 = vmul.f32 %v957, 0.7978846
        %v959 = vtanh.pop %v958
        %v960 = vadd.f32 %v959, 1.0
        %v961 = vmul.f32 %v953, %v960
        %v962 = vpack.c.bf16 %v961, %v961
        %v963 = vld [vmem:[%s8] sm:$0xf]
        %v964 = vld [vmem:[%s8 + $0x4] sm:$0xf]
        %v965 = vld [vmem:[%s8 + $0x8] sm:$0xf]
        %v966 = vld [vmem:[%s8 + $0xc] sm:$0xf]
        %v967 = vld [vmem:[%s8 + $0x10] sm:$0xf]
        %v968 = vld [vmem:[%s8 + $0x14] sm:$0xf]
        %v969 = vld [vmem:[%s8 + $0x18] sm:$0xf]
        %v970 = vld [vmem:[%s8 + $0x1c] sm:$0xf]
        %v971 = vld [vmem:[%s8 + $0x20] sm:$0xf]
        %v972 = vld [vmem:[%s8 + $0x24] sm:$0xf]
        %v973 = vld [vmem:[%s8 + $0x28] sm:$0xf]
        %v974 = vld [vmem:[%s8 + $0x2c] sm:$0xf]
        %v975 = vld [vmem:[%s8 + $0x30] sm:$0xf]
        %v976 = vld [vmem:[%s8 + $0x34] sm:$0xf]
        %v977 = vld [vmem:[%s8 + $0x38] sm:$0xf]
        %v978 = vld [vmem:[%s8 + $0x3c] sm:$0xf]
        %v979 = vld [vmem:[%s9] sm:$0x1]
        %v981 = vperm.slane %v979, 0
        %v999 = vunpack.c.l.b16 %v963
        %v1000 = vunpack.c.l.b16 %v964
        %v1001 = vunpack.c.l.b16 %v965
        %v1002 = vunpack.c.l.b16 %v966
        %v1003 = vunpack.c.l.b16 %v967
        %v1004 = vunpack.c.l.b16 %v968
        %v1005 = vunpack.c.l.b16 %v969
        %v1006 = vunpack.c.l.b16 %v970
        %v1007 = vunpack.c.l.b16 %v971
        %v1008 = vunpack.c.l.b16 %v972
        %v1009 = vunpack.c.l.b16 %v973
        %v1010 = vunpack.c.l.b16 %v974
        %v1011 = vunpack.c.l.b16 %v975
        %v1012 = vunpack.c.l.b16 %v976
        %v1013 = vunpack.c.l.b16 %v977
        %v1014 = vunpack.c.l.b16 %v978
        %v1015 = vpack.c.b16 %v1000, %v999
        %v1016 = vpack.c.b16 %v1002, %v1001
        %v1017 = vpack.c.b16 %v1004, %v1003
        %v1018 = vpack.c.b16 %v1006, %v1005
        %v1019 = vpack.c.b16 %v1008, %v1007
        %v1020 = vpack.c.b16 %v1010, %v1009
        %v1021 = vpack.c.b16 %v1012, %v1011
        %v1022 = vpack.c.b16 %v1014, %v1013
        %1031 = vmatpush.bf16.msra.mxu0 %v1022
        %1032 = vmatpush.bf16.msra.mxu0 %v1021
        %1033 = vmatpush.bf16.msra.mxu0 %v1020
        %1034 = vmatpush.bf16.msra.mxu0 %v1019
        %1035 = vmatpush.bf16.msra.mxu0 %v1018
        %1036 = vmatpush.bf16.msra.mxu0 %v1017
        %1037 = vmatpush.bf16.msra.mxu0 %v1016
        %1038 = vmatpush.bf16.msra.mxu0 %v1015
        %1039 = vmatmul.bf16.gmra.mxu0 %v962
        %v1040 = vpop.f32.mrf.mxu0
        %v1041 = vadd.f32 %v981, %v1040
        %v1042 = vpop.f32.mrf.mxu0
        %1043 = vdwg.mxu0
        %v1044 = vadd.f32 %v880, %v1041
        %1045 = vst.msk [vmem:[%s469] sm:$0xff] %vm484, %v1044
        %s1046 = sand.u32 %s340, 1
        %s1047 = scalar_lea.sflag [#allocation3], %s1046
        %s1048 = sand.u32 %s340, 1
        %s1049 = smul.addr %s1048, 8
        %s1050 = scalar_lea.vmem [#allocation2], %s1049
        // Predicated region
        $region77: #{tpu_custom_call.1} parent=75 // pred_check
          %p1051 = pneg %p350
        $region78: #{tpu_custom_call.1} parent=75 // pred_check_branch
          %1053 = sbr.rel (%p1051) target = $region80
        $region79: #{tpu_custom_call.1} parent=75 // pred_region
          %1055 = vsyncadd %s1047, 0
          %s1056 = smul.addr %s28, 8
          %s1057 = scalar_lea.hbm %s14, %s1056
          %s1059 = sshll.u32 %s1050, 4
          %s1060 = int_to_ptr.vmem [resolvable:$true] %s1059
          %s1061 = sshll.u32 %s1057, 4
          %s1062 = int_to_ptr.hbm [resolvable:$true] %s1061
          %1064 = dma.vmem_to_hbm [thread:$0]  %s1060, 128, %s1062, %s1047
        $region80: #{tpu_custom_call.1} parent=75 // pred_fallthru
          _
      $region76: #{tpu_custom_call.1} parent=5 // pred_fallthru
        _
      %p1065 = scmp.le.s32.totalorder 2, %s23
      // Predicated region
      $region81: #{tpu_custom_call.1} parent=5 // pred_check
        %p1066 = pneg %p1065
      $region82: #{tpu_custom_call.1} parent=5 // pred_check_branch
        %1068 = sbr.rel (%p1066) target = $region84
      $region83: #{tpu_custom_call.1} parent=5 // pred_region
        %s1069 = ssub.s32 %s23, 2
        // Predicated region
        $region85: #{tpu_custom_call.1} parent=83 // pred_check
          %p1070 = pneg %p356
        $region86: #{tpu_custom_call.1} parent=83 // pred_check_branch
          %1072 = sbr.rel (%p1070) target = $region88
        $region87: #{tpu_custom_call.1} parent=83 // pred_region
          %s1073 = sand.u32 %s341, 1
          %s1074 = scalar_lea.sflag [#allocation3], %s1073
          %s1075 = sand.u32 %s341, 1
          %s1076 = smul.addr %s1075, 8
          %s1077 = scalar_lea.vmem [#allocation2], %s1076
          %1079 = dma.done %s1074, 128
        $region88: #{tpu_custom_call.1} parent=83 // pred_fallthru
          _
      $region84: #{tpu_custom_call.1} parent=5 // pred_fallthru
        _
    $region6: #{tpu_custom_call.1} parent=1 // loop_footer
      %s27 = sadd.s32 1, %s23
    $region7: #{tpu_custom_call.1} parent=1 // loop_footer_branch
      %22 = sbr.rel target = $region3
    $region8: #{tpu_custom_call.1} parent=1 // loop_exit
      _
    %1080 = vsyncpa [#allocation3], 1
    %s1081 = scalar_lea.sflag [#allocation3], 1
    %1082 = vsyncpa %s1081, 1

</llo_original>
